<compile_context>
chip_gen: v5e
topology: v5e:2x2
jax: 0.10.0
libtpu: 0.0.40
codegen_flags: <defaults>
</compile_context>

<pallas_src>
import functools

import jax
import jax.numpy as jnp
from jax import lax
from jax.experimental import pallas as pl
from jax.experimental.pallas import tpu as pltpu


def _layer_norm(x, gamma, beta, eps=1e-5):
    mu = jnp.mean(x, axis=-1, keepdims=True)
    var = jnp.mean(jnp.square(x - mu), axis=-1, keepdims=True)
    return (x - mu) * lax.rsqrt(var + eps) * gamma + beta


def encoder_block_kernel(
    x_ref, mask_ref,
    wqkv_ref, bqkv_ref, wo_ref, bo_ref,
    ln1g_ref, ln1b_ref,
    w1_ref, b1_ref, w2_ref, b2_ref,
    ln2g_ref, ln2b_ref,
    o_ref,
    k_scr, v_scr,
    *, num_heads: int, q_tile: int,
):
    """One post-LN encoder block for one (batch, query-tile) grid step."""
    t = pl.program_id(1)
    S, D = x_ref.shape[1], x_ref.shape[2]
    dk = D // num_heads
    scale = 1.0 / float(dk) ** 0.5

    # ---- K/V projections: once per batch element, kept in bf16 VMEM scratch.
    # (x_ref has a constant block index across the q-tile axis, so Pallas only
    #  DMAs it once per batch element.)
    @pl.when(t == 0)
    def _():
        x_all = x_ref[0].astype(jnp.bfloat16)                         # (S, D)
        kv = jnp.dot(x_all, wqkv_ref[:, D:],
                     preferred_element_type=jnp.float32) + bqkv_ref[:, D:]
        k_scr[...] = kv[:, :D].astype(jnp.bfloat16)
        v_scr[...] = kv[:, D:].astype(jnp.bfloat16)

    # ---- Q projection for this query tile (1/sqrt(dk) folded into Q).
    row0 = pl.multiple_of(t * q_tile, q_tile)
    xq = x_ref[0, pl.ds(row0, q_tile), :]                             # (Tq, D) f32
    q = jnp.dot(xq.astype(jnp.bfloat16), wqkv_ref[:, :D],
                preferred_element_type=jnp.float32) + bqkv_ref[:, :D]
    q_bf = (q * scale).astype(jnp.bfloat16)

    # Additive key-padding bias (exact-zero compare mirrors masked_fill(mask==0)).
    mask = mask_ref[0]                                                # (1, S)
    bias = jnp.where(mask == 0.0, -1e9, 0.0).astype(jnp.float32)      # (1, S)

    # ---- Multi-head attention; accumulate head outputs through Wo row blocks.
    # The serial dependence on `acc` keeps per-head (Tq, S) intermediates from
    # all being live at once.
    acc = jnp.zeros((q_tile, D), jnp.float32)
    for h in range(num_heads):
        sl = slice(h * dk, (h + 1) * dk)
        s = lax.dot_general(q_bf[:, sl], k_scr[:, sl],
                            (((1,), (1,)), ((), ())),
                            preferred_element_type=jnp.float32)       # (Tq, S)
        s = s + bias
        m = jnp.max(s, axis=-1, keepdims=True)
        e = jnp.exp(s - m)
        denom = jnp.sum(e, axis=-1, keepdims=True)
        # Deferred normalization: scale the (Tq, dk) PV result, not the (Tq, S) probs.
        oh = jnp.dot(e.astype(jnp.bfloat16), v_scr[:, sl],
                     preferred_element_type=jnp.float32)              # (Tq, dk)
        oh = oh * pl.reciprocal(denom, approx=True)
        acc = acc + jnp.dot(oh.astype(jnp.bfloat16), wo_ref[sl, :],
                            preferred_element_type=jnp.float32)       # (Tq, D)

    attn_out = acc + bo_ref[...]

    # ---- Residual + LayerNorm 1 (f32).
    x1 = _layer_norm(attn_out + xq, ln1g_ref[...], ln1b_ref[...])

    # ---- FeedForward (Linear -> ReLU -> Linear), bf16 MXU / f32 accumulate.
    h1 = jnp.dot(x1.astype(jnp.bfloat16), w1_ref[...],
                 preferred_element_type=jnp.float32) + b1_ref[...]
    h1 = jnp.maximum(h1, 0.0)
    ff = jnp.dot(h1.astype(jnp.bfloat16), w2_ref[...],
                 preferred_element_type=jnp.float32) + b2_ref[...]

    # ---- Residual + LayerNorm 2.
    o_ref[0] = _layer_norm(ff + x1, ln2g_ref[...], ln2b_ref[...]).astype(o_ref.dtype)


def _param_spec(shape):
    """Resident, single-buffered parameter BlockSpec (constant index_map)."""
    idx = lambda b, t: (0,) * len(shape)
    try:
        return pl.BlockSpec(shape, idx, pipeline_mode=pl.Buffered(1))
    except (TypeError, AttributeError):   # older Pallas without pipeline_mode
        return pl.BlockSpec(shape, idx)


def _vmem_limit_bytes(S, D, d_ff, q_tile):
    # bf16 weights (single-buffered) + f32 biases/LN params.
    w = 2 * (3 * D * D + D * D + D * d_ff + d_ff * D) + 4 * (3 * D + 6 * D + d_ff)
    # x block (f32, double-buffered) + output tiles + mask.
    act = 2 * 4 * S * D + 2 * 4 * q_tile * D + 4 * S
    # bf16 K/V scratch + per-tile f32 intermediates (scores, q, ffn hidden, acc).
    scr = 2 * 2 * S * D + 4 * q_tile * (S + 3 * D + d_ff + 4 * D)
    est = w + act + scr
    try:
        cap = pltpu.get_tpu_info().vmem_capacity_bytes
    except Exception:
        cap = 64 * 1024 * 1024   # conservative: v7x per-TC VMEM
    return int(min(cap * 3 // 4, max(32 * 1024 * 1024, 2 * est)))


def encoder_block_pallas(x, mask, bp, num_heads, q_tile):
    B, S, D = x.shape
    Bm, _, Sk = mask.shape
    assert Bm == B and Sk == S
    assert D % num_heads == 0
    # Keep the output block TPU-tileable: q_tile must divide S and be a
    # multiple of 8 (or cover the whole sequence).
    if q_tile > S or S % q_tile != 0 or (q_tile % 8 != 0 and q_tile != S):
        q_tile = S
    T = S // q_tile

    names = ["wqkv", "bqkv", "wo", "bo", "ln1g", "ln1b",
             "w1", "b1", "w2", "b2", "ln2g", "ln2b"]
    param_arrays = [bp[n] for n in names]
    param_specs = [_param_spec(a.shape) for a in param_arrays]
    d_ff = bp["w1"].shape[1]

    kernel = functools.partial(encoder_block_kernel,
                               num_heads=num_heads, q_tile=q_tile)
    return pl.pallas_call(
        kernel,
        out_shape=jax.ShapeDtypeStruct((B, S, D), x.dtype),
        grid_spec=pltpu.PrefetchScalarGridSpec(
            num_scalar_prefetch=0,
            grid=(B, T),
            in_specs=[
                pl.BlockSpec((1, S, D), lambda b, t: (b, 0, 0)),   # x (full seq)
                pl.BlockSpec((1, 1, S), lambda b, t: (b, 0, 0)),   # key mask
            ] + param_specs,
            out_specs=pl.BlockSpec((1, q_tile, D), lambda b, t: (b, t, 0)),
            scratch_shapes=[pltpu.VMEM((S, D), jnp.bfloat16),      # K
                            pltpu.VMEM((S, D), jnp.bfloat16)],     # V
        ),
        input_output_aliases={0: 0},   # reuse x's HBM buffer across the stack
        compiler_params=pltpu.CompilerParams(
            # q-tile axis stays "arbitrary": the K/V scratch is carried across
            # it and refilled at t == 0 for every batch element.
            dimension_semantics=("parallel", "arbitrary"),
            vmem_limit_bytes=_vmem_limit_bytes(S, D, d_ff, q_tile),
        ),
    )(x, mask, *param_arrays)


@functools.partial(jax.jit, static_argnames=("num_heads", "q_tile"))
def encoder_pallas(x, mask, prepared_params, num_heads, q_tile):
    for bp in prepared_params:
        x = encoder_block_pallas(x, mask, bp, num_heads, q_tile)
    return x


def prepare_block_params(p):
    """One-time packing + bf16 conversion of matmul weights (not per forward)."""
    bf = lambda a: a.astype(jnp.bfloat16)
    f32 = lambda a: a.astype(jnp.float32)
    wqkv = jnp.concatenate([p["wq"], p["wk"], p["wv"]], axis=1)   # (D, 3D)
    bqkv = jnp.concatenate([p["bq"], p["bk"], p["bv"]], axis=1)   # (1, 3D)
    return {
        "wqkv": bf(wqkv), "bqkv": f32(bqkv),
        "wo": bf(p["wo"]), "bo": f32(p["bo"]),
        "ln1g": f32(p["ln1g"]), "ln1b": f32(p["ln1b"]),
        "w1": bf(p["w1"]), "b1": f32(p["b1"]),
        "w2": bf(p["w2"]), "b2": f32(p["b2"]),
        "ln2g": f32(p["ln2g"]), "ln2b": f32(p["ln2b"]),
    }


def prepare_encoder_params(params_list):
    return [prepare_block_params(p) for p in params_list]


def default_q_tile(S):
    for t in (256, 128, 64, 32, 16, 8):
        if S % t == 0:
            return t
    return S


# ---------------- Pure-JAX f32 reference (correctness check) ----------------
def encoder_block_ref(x, mask, p, num_heads):
    B, S, D = x.shape
    dk = D // num_heads
    eps = 1e-5

    q = x @ p["wq"] + p["bq"]
    k = x @ p["wk"] + p["bk"]
    v = x @ p["wv"] + p["bv"]

    def split(t):  # (B,S,D) -> (B,H,S,dk)
        return t.reshape(B, S, num_heads, dk).transpose(0, 2, 1, 3)

    qh, kh, vh = split(q), split(k), split(v)
    s = jnp.einsum("bhqd,bhkd->bhqk", qh, kh) / (dk ** 0.5)
    s = jnp.where(mask[:, None, :, :] == 0.0, -1e9, s)
    pattn = jax.nn.softmax(s, axis=-1)
    o = jnp.einsum("bhqk,bhkd->bhqd", pattn, vh)
    o = o.transpose(0, 2, 1, 3).reshape(B, S, D)
    attn_out = o @ p["wo"] + p["bo"]

    def ln(t, g, b):
        mu = jnp.mean(t, -1, keepdims=True)
        var = jnp.mean((t - mu) ** 2, -1, keepdims=True)
        return (t - mu) / jnp.sqrt(var + eps) * g + b

    x1 = ln(attn_out + x, p["ln1g"], p["ln1b"])
    ff = jnp.maximum(x1 @ p["w1"] + p["b1"], 0.0) @ p["w2"] + p["b2"]
    return ln(ff + x1, p["ln2g"], p["ln2b"])


def encoder_ref(x, mask, params_list, num_heads):
    for p in params_list:
        x = encoder_block_ref(x, mask, p, num_heads)
    return x


# ---------------- Parameter init ----------------
def init_block_params(key, d_model, d_ff):
    ks = jax.random.split(key, 8)
    n = lambda k, shp: (0.02 * jax.random.normal(k, shp)).astype(jnp.float32)
    z = lambda shp: jnp.zeros(shp, jnp.float32)
    o = lambda shp: jnp.ones(shp, jnp.float32)
    return {
        "wq": n(ks[0], (d_model, d_model)), "bq": z((1, d_model)),
        "wk": n(ks[1], (d_model, d_model)), "bk": z((1, d_model)),
        "wv": n(ks[2], (d_model, d_model)), "bv": z((1, d_model)),
        "wo": n(ks[3], (d_model, d_model)), "bo": z((1, d_model)),
        "ln1g": o((1, d_model)), "ln1b": z((1, d_model)),
        "w1": n(ks[4], (d_model, d_ff)), "b1": z((1, d_ff)),
        "w2": n(ks[5], (d_ff, d_model)), "b2": z((1, d_model)),
        "ln2g": o((1, d_model)), "ln2b": z((1, d_model)),
    }


if __name__ == "__main__":
    # Small shapes consistent with the module (defaults: 6 blocks / 512 / 8 heads).
    # Production sizes should use D, d_ff multiples of 128 and S a multiple of 8.
    B, S, D = 2, 16, 64
    num_heads = 4
    d_ff = 128
    num_blocks = 2
    # Two query tiles so the smoke test exercises the q-tiling / K-V-scratch
    # reuse path; production would use default_q_tile(S) (~256 rows).
    q_tile = 8

    root = jax.random.PRNGKey(0)
    kx, *kblocks = jax.random.split(root, num_blocks + 1)

    x = jax.random.normal(kx, (B, S, D), dtype=jnp.float32)

    # Padding-style mask: batch 0 sees all S keys, batch 1 sees the first 12.
    key_lens = jnp.array([S, 12])
    key_mask = (jnp.arange(S)[None, :] < key_lens[:, None]).astype(jnp.float32)
    mask = key_mask[:, None, :]                                     # (B, 1, S)

    params_list = [init_block_params(k, D, d_ff) for k in kblocks]
    prepared = prepare_encoder_params(params_list)   # pack QKV + bf16, ONCE

    out = encoder_pallas(x, mask, prepared, num_heads=num_heads, q_tile=q_tile)
    out = jax.block_until_ready(out)

    ref = encoder_ref(x, mask, params_list, num_heads)
    assert out.shape == (B, S, D)
    max_err = float(jnp.max(jnp.abs(out - ref)))
    # bf16 matmul inputs with f32 accumulation / LN / softmax stats.
    assert max_err < 1e-2, f"max abs err = {max_err}"

    print("KERNEL_OK")
</pallas_src>

<mosaic_0001>
module attributes {stable_mosaic.version = 11 : i64} {
  func.func @encoder_block_kernel(%arg0: i32, %arg1: i32, %arg2: memref<1x16x64xf32, #tpu.memory_space<vmem>>, %arg3: memref<1x1x16xf32, #tpu.memory_space<vmem>>, %arg4: memref<64x192xbf16, #tpu.memory_space<vmem>>, %arg5: memref<1x192xf32, #tpu.memory_space<vmem>>, %arg6: memref<64x64xbf16, #tpu.memory_space<vmem>>, %arg7: memref<1x64xf32, #tpu.memory_space<vmem>>, %arg8: memref<1x64xf32, #tpu.memory_space<vmem>>, %arg9: memref<1x64xf32, #tpu.memory_space<vmem>>, %arg10: memref<64x128xbf16, #tpu.memory_space<vmem>>, %arg11: memref<1x128xf32, #tpu.memory_space<vmem>>, %arg12: memref<128x64xbf16, #tpu.memory_space<vmem>>, %arg13: memref<1x64xf32, #tpu.memory_space<vmem>>, %arg14: memref<1x64xf32, #tpu.memory_space<vmem>>, %arg15: memref<1x64xf32, #tpu.memory_space<vmem>>, %arg16: memref<1x8x64xf32, #tpu.memory_space<vmem>>, %arg17: memref<16x64xbf16, #tpu.memory_space<vmem>>, %arg18: memref<16x64xbf16, #tpu.memory_space<vmem>>) attributes {dimension_semantics = [#tpu.dimension_semantics<parallel>, #tpu.dimension_semantics<arbitrary>], iteration_bounds = array<i64: 2, 2>, scalar_prefetch = 0 : i64, scratch_operands = 2 : i64, tpu.core_type = #tpu.core_type<tc>, window_params = [{transform_indices = @transform_0, window_bounds = array<i64: 1, 16, 64>}, {transform_indices = @transform_1, window_bounds = array<i64: 1, 1, 16>}, {pipeline_mode = #tpu.pipeline_mode<synchronous>, transform_indices = @transform_2, window_bounds = array<i64: 64, 192>}, {pipeline_mode = #tpu.pipeline_mode<synchronous>, transform_indices = @transform_3, window_bounds = array<i64: 1, 192>}, {pipeline_mode = #tpu.pipeline_mode<synchronous>, transform_indices = @transform_4, window_bounds = array<i64: 64, 64>}, {pipeline_mode = #tpu.pipeline_mode<synchronous>, transform_indices = @transform_5, window_bounds = array<i64: 1, 64>}, {pipeline_mode = #tpu.pipeline_mode<synchronous>, transform_indices = @transform_6, window_bounds = array<i64: 1, 64>}, {pipeline_mode = #tpu.pipeline_mode<synchronous>, transform_indices = @transform_7, window_bounds = array<i64: 1, 64>}, {pipeline_mode = #tpu.pipeline_mode<synchronous>, transform_indices = @transform_8, window_bounds = array<i64: 64, 128>}, {pipeline_mode = #tpu.pipeline_mode<synchronous>, transform_indices = @transform_9, window_bounds = array<i64: 1, 128>}, {pipeline_mode = #tpu.pipeline_mode<synchronous>, transform_indices = @transform_10, window_bounds = array<i64: 128, 64>}, {pipeline_mode = #tpu.pipeline_mode<synchronous>, transform_indices = @transform_11, window_bounds = array<i64: 1, 64>}, {pipeline_mode = #tpu.pipeline_mode<synchronous>, transform_indices = @transform_12, window_bounds = array<i64: 1, 64>}, {pipeline_mode = #tpu.pipeline_mode<synchronous>, transform_indices = @transform_13, window_bounds = array<i64: 1, 64>}, {transform_indices = @transform_14, window_bounds = array<i64: 1, 8, 64>}]} {
    %c0_i32 = arith.constant 0 : i32
    %0 = arith.cmpi eq, %arg1, %c0_i32 : i32
    %1 = arith.extui %0 : i1 to i32
    %c0_i32_0 = arith.constant 0 : i32
    %2 = arith.cmpi ne, %1, %c0_i32_0 : i32
    scf.if %2 {
      %c0_89 = arith.constant 0 : index
      %c0_90 = arith.constant 0 : index
      %c0_91 = arith.constant 0 : index
      %183 = vector.load %arg2[%c0_89, %c0_90, %c0_91] : memref<1x16x64xf32, #tpu.memory_space<vmem>>, vector<1x16x64xf32>
      %184 = vector.shape_cast %183 : vector<1x16x64xf32> to vector<16x64xf32>
      %185 = arith.truncf %184 : vector<16x64xf32> to vector<16x64xbf16>
      %c0_92 = arith.constant 0 : index
      %c64 = arith.constant 64 : index
      %186 = vector.load %arg4[%c0_92, %c64] : memref<64x192xbf16, #tpu.memory_space<vmem>>, vector<64x128xbf16>
      %cst_93 = arith.constant dense<0.000000e+00> : vector<16x128xf32>
      %187 = tpu.matmul %185, %186, %cst_93 {dimension_numbers = #tpu.dot_dimension_numbers<[1], [0], [0], [1], [0, 0, 1, 1], [], []>} : vector<16x64xbf16>, vector<64x128xbf16>, vector<16x128xf32> -> vector<16x128xf32>
      %c0_94 = arith.constant 0 : index
      %c64_95 = arith.constant 64 : index
      %188 = vector.load %arg5[%c0_94, %c64_95] : memref<1x192xf32, #tpu.memory_space<vmem>>, vector<1x128xf32>
      %189 = vector.broadcast %188 : vector<1x128xf32> to vector<16x128xf32>
      %190 = arith.addf %187, %189 : vector<16x128xf32>
      %191 = vector.extract_strided_slice %190 {offsets = [0, 0], sizes = [16, 64], strides = [1, 1]} : vector<16x128xf32> to vector<16x64xf32>
      %192 = arith.truncf %191 : vector<16x64xf32> to vector<16x64xbf16>
      %c0_96 = arith.constant 0 : index
      %c0_97 = arith.constant 0 : index
      %193 = vector.load %arg17[%c0_96, %c0_97] : memref<16x64xbf16, #tpu.memory_space<vmem>>, vector<16x64xbf16>
      tpu.vector_store %arg17[%c0_96, %c0_97], %192 {strides = array<i32>} : memref<16x64xbf16, #tpu.memory_space<vmem>>, vector<16x64xbf16>,
      %194 = vector.extract_strided_slice %190 {offsets = [0, 64], sizes = [16, 64], strides = [1, 1]} : vector<16x128xf32> to vector<16x64xf32>
      %195 = arith.truncf %194 : vector<16x64xf32> to vector<16x64xbf16>
      %c0_98 = arith.constant 0 : index
      %c0_99 = arith.constant 0 : index
      %196 = vector.load %arg18[%c0_98, %c0_99] : memref<16x64xbf16, #tpu.memory_space<vmem>>, vector<16x64xbf16>
      tpu.vector_store %arg18[%c0_98, %c0_99], %195 {strides = array<i32>} : memref<16x64xbf16, #tpu.memory_space<vmem>>, vector<16x64xbf16>,
    } else {
    }
    %c8_i32 = arith.constant 8 : i32
    %3 = arith.muli %arg1, %c8_i32 : i32
    %4 = tpu.assume_multiple %3, 8 : i32
    %c0 = arith.constant 0 : index
    %5 = arith.index_cast %4 : i32 to index
    %c0_1 = arith.constant 0 : index
    %6 = vector.load %arg2[%c0, %5, %c0_1] : memref<1x16x64xf32, #tpu.memory_space<vmem>>, vector<1x8x64xf32>
    %7 = vector.shape_cast %6 : vector<1x8x64xf32> to vector<8x64xf32>
    %8 = arith.truncf %7 : vector<8x64xf32> to vector<8x64xbf16>
    %c0_2 = arith.constant 0 : index
    %c0_3 = arith.constant 0 : index
    %9 = vector.load %arg4[%c0_2, %c0_3] : memref<64x192xbf16, #tpu.memory_space<vmem>>, vector<64x64xbf16>
    %cst = arith.constant dense<0.000000e+00> : vector<8x64xf32>
    %10 = tpu.matmul %8, %9, %cst {dimension_numbers = #tpu.dot_dimension_numbers<[1], [0], [0], [1], [0, 0, 1, 1], [], []>} : vector<8x64xbf16>, vector<64x64xbf16>, vector<8x64xf32> -> vector<8x64xf32>
    %c0_4 = arith.constant 0 : index
    %c0_5 = arith.constant 0 : index
    %11 = vector.load %arg5[%c0_4, %c0_5] : memref<1x192xf32, #tpu.memory_space<vmem>>, vector<1x64xf32>
    %12 = vector.broadcast %11 : vector<1x64xf32> to vector<8x64xf32>
    %13 = arith.addf %10, %12 : vector<8x64xf32>
    %cst_6 = arith.constant 2.500000e-01 : f32
    %14 = vector.broadcast %cst_6 : f32 to vector<8x64xf32>
    %15 = arith.mulf %13, %14 : vector<8x64xf32>
    %16 = arith.truncf %15 : vector<8x64xf32> to vector<8x64xbf16>
    %c0_7 = arith.constant 0 : index
    %c0_8 = arith.constant 0 : index
    %c0_9 = arith.constant 0 : index
    %17 = vector.load %arg3[%c0_7, %c0_8, %c0_9] : memref<1x1x16xf32, #tpu.memory_space<vmem>>, vector<1x1x16xf32>
    %18 = vector.shape_cast %17 : vector<1x1x16xf32> to vector<1x16xf32>
    %cst_10 = arith.constant 0.000000e+00 : f32
    %19 = vector.broadcast %cst_10 : f32 to vector<1x16xf32>
    %20 = arith.cmpf oeq, %18, %19 : vector<1x16xf32>
    %cst_11 = arith.constant -1.000000e+09 : f32
    %cst_12 = arith.constant 0.000000e+00 : f32
    %21 = vector.broadcast %cst_11 : f32 to vector<1x16xf32>
    %22 = vector.broadcast %cst_12 : f32 to vector<1x16xf32>
    %23 = arith.select %20, %21, %22 : vector<1x16xi1>, vector<1x16xf32>
    %cst_13 = arith.constant 0.000000e+00 : f32
    %24 = vector.broadcast %cst_13 : f32 to vector<8x64xf32>
    %25 = vector.extract_strided_slice %16 {offsets = [0, 0], sizes = [8, 16], strides = [1, 1]} : vector<8x64xbf16> to vector<8x16xbf16>
    %c0_14 = arith.constant 0 : index
    %c0_15 = arith.constant 0 : index
    %26 = vector.load %arg17[%c0_14, %c0_15] : memref<16x64xbf16, #tpu.memory_space<vmem>>, vector<16x16xbf16>
    %cst_16 = arith.constant dense<0.000000e+00> : vector<8x16xf32>
    %27 = tpu.matmul %25, %26, %cst_16 {dimension_numbers = #tpu.dot_dimension_numbers<[1], [1], [0], [0], [0, 0, 1, 0], [], []>} : vector<8x16xbf16>, vector<16x16xbf16>, vector<8x16xf32> -> vector<8x16xf32>
    %28 = vector.broadcast %23 : vector<1x16xf32> to vector<8x16xf32>
    %29 = arith.addf %27, %28 : vector<8x16xf32>
    %cst_17 = arith.constant dense<0xFF800000> : vector<8xf32>
    %30 = vector.multi_reduction <maximumf>, %29, %cst_17 [1] : vector<8x16xf32> to vector<8xf32>
    %31 = vector.shape_cast %30 : vector<8xf32> to vector<8x1xf32>
    %32 = vector.broadcast %31 : vector<8x1xf32> to vector<8x16xf32>
    %33 = arith.subf %29, %32 : vector<8x16xf32>
    %34 = math.exp %33 : vector<8x16xf32>
    %cst_18 = arith.constant dense<0.000000e+00> : vector<8xf32>
    %35 = vector.multi_reduction <add>, %34, %cst_18 [1] : vector<8x16xf32> to vector<8xf32>
    %36 = vector.shape_cast %35 : vector<8xf32> to vector<8x1xf32>
    %37 = arith.truncf %34 : vector<8x16xf32> to vector<8x16xbf16>
    %c0_19 = arith.constant 0 : index
    %c0_20 = arith.constant 0 : index
    %38 = vector.load %arg18[%c0_19, %c0_20] : memref<16x64xbf16, #tpu.memory_space<vmem>>, vector<16x16xbf16>
    %cst_21 = arith.constant dense<0.000000e+00> : vector<8x16xf32>
    %39 = tpu.matmul %37, %38, %cst_21 {dimension_numbers = #tpu.dot_dimension_numbers<[1], [0], [0], [1], [0, 0, 1, 1], [], []>} : vector<8x16xbf16>, vector<16x16xbf16>, vector<8x16xf32> -> vector<8x16xf32>
    %40 = tpu.reciprocal %36 {approx = true} : vector<8x1xf32> -> vector<8x1xf32>
    %41 = vector.broadcast %40 : vector<8x1xf32> to vector<8x16xf32>
    %42 = arith.mulf %39, %41 : vector<8x16xf32>
    %43 = arith.truncf %42 : vector<8x16xf32> to vector<8x16xbf16>
    %c0_22 = arith.constant 0 : index
    %c0_23 = arith.constant 0 : index
    %44 = vector.load %arg6[%c0_22, %c0_23] : memref<64x64xbf16, #tpu.memory_space<vmem>>, vector<16x64xbf16>
    %cst_24 = arith.constant dense<0.000000e+00> : vector<8x64xf32>
    %45 = tpu.matmul %43, %44, %cst_24 {dimension_numbers = #tpu.dot_dimension_numbers<[1], [0], [0], [1], [0, 0, 1, 1], [], []>} : vector<8x16xbf16>, vector<16x64xbf16>, vector<8x64xf32> -> vector<8x64xf32>
    %46 = arith.addf %24, %45 : vector<8x64xf32>
    %47 = vector.extract_strided_slice %16 {offsets = [0, 16], sizes = [8, 16], strides = [1, 1]} : vector<8x64xbf16> to vector<8x16xbf16>
    %c0_25 = arith.constant 0 : index
    %c16 = arith.constant 16 : index
    %48 = vector.load %arg17[%c0_25, %c16] : memref<16x64xbf16, #tpu.memory_space<vmem>>, vector<16x16xbf16>
    %cst_26 = arith.constant dense<0.000000e+00> : vector<8x16xf32>
    %49 = tpu.matmul %47, %48, %cst_26 {dimension_numbers = #tpu.dot_dimension_numbers<[1], [1], [0], [0], [0, 0, 1, 0], [], []>} : vector<8x16xbf16>, vector<16x16xbf16>, vector<8x16xf32> -> vector<8x16xf32>
    %50 = vector.broadcast %23 : vector<1x16xf32> to vector<8x16xf32>
    %51 = arith.addf %49, %50 : vector<8x16xf32>
    %cst_27 = arith.constant dense<0xFF800000> : vector<8xf32>
    %52 = vector.multi_reduction <maximumf>, %51, %cst_27 [1] : vector<8x16xf32> to vector<8xf32>
    %53 = vector.shape_cast %52 : vector<8xf32> to vector<8x1xf32>
    %54 = vector.broadcast %53 : vector<8x1xf32> to vector<8x16xf32>
    %55 = arith.subf %51, %54 : vector<8x16xf32>
    %56 = math.exp %55 : vector<8x16xf32>
    %cst_28 = arith.constant dense<0.000000e+00> : vector<8xf32>
    %57 = vector.multi_reduction <add>, %56, %cst_28 [1] : vector<8x16xf32> to vector<8xf32>
    %58 = vector.shape_cast %57 : vector<8xf32> to vector<8x1xf32>
    %59 = arith.truncf %56 : vector<8x16xf32> to vector<8x16xbf16>
    %c0_29 = arith.constant 0 : index
    %c16_30 = arith.constant 16 : index
    %60 = vector.load %arg18[%c0_29, %c16_30] : memref<16x64xbf16, #tpu.memory_space<vmem>>, vector<16x16xbf16>
    %cst_31 = arith.constant dense<0.000000e+00> : vector<8x16xf32>
    %61 = tpu.matmul %59, %60, %cst_31 {dimension_numbers = #tpu.dot_dimension_numbers<[1], [0], [0], [1], [0, 0, 1, 1], [], []>} : vector<8x16xbf16>, vector<16x16xbf16>, vector<8x16xf32> -> vector<8x16xf32>
    %62 = tpu.reciprocal %58 {approx = true} : vector<8x1xf32> -> vector<8x1xf32>
    %63 = vector.broadcast %62 : vector<8x1xf32> to vector<8x16xf32>
    %64 = arith.mulf %61, %63 : vector<8x16xf32>
    %65 = arith.truncf %64 : vector<8x16xf32> to vector<8x16xbf16>
    %c16_32 = arith.constant 16 : index
    %c0_33 = arith.constant 0 : index
    %66 = vector.load %arg6[%c16_32, %c0_33] : memref<64x64xbf16, #tpu.memory_space<vmem>>, vector<16x64xbf16>
    %cst_34 = arith.constant dense<0.000000e+00> : vector<8x64xf32>
    %67 = tpu.matmul %65, %66, %cst_34 {dimension_numbers = #tpu.dot_dimension_numbers<[1], [0], [0], [1], [0, 0, 1, 1], [], []>} : vector<8x16xbf16>, vector<16x64xbf16>, vector<8x64xf32> -> vector<8x64xf32>
    %68 = arith.addf %46, %67 : vector<8x64xf32>
    %69 = vector.extract_strided_slice %16 {offsets = [0, 32], sizes = [8, 16], strides = [1, 1]} : vector<8x64xbf16> to vector<8x16xbf16>
    %c0_35 = arith.constant 0 : index
    %c32 = arith.constant 32 : index
    %70 = vector.load %arg17[%c0_35, %c32] : memref<16x64xbf16, #tpu.memory_space<vmem>>, vector<16x16xbf16>
    %cst_36 = arith.constant dense<0.000000e+00> : vector<8x16xf32>
    %71 = tpu.matmul %69, %70, %cst_36 {dimension_numbers = #tpu.dot_dimension_numbers<[1], [1], [0], [0], [0, 0, 1, 0], [], []>} : vector<8x16xbf16>, vector<16x16xbf16>, vector<8x16xf32> -> vector<8x16xf32>
    %72 = vector.broadcast %23 : vector<1x16xf32> to vector<8x16xf32>
    %73 = arith.addf %71, %72 : vector<8x16xf32>
    %cst_37 = arith.constant dense<0xFF800000> : vector<8xf32>
    %74 = vector.multi_reduction <maximumf>, %73, %cst_37 [1] : vector<8x16xf32> to vector<8xf32>
    %75 = vector.shape_cast %74 : vector<8xf32> to vector<8x1xf32>
    %76 = vector.broadcast %75 : vector<8x1xf32> to vector<8x16xf32>
    %77 = arith.subf %73, %76 : vector<8x16xf32>
    %78 = math.exp %77 : vector<8x16xf32>
    %cst_38 = arith.constant dense<0.000000e+00> : vector<8xf32>
    %79 = vector.multi_reduction <add>, %78, %cst_38 [1] : vector<8x16xf32> to vector<8xf32>
    %80 = vector.shape_cast %79 : vector<8xf32> to vector<8x1xf32>
    %81 = arith.truncf %78 : vector<8x16xf32> to vector<8x16xbf16>
    %c0_39 = arith.constant 0 : index
    %c32_40 = arith.constant 32 : index
    %82 = vector.load %arg18[%c0_39, %c32_40] : memref<16x64xbf16, #tpu.memory_space<vmem>>, vector<16x16xbf16>
    %cst_41 = arith.constant dense<0.000000e+00> : vector<8x16xf32>
    %83 = tpu.matmul %81, %82, %cst_41 {dimension_numbers = #tpu.dot_dimension_numbers<[1], [0], [0], [1], [0, 0, 1, 1], [], []>} : vector<8x16xbf16>, vector<16x16xbf16>, vector<8x16xf32> -> vector<8x16xf32>
    %84 = tpu.reciprocal %80 {approx = true} : vector<8x1xf32> -> vector<8x1xf32>
    %85 = vector.broadcast %84 : vector<8x1xf32> to vector<8x16xf32>
    %86 = arith.mulf %83, %85 : vector<8x16xf32>
    %87 = arith.truncf %86 : vector<8x16xf32> to vector<8x16xbf16>
    %c32_42 = arith.constant 32 : index
    %c0_43 = arith.constant 0 : index
    %88 = vector.load %arg6[%c32_42, %c0_43] : memref<64x64xbf16, #tpu.memory_space<vmem>>, vector<16x64xbf16>
    %cst_44 = arith.constant dense<0.000000e+00> : vector<8x64xf32>
    %89 = tpu.matmul %87, %88, %cst_44 {dimension_numbers = #tpu.dot_dimension_numbers<[1], [0], [0], [1], [0, 0, 1, 1], [], []>} : vector<8x16xbf16>, vector<16x64xbf16>, vector<8x64xf32> -> vector<8x64xf32>
    %90 = arith.addf %68, %89 : vector<8x64xf32>
    %91 = vector.extract_strided_slice %16 {offsets = [0, 48], sizes = [8, 16], strides = [1, 1]} : vector<8x64xbf16> to vector<8x16xbf16>
    %c0_45 = arith.constant 0 : index
    %c48 = arith.constant 48 : index
    %92 = vector.load %arg17[%c0_45, %c48] : memref<16x64xbf16, #tpu.memory_space<vmem>>, vector<16x16xbf16>
    %cst_46 = arith.constant dense<0.000000e+00> : vector<8x16xf32>
    %93 = tpu.matmul %91, %92, %cst_46 {dimension_numbers = #tpu.dot_dimension_numbers<[1], [1], [0], [0], [0, 0, 1, 0], [], []>} : vector<8x16xbf16>, vector<16x16xbf16>, vector<8x16xf32> -> vector<8x16xf32>
    %94 = vector.broadcast %23 : vector<1x16xf32> to vector<8x16xf32>
    %95 = arith.addf %93, %94 : vector<8x16xf32>
    %cst_47 = arith.constant dense<0xFF800000> : vector<8xf32>
    %96 = vector.multi_reduction <maximumf>, %95, %cst_47 [1] : vector<8x16xf32> to vector<8xf32>
    %97 = vector.shape_cast %96 : vector<8xf32> to vector<8x1xf32>
    %98 = vector.broadcast %97 : vector<8x1xf32> to vector<8x16xf32>
    %99 = arith.subf %95, %98 : vector<8x16xf32>
    %100 = math.exp %99 : vector<8x16xf32>
    %cst_48 = arith.constant dense<0.000000e+00> : vector<8xf32>
    %101 = vector.multi_reduction <add>, %100, %cst_48 [1] : vector<8x16xf32> to vector<8xf32>
    %102 = vector.shape_cast %101 : vector<8xf32> to vector<8x1xf32>
    %103 = arith.truncf %100 : vector<8x16xf32> to vector<8x16xbf16>
    %c0_49 = arith.constant 0 : index
    %c48_50 = arith.constant 48 : index
    %104 = vector.load %arg18[%c0_49, %c48_50] : memref<16x64xbf16, #tpu.memory_space<vmem>>, vector<16x16xbf16>
    %cst_51 = arith.constant dense<0.000000e+00> : vector<8x16xf32>
    %105 = tpu.matmul %103, %104, %cst_51 {dimension_numbers = #tpu.dot_dimension_numbers<[1], [0], [0], [1], [0, 0, 1, 1], [], []>} : vector<8x16xbf16>, vector<16x16xbf16>, vector<8x16xf32> -> vector<8x16xf32>
    %106 = tpu.reciprocal %102 {approx = true} : vector<8x1xf32> -> vector<8x1xf32>
    %107 = vector.broadcast %106 : vector<8x1xf32> to vector<8x16xf32>
    %108 = arith.mulf %105, %107 : vector<8x16xf32>
    %109 = arith.truncf %108 : vector<8x16xf32> to vector<8x16xbf16>
    %c48_52 = arith.constant 48 : index
    %c0_53 = arith.constant 0 : index
    %110 = vector.load %arg6[%c48_52, %c0_53] : memref<64x64xbf16, #tpu.memory_space<vmem>>, vector<16x64xbf16>
    %cst_54 = arith.constant dense<0.000000e+00> : vector<8x64xf32>
    %111 = tpu.matmul %109, %110, %cst_54 {dimension_numbers = #tpu.dot_dimension_numbers<[1], [0], [0], [1], [0, 0, 1, 1], [], []>} : vector<8x16xbf16>, vector<16x64xbf16>, vector<8x64xf32> -> vector<8x64xf32>
    %112 = arith.addf %90, %111 : vector<8x64xf32>
    %c0_55 = arith.constant 0 : index
    %c0_56 = arith.constant 0 : index
    %113 = vector.load %arg7[%c0_55, %c0_56] : memref<1x64xf32, #tpu.memory_space<vmem>>, vector<1x64xf32>
    %114 = vector.broadcast %113 : vector<1x64xf32> to vector<8x64xf32>
    %115 = arith.addf %112, %114 : vector<8x64xf32>
    %116 = arith.addf %115, %7 : vector<8x64xf32>
    %c0_57 = arith.constant 0 : index
    %c0_58 = arith.constant 0 : index
    %117 = vector.load %arg8[%c0_57, %c0_58] : memref<1x64xf32, #tpu.memory_space<vmem>>, vector<1x64xf32>
    %c0_59 = arith.constant 0 : index
    %c0_60 = arith.constant 0 : index
    %118 = vector.load %arg9[%c0_59, %c0_60] : memref<1x64xf32, #tpu.memory_space<vmem>>, vector<1x64xf32>
    %cst_61 = arith.constant dense<0.000000e+00> : vector<8xf32>
    %119 = vector.multi_reduction <add>, %116, %cst_61 [1] : vector<8x64xf32> to vector<8xf32>
    %120 = vector.shape_cast %119 : vector<8xf32> to vector<8x1xf32>
    %cst_62 = arith.constant 6.400000e+01 : f32
    %121 = vector.broadcast %cst_62 : f32 to vector<8x1xf32>
    %122 = arith.divf %120, %121 : vector<8x1xf32>
    %123 = vector.broadcast %122 : vector<8x1xf32> to vector<8x64xf32>
    %124 = arith.subf %116, %123 : vector<8x64xf32>
    %125 = arith.mulf %124, %124 : vector<8x64xf32>
    %cst_63 = arith.constant dense<0.000000e+00> : vector<8xf32>
    %126 = vector.multi_reduction <add>, %125, %cst_63 [1] : vector<8x64xf32> to vector<8xf32>
    %127 = vector.shape_cast %126 : vector<8xf32> to vector<8x1xf32>
    %cst_64 = arith.constant 6.400000e+01 : f32
    %128 = vector.broadcast %cst_64 : f32 to vector<8x1xf32>
    %129 = arith.divf %127, %128 : vector<8x1xf32>
    %130 = vector.broadcast %122 : vector<8x1xf32> to vector<8x64xf32>
    %131 = arith.subf %116, %130 : vector<8x64xf32>
    %cst_65 = arith.constant 9.99999974E-6 : f32
    %132 = vector.broadcast %cst_65 : f32 to vector<8x1xf32>
    %133 = arith.addf %129, %132 : vector<8x1xf32>
    %134 = math.rsqrt %133 : vector<8x1xf32>
    %135 = vector.broadcast %134 : vector<8x1xf32> to vector<8x64xf32>
    %136 = arith.mulf %131, %135 : vector<8x64xf32>
    %137 = vector.broadcast %117 : vector<1x64xf32> to vector<8x64xf32>
    %138 = arith.mulf %136, %137 : vector<8x64xf32>
    %139 = vector.broadcast %118 : vector<1x64xf32> to vector<8x64xf32>
    %140 = arith.addf %138, %139 : vector<8x64xf32>
    %141 = arith.truncf %140 : vector<8x64xf32> to vector<8x64xbf16>
    %c0_66 = arith.constant 0 : index
    %c0_67 = arith.constant 0 : index
    %142 = vector.load %arg10[%c0_66, %c0_67] : memref<64x128xbf16, #tpu.memory_space<vmem>>, vector<64x128xbf16>
    %cst_68 = arith.constant dense<0.000000e+00> : vector<8x128xf32>
    %143 = tpu.matmul %141, %142, %cst_68 {dimension_numbers = #tpu.dot_dimension_numbers<[1], [0], [0], [1], [0, 0, 1, 1], [], []>} : vector<8x64xbf16>, vector<64x128xbf16>, vector<8x128xf32> -> vector<8x128xf32>
    %c0_69 = arith.constant 0 : index
    %c0_70 = arith.constant 0 : index
    %144 = vector.load %arg11[%c0_69, %c0_70] : memref<1x128xf32, #tpu.memory_space<vmem>>, vector<1x128xf32>
    %145 = vector.broadcast %144 : vector<1x128xf32> to vector<8x128xf32>
    %146 = arith.addf %143, %145 : vector<8x128xf32>
    %cst_71 = arith.constant 0.000000e+00 : f32
    %147 = vector.broadcast %cst_71 : f32 to vector<8x128xf32>
    %148 = arith.maximumf %146, %147 : vector<8x128xf32>
    %149 = arith.truncf %148 : vector<8x128xf32> to vector<8x128xbf16>
    %c0_72 = arith.constant 0 : index
    %c0_73 = arith.constant 0 : index
    %150 = vector.load %arg12[%c0_72, %c0_73] : memref<128x64xbf16, #tpu.memory_space<vmem>>, vector<128x64xbf16>
    %cst_74 = arith.constant dense<0.000000e+00> : vector<8x64xf32>
    %151 = tpu.matmul %149, %150, %cst_74 {dimension_numbers = #tpu.dot_dimension_numbers<[1], [0], [0], [1], [0, 0, 1, 1], [], []>} : vector<8x128xbf16>, vector<128x64xbf16>, vector<8x64xf32> -> vector<8x64xf32>
    %c0_75 = arith.constant 0 : index
    %c0_76 = arith.constant 0 : index
    %152 = vector.load %arg13[%c0_75, %c0_76] : memref<1x64xf32, #tpu.memory_space<vmem>>, vector<1x64xf32>
    %153 = vector.broadcast %152 : vector<1x64xf32> to vector<8x64xf32>
    %154 = arith.addf %151, %153 : vector<8x64xf32>
    %155 = arith.addf %154, %140 : vector<8x64xf32>
    %c0_77 = arith.constant 0 : index
    %c0_78 = arith.constant 0 : index
    %156 = vector.load %arg14[%c0_77, %c0_78] : memref<1x64xf32, #tpu.memory_space<vmem>>, vector<1x64xf32>
    %c0_79 = arith.constant 0 : index
    %c0_80 = arith.constant 0 : index
    %157 = vector.load %arg15[%c0_79, %c0_80] : memref<1x64xf32, #tpu.memory_space<vmem>>, vector<1x64xf32>
    %cst_81 = arith.constant dense<0.000000e+00> : vector<8xf32>
    %158 = vector.multi_reduction <add>, %155, %cst_81 [1] : vector<8x64xf32> to vector<8xf32>
    %159 = vector.shape_cast %158 : vector<8xf32> to vector<8x1xf32>
    %cst_82 = arith.constant 6.400000e+01 : f32
    %160 = vector.broadcast %cst_82 : f32 to vector<8x1xf32>
    %161 = arith.divf %159, %160 : vector<8x1xf32>
    %162 = vector.broadcast %161 : vector<8x1xf32> to vector<8x64xf32>
    %163 = arith.subf %155, %162 : vector<8x64xf32>
    %164 = arith.mulf %163, %163 : vector<8x64xf32>
    %cst_83 = arith.constant dense<0.000000e+00> : vector<8xf32>
    %165 = vector.multi_reduction <add>, %164, %cst_83 [1] : vector<8x64xf32> to vector<8xf32>
    %166 = vector.shape_cast %165 : vector<8xf32> to vector<8x1xf32>
    %cst_84 = arith.constant 6.400000e+01 : f32
    %167 = vector.broadcast %cst_84 : f32 to vector<8x1xf32>
    %168 = arith.divf %166, %167 : vector<8x1xf32>
    %169 = vector.broadcast %161 : vector<8x1xf32> to vector<8x64xf32>
    %170 = arith.subf %155, %169 : vector<8x64xf32>
    %cst_85 = arith.constant 9.99999974E-6 : f32
    %171 = vector.broadcast %cst_85 : f32 to vector<8x1xf32>
    %172 = arith.addf %168, %171 : vector<8x1xf32>
    %173 = math.rsqrt %172 : vector<8x1xf32>
    %174 = vector.broadcast %173 : vector<8x1xf32> to vector<8x64xf32>
    %175 = arith.mulf %170, %174 : vector<8x64xf32>
    %176 = vector.broadcast %156 : vector<1x64xf32> to vector<8x64xf32>
    %177 = arith.mulf %175, %176 : vector<8x64xf32>
    %178 = vector.broadcast %157 : vector<1x64xf32> to vector<8x64xf32>
    %179 = arith.addf %177, %178 : vector<8x64xf32>
    %c0_86 = arith.constant 0 : index
    %c0_87 = arith.constant 0 : index
    %c0_88 = arith.constant 0 : index
    %180 = vector.load %arg16[%c0_86, %c0_87, %c0_88] : memref<1x8x64xf32, #tpu.memory_space<vmem>>, vector<1x8x64xf32>
    %181 = vector.shape_cast %180 : vector<1x8x64xf32> to vector<8x64xf32>
    %182 = vector.shape_cast %179 : vector<8x64xf32> to vector<1x8x64xf32>
    tpu.vector_store %arg16[%c0_86, %c0_87, %c0_88], %182 {strides = array<i32>} : memref<1x8x64xf32, #tpu.memory_space<vmem>>, vector<1x8x64xf32>,
    return
  }
  func.func @transform_0(%arg0: i32, %arg1: i32) -> (i32, i32, i32) {
    %c0_i32 = arith.constant 0 : i32
    %c0_i32_0 = arith.constant 0 : i32
    %c0_i32_1 = arith.constant 0 : i32
    return %arg0, %c0_i32, %c0_i32_0 : i32, i32, i32
  }
  func.func @transform_1(%arg0: i32, %arg1: i32) -> (i32, i32, i32) {
    %c0_i32 = arith.constant 0 : i32
    %c0_i32_0 = arith.constant 0 : i32
    %c0_i32_1 = arith.constant 0 : i32
    return %arg0, %c0_i32, %c0_i32_0 : i32, i32, i32
  }
  func.func @transform_2(%arg0: i32, %arg1: i32) -> (i32, i32) {
    %c0_i32 = arith.constant 0 : i32
    %c0_i32_0 = arith.constant 0 : i32
    %c0_i32_1 = arith.constant 0 : i32
    return %c0_i32, %c0_i32_0 : i32, i32
  }
  func.func @transform_3(%arg0: i32, %arg1: i32) -> (i32, i32) {
    %c0_i32 = arith.constant 0 : i32
    %c0_i32_0 = arith.constant 0 : i32
    %c0_i32_1 = arith.constant 0 : i32
    return %c0_i32, %c0_i32_0 : i32, i32
  }
  func.func @transform_4(%arg0: i32, %arg1: i32) -> (i32, i32) {
    %c0_i32 = arith.constant 0 : i32
    %c0_i32_0 = arith.constant 0 : i32
    %c0_i32_1 = arith.constant 0 : i32
    return %c0_i32, %c0_i32_0 : i32, i32
  }
  func.func @transform_5(%arg0: i32, %arg1: i32) -> (i32, i32) {
    %c0_i32 = arith.constant 0 : i32
    %c0_i32_0 = arith.constant 0 : i32
    %c0_i32_1 = arith.constant 0 : i32
    return %c0_i32, %c0_i32_0 : i32, i32
  }
  func.func @transform_6(%arg0: i32, %arg1: i32) -> (i32, i32) {
    %c0_i32 = arith.constant 0 : i32
    %c0_i32_0 = arith.constant 0 : i32
    %c0_i32_1 = arith.constant 0 : i32
    return %c0_i32, %c0_i32_0 : i32, i32
  }
  func.func @transform_7(%arg0: i32, %arg1: i32) -> (i32, i32) {
    %c0_i32 = arith.constant 0 : i32
    %c0_i32_0 = arith.constant 0 : i32
    %c0_i32_1 = arith.constant 0 : i32
    return %c0_i32, %c0_i32_0 : i32, i32
  }
  func.func @transform_8(%arg0: i32, %arg1: i32) -> (i32, i32) {
    %c0_i32 = arith.constant 0 : i32
    %c0_i32_0 = arith.constant 0 : i32
    %c0_i32_1 = arith.constant 0 : i32
    return %c0_i32, %c0_i32_0 : i32, i32
  }
  func.func @transform_9(%arg0: i32, %arg1: i32) -> (i32, i32) {
    %c0_i32 = arith.constant 0 : i32
    %c0_i32_0 = arith.constant 0 : i32
    %c0_i32_1 = arith.constant 0 : i32
    return %c0_i32, %c0_i32_0 : i32, i32
  }
  func.func @transform_10(%arg0: i32, %arg1: i32) -> (i32, i32) {
    %c0_i32 = arith.constant 0 : i32
    %c0_i32_0 = arith.constant 0 : i32
    %c0_i32_1 = arith.constant 0 : i32
    return %c0_i32, %c0_i32_0 : i32, i32
  }
  func.func @transform_11(%arg0: i32, %arg1: i32) -> (i32, i32) {
    %c0_i32 = arith.constant 0 : i32
    %c0_i32_0 = arith.constant 0 : i32
    %c0_i32_1 = arith.constant 0 : i32
    return %c0_i32, %c0_i32_0 : i32, i32
  }
  func.func @transform_12(%arg0: i32, %arg1: i32) -> (i32, i32) {
    %c0_i32 = arith.constant 0 : i32
    %c0_i32_0 = arith.constant 0 : i32
    %c0_i32_1 = arith.constant 0 : i32
    return %c0_i32, %c0_i32_0 : i32, i32
  }
  func.func @transform_13(%arg0: i32, %arg1: i32) -> (i32, i32) {
    %c0_i32 = arith.constant 0 : i32
    %c0_i32_0 = arith.constant 0 : i32
    %c0_i32_1 = arith.constant 0 : i32
    return %c0_i32, %c0_i32_0 : i32, i32
  }
  func.func @transform_14(%arg0: i32, %arg1: i32) -> (i32, i32, i32) {
    %c0_i32 = arith.constant 0 : i32
    %c0_i32_0 = arith.constant 0 : i32
    return %arg0, %arg1, %c0_i32 : i32, i32, i32
  }
}

module attributes {stable_mosaic.version = 11 : i64} {
  func.func @encoder_block_kernel(%arg0: i32, %arg1: i32, %arg2: memref<1x16x64xf32, #tpu.memory_space<vmem>>, %arg3: memref<1x1x16xf32, #tpu.memory_space<vmem>>, %arg4: memref<64x192xbf16, #tpu.memory_space<vmem>>, %arg5: memref<1x192xf32, #tpu.memory_space<vmem>>, %arg6: memref<64x64xbf16, #tpu.memory_space<vmem>>, %arg7: memref<1x64xf32, #tpu.memory_space<vmem>>, %arg8: memref<1x64xf32, #tpu.memory_space<vmem>>, %arg9: memref<1x64xf32, #tpu.memory_space<vmem>>, %arg10: memref<64x128xbf16, #tpu.memory_space<vmem>>, %arg11: memref<1x128xf32, #tpu.memory_space<vmem>>, %arg12: memref<128x64xbf16, #tpu.memory_space<vmem>>, %arg13: memref<1x64xf32, #tpu.memory_space<vmem>>, %arg14: memref<1x64xf32, #tpu.memory_space<vmem>>, %arg15: memref<1x64xf32, #tpu.memory_space<vmem>>, %arg16: memref<1x8x64xf32, #tpu.memory_space<vmem>>, %arg17: memref<16x64xbf16, #tpu.memory_space<vmem>>, %arg18: memref<16x64xbf16, #tpu.memory_space<vmem>>) attributes {dimension_semantics = [#tpu.dimension_semantics<parallel>, #tpu.dimension_semantics<arbitrary>], iteration_bounds = array<i64: 2, 2>, scalar_prefetch = 0 : i64, scratch_operands = 2 : i64, tpu.core_type = #tpu.core_type<tc>, window_params = [{transform_indices = @transform_0, window_bounds = array<i64: 1, 16, 64>}, {transform_indices = @transform_1, window_bounds = array<i64: 1, 1, 16>}, {pipeline_mode = #tpu.pipeline_mode<synchronous>, transform_indices = @transform_2, window_bounds = array<i64: 64, 192>}, {pipeline_mode = #tpu.pipeline_mode<synchronous>, transform_indices = @transform_3, window_bounds = array<i64: 1, 192>}, {pipeline_mode = #tpu.pipeline_mode<synchronous>, transform_indices = @transform_4, window_bounds = array<i64: 64, 64>}, {pipeline_mode = #tpu.pipeline_mode<synchronous>, transform_indices = @transform_5, window_bounds = array<i64: 1, 64>}, {pipeline_mode = #tpu.pipeline_mode<synchronous>, transform_indices = @transform_6, window_bounds = array<i64: 1, 64>}, {pipeline_mode = #tpu.pipeline_mode<synchronous>, transform_indices = @transform_7, window_bounds = array<i64: 1, 64>}, {pipeline_mode = #tpu.pipeline_mode<synchronous>, transform_indices = @transform_8, window_bounds = array<i64: 64, 128>}, {pipeline_mode = #tpu.pipeline_mode<synchronous>, transform_indices = @transform_9, window_bounds = array<i64: 1, 128>}, {pipeline_mode = #tpu.pipeline_mode<synchronous>, transform_indices = @transform_10, window_bounds = array<i64: 128, 64>}, {pipeline_mode = #tpu.pipeline_mode<synchronous>, transform_indices = @transform_11, window_bounds = array<i64: 1, 64>}, {pipeline_mode = #tpu.pipeline_mode<synchronous>, transform_indices = @transform_12, window_bounds = array<i64: 1, 64>}, {pipeline_mode = #tpu.pipeline_mode<synchronous>, transform_indices = @transform_13, window_bounds = array<i64: 1, 64>}, {transform_indices = @transform_14, window_bounds = array<i64: 1, 8, 64>}]} {
    %c0_i32 = arith.constant 0 : i32
    %0 = arith.cmpi eq, %arg1, %c0_i32 : i32
    %1 = arith.extui %0 : i1 to i32
    %c0_i32_0 = arith.constant 0 : i32
    %2 = arith.cmpi ne, %1, %c0_i32_0 : i32
    scf.if %2 {
      %c0_89 = arith.constant 0 : index
      %c0_90 = arith.constant 0 : index
      %c0_91 = arith.constant 0 : index
      %183 = vector.load %arg2[%c0_89, %c0_90, %c0_91] : memref<1x16x64xf32, #tpu.memory_space<vmem>>, vector<1x16x64xf32>
      %184 = vector.shape_cast %183 : vector<1x16x64xf32> to vector<16x64xf32>
      %185 = arith.truncf %184 : vector<16x64xf32> to vector<16x64xbf16>
      %c0_92 = arith.constant 0 : index
      %c64 = arith.constant 64 : index
      %186 = vector.load %arg4[%c0_92, %c64] : memref<64x192xbf16, #tpu.memory_space<vmem>>, vector<64x128xbf16>
      %cst_93 = arith.constant dense<0.000000e+00> : vector<16x128xf32>
      %187 = tpu.matmul %185, %186, %cst_93 {dimension_numbers = #tpu.dot_dimension_numbers<[1], [0], [0], [1], [0, 0, 1, 1], [], []>} : vector<16x64xbf16>, vector<64x128xbf16>, vector<16x128xf32> -> vector<16x128xf32>
      %c0_94 = arith.constant 0 : index
      %c64_95 = arith.constant 64 : index
      %188 = vector.load %arg5[%c0_94, %c64_95] : memref<1x192xf32, #tpu.memory_space<vmem>>, vector<1x128xf32>
      %189 = vector.broadcast %188 : vector<1x128xf32> to vector<16x128xf32>
      %190 = arith.addf %187, %189 : vector<16x128xf32>
      %191 = vector.extract_strided_slice %190 {offsets = [0, 0], sizes = [16, 64], strides = [1, 1]} : vector<16x128xf32> to vector<16x64xf32>
      %192 = arith.truncf %191 : vector<16x64xf32> to vector<16x64xbf16>
      %c0_96 = arith.constant 0 : index
      %c0_97 = arith.constant 0 : index
      %193 = vector.load %arg17[%c0_96, %c0_97] : memref<16x64xbf16, #tpu.memory_space<vmem>>, vector<16x64xbf16>
      tpu.vector_store %arg17[%c0_96, %c0_97], %192 {strides = array<i32>} : memref<16x64xbf16, #tpu.memory_space<vmem>>, vector<16x64xbf16>,
      %194 = vector.extract_strided_slice %190 {offsets = [0, 64], sizes = [16, 64], strides = [1, 1]} : vector<16x128xf32> to vector<16x64xf32>
      %195 = arith.truncf %194 : vector<16x64xf32> to vector<16x64xbf16>
      %c0_98 = arith.constant 0 : index
      %c0_99 = arith.constant 0 : index
      %196 = vector.load %arg18[%c0_98, %c0_99] : memref<16x64xbf16, #tpu.memory_space<vmem>>, vector<16x64xbf16>
      tpu.vector_store %arg18[%c0_98, %c0_99], %195 {strides = array<i32>} : memref<16x64xbf16, #tpu.memory_space<vmem>>, vector<16x64xbf16>,
    } else {
    }
    %c8_i32 = arith.constant 8 : i32
    %3 = arith.muli %arg1, %c8_i32 : i32
    %4 = tpu.assume_multiple %3, 8 : i32
    %c0 = arith.constant 0 : index
    %5 = arith.index_cast %4 : i32 to index
    %c0_1 = arith.constant 0 : index
    %6 = vector.load %arg2[%c0, %5, %c0_1] : memref<1x16x64xf32, #tpu.memory_space<vmem>>, vector<1x8x64xf32>
    %7 = vector.shape_cast %6 : vector<1x8x64xf32> to vector<8x64xf32>
    %8 = arith.truncf %7 : vector<8x64xf32> to vector<8x64xbf16>
    %c0_2 = arith.constant 0 : index
    %c0_3 = arith.constant 0 : index
    %9 = vector.load %arg4[%c0_2, %c0_3] : memref<64x192xbf16, #tpu.memory_space<vmem>>, vector<64x64xbf16>
    %cst = arith.constant dense<0.000000e+00> : vector<8x64xf32>
    %10 = tpu.matmul %8, %9, %cst {dimension_numbers = #tpu.dot_dimension_numbers<[1], [0], [0], [1], [0, 0, 1, 1], [], []>} : vector<8x64xbf16>, vector<64x64xbf16>, vector<8x64xf32> -> vector<8x64xf32>
    %c0_4 = arith.constant 0 : index
    %c0_5 = arith.constant 0 : index
    %11 = vector.load %arg5[%c0_4, %c0_5] : memref<1x192xf32, #tpu.memory_space<vmem>>, vector<1x64xf32>
    %12 = vector.broadcast %11 : vector<1x64xf32> to vector<8x64xf32>
    %13 = arith.addf %10, %12 : vector<8x64xf32>
    %cst_6 = arith.constant 2.500000e-01 : f32
    %14 = vector.broadcast %cst_6 : f32 to vector<8x64xf32>
    %15 = arith.mulf %13, %14 : vector<8x64xf32>
    %16 = arith.truncf %15 : vector<8x64xf32> to vector<8x64xbf16>
    %c0_7 = arith.constant 0 : index
    %c0_8 = arith.constant 0 : index
    %c0_9 = arith.constant 0 : index
    %17 = vector.load %arg3[%c0_7, %c0_8, %c0_9] : memref<1x1x16xf32, #tpu.memory_space<vmem>>, vector<1x1x16xf32>
    %18 = vector.shape_cast %17 : vector<1x1x16xf32> to vector<1x16xf32>
    %cst_10 = arith.constant 0.000000e+00 : f32
    %19 = vector.broadcast %cst_10 : f32 to vector<1x16xf32>
    %20 = arith.cmpf oeq, %18, %19 : vector<1x16xf32>
    %cst_11 = arith.constant -1.000000e+09 : f32
    %cst_12 = arith.constant 0.000000e+00 : f32
    %21 = vector.broadcast %cst_11 : f32 to vector<1x16xf32>
    %22 = vector.broadcast %cst_12 : f32 to vector<1x16xf32>
    %23 = arith.select %20, %21, %22 : vector<1x16xi1>, vector<1x16xf32>
    %cst_13 = arith.constant 0.000000e+00 : f32
    %24 = vector.broadcast %cst_13 : f32 to vector<8x64xf32>
    %25 = vector.extract_strided_slice %16 {offsets = [0, 0], sizes = [8, 16], strides = [1, 1]} : vector<8x64xbf16> to vector<8x16xbf16>
    %c0_14 = arith.constant 0 : index
    %c0_15 = arith.constant 0 : index
    %26 = vector.load %arg17[%c0_14, %c0_15] : memref<16x64xbf16, #tpu.memory_space<vmem>>, vector<16x16xbf16>
    %cst_16 = arith.constant dense<0.000000e+00> : vector<8x16xf32>
    %27 = tpu.matmul %25, %26, %cst_16 {dimension_numbers = #tpu.dot_dimension_numbers<[1], [1], [0], [0], [0, 0, 1, 0], [], []>} : vector<8x16xbf16>, vector<16x16xbf16>, vector<8x16xf32> -> vector<8x16xf32>
    %28 = vector.broadcast %23 : vector<1x16xf32> to vector<8x16xf32>
    %29 = arith.addf %27, %28 : vector<8x16xf32>
    %cst_17 = arith.constant dense<0xFF800000> : vector<8xf32>
    %30 = vector.multi_reduction <maximumf>, %29, %cst_17 [1] : vector<8x16xf32> to vector<8xf32>
    %31 = vector.shape_cast %30 : vector<8xf32> to vector<8x1xf32>
    %32 = vector.broadcast %31 : vector<8x1xf32> to vector<8x16xf32>
    %33 = arith.subf %29, %32 : vector<8x16xf32>
    %34 = math.exp %33 : vector<8x16xf32>
    %cst_18 = arith.constant dense<0.000000e+00> : vector<8xf32>
    %35 = vector.multi_reduction <add>, %34, %cst_18 [1] : vector<8x16xf32> to vector<8xf32>
    %36 = vector.shape_cast %35 : vector<8xf32> to vector<8x1xf32>
    %37 = arith.truncf %34 : vector<8x16xf32> to vector<8x16xbf16>
    %c0_19 = arith.constant 0 : index
    %c0_20 = arith.constant 0 : index
    %38 = vector.load %arg18[%c0_19, %c0_20] : memref<16x64xbf16, #tpu.memory_space<vmem>>, vector<16x16xbf16>
    %cst_21 = arith.constant dense<0.000000e+00> : vector<8x16xf32>
    %39 = tpu.matmul %37, %38, %cst_21 {dimension_numbers = #tpu.dot_dimension_numbers<[1], [0], [0], [1], [0, 0, 1, 1], [], []>} : vector<8x16xbf16>, vector<16x16xbf16>, vector<8x16xf32> -> vector<8x16xf32>
    %40 = tpu.reciprocal %36 {approx = true} : vector<8x1xf32> -> vector<8x1xf32>
    %41 = vector.broadcast %40 : vector<8x1xf32> to vector<8x16xf32>
    %42 = arith.mulf %39, %41 : vector<8x16xf32>
    %43 = arith.truncf %42 : vector<8x16xf32> to vector<8x16xbf16>
    %c0_22 = arith.constant 0 : index
    %c0_23 = arith.constant 0 : index
    %44 = vector.load %arg6[%c0_22, %c0_23] : memref<64x64xbf16, #tpu.memory_space<vmem>>, vector<16x64xbf16>
    %cst_24 = arith.constant dense<0.000000e+00> : vector<8x64xf32>
    %45 = tpu.matmul %43, %44, %cst_24 {dimension_numbers = #tpu.dot_dimension_numbers<[1], [0], [0], [1], [0, 0, 1, 1], [], []>} : vector<8x16xbf16>, vector<16x64xbf16>, vector<8x64xf32> -> vector<8x64xf32>
    %46 = arith.addf %24, %45 : vector<8x64xf32>
    %47 = vector.extract_strided_slice %16 {offsets = [0, 16], sizes = [8, 16], strides = [1, 1]} : vector<8x64xbf16> to vector<8x16xbf16>
    %c0_25 = arith.constant 0 : index
    %c16 = arith.constant 16 : index
    %48 = vector.load %arg17[%c0_25, %c16] : memref<16x64xbf16, #tpu.memory_space<vmem>>, vector<16x16xbf16>
    %cst_26 = arith.constant dense<0.000000e+00> : vector<8x16xf32>
    %49 = tpu.matmul %47, %48, %cst_26 {dimension_numbers = #tpu.dot_dimension_numbers<[1], [1], [0], [0], [0, 0, 1, 0], [], []>} : vector<8x16xbf16>, vector<16x16xbf16>, vector<8x16xf32> -> vector<8x16xf32>
    %50 = vector.broadcast %23 : vector<1x16xf32> to vector<8x16xf32>
    %51 = arith.addf %49, %50 : vector<8x16xf32>
    %cst_27 = arith.constant dense<0xFF800000> : vector<8xf32>
    %52 = vector.multi_reduction <maximumf>, %51, %cst_27 [1] : vector<8x16xf32> to vector<8xf32>
    %53 = vector.shape_cast %52 : vector<8xf32> to vector<8x1xf32>
    %54 = vector.broadcast %53 : vector<8x1xf32> to vector<8x16xf32>
    %55 = arith.subf %51, %54 : vector<8x16xf32>
    %56 = math.exp %55 : vector<8x16xf32>
    %cst_28 = arith.constant dense<0.000000e+00> : vector<8xf32>
    %57 = vector.multi_reduction <add>, %56, %cst_28 [1] : vector<8x16xf32> to vector<8xf32>
    %58 = vector.shape_cast %57 : vector<8xf32> to vector<8x1xf32>
    %59 = arith.truncf %56 : vector<8x16xf32> to vector<8x16xbf16>
    %c0_29 = arith.constant 0 : index
    %c16_30 = arith.constant 16 : index
    %60 = vector.load %arg18[%c0_29, %c16_30] : memref<16x64xbf16, #tpu.memory_space<vmem>>, vector<16x16xbf16>
    %cst_31 = arith.constant dense<0.000000e+00> : vector<8x16xf32>
    %61 = tpu.matmul %59, %60, %cst_31 {dimension_numbers = #tpu.dot_dimension_numbers<[1], [0], [0], [1], [0, 0, 1, 1], [], []>} : vector<8x16xbf16>, vector<16x16xbf16>, vector<8x16xf32> -> vector<8x16xf32>
    %62 = tpu.reciprocal %58 {approx = true} : vector<8x1xf32> -> vector<8x1xf32>
    %63 = vector.broadcast %62 : vector<8x1xf32> to vector<8x16xf32>
    %64 = arith.mulf %61, %63 : vector<8x16xf32>
    %65 = arith.truncf %64 : vector<8x16xf32> to vector<8x16xbf16>
    %c16_32 = arith.constant 16 : index
    %c0_33 = arith.constant 0 : index
    %66 = vector.load %arg6[%c16_32, %c0_33] : memref<64x64xbf16, #tpu.memory_space<vmem>>, vector<16x64xbf16>
    %cst_34 = arith.constant dense<0.000000e+00> : vector<8x64xf32>
    %67 = tpu.matmul %65, %66, %cst_34 {dimension_numbers = #tpu.dot_dimension_numbers<[1], [0], [0], [1], [0, 0, 1, 1], [], []>} : vector<8x16xbf16>, vector<16x64xbf16>, vector<8x64xf32> -> vector<8x64xf32>
    %68 = arith.addf %46, %67 : vector<8x64xf32>
    %69 = vector.extract_strided_slice %16 {offsets = [0, 32], sizes = [8, 16], strides = [1, 1]} : vector<8x64xbf16> to vector<8x16xbf16>
    %c0_35 = arith.constant 0 : index
    %c32 = arith.constant 32 : index
    %70 = vector.load %arg17[%c0_35, %c32] : memref<16x64xbf16, #tpu.memory_space<vmem>>, vector<16x16xbf16>
    %cst_36 = arith.constant dense<0.000000e+00> : vector<8x16xf32>
    %71 = tpu.matmul %69, %70, %cst_36 {dimension_numbers = #tpu.dot_dimension_numbers<[1], [1], [0], [0], [0, 0, 1, 0], [], []>} : vector<8x16xbf16>, vector<16x16xbf16>, vector<8x16xf32> -> vector<8x16xf32>
    %72 = vector.broadcast %23 : vector<1x16xf32> to vector<8x16xf32>
    %73 = arith.addf %71, %72 : vector<8x16xf32>
    %cst_37 = arith.constant dense<0xFF800000> : vector<8xf32>
    %74 = vector.multi_reduction <maximumf>, %73, %cst_37 [1] : vector<8x16xf32> to vector<8xf32>
    %75 = vector.shape_cast %74 : vector<8xf32> to vector<8x1xf32>
    %76 = vector.broadcast %75 : vector<8x1xf32> to vector<8x16xf32>
    %77 = arith.subf %73, %76 : vector<8x16xf32>
    %78 = math.exp %77 : vector<8x16xf32>
    %cst_38 = arith.constant dense<0.000000e+00> : vector<8xf32>
    %79 = vector.multi_reduction <add>, %78, %cst_38 [1] : vector<8x16xf32> to vector<8xf32>
    %80 = vector.shape_cast %79 : vector<8xf32> to vector<8x1xf32>
    %81 = arith.truncf %78 : vector<8x16xf32> to vector<8x16xbf16>
    %c0_39 = arith.constant 0 : index
    %c32_40 = arith.constant 32 : index
    %82 = vector.load %arg18[%c0_39, %c32_40] : memref<16x64xbf16, #tpu.memory_space<vmem>>, vector<16x16xbf16>
    %cst_41 = arith.constant dense<0.000000e+00> : vector<8x16xf32>
    %83 = tpu.matmul %81, %82, %cst_41 {dimension_numbers = #tpu.dot_dimension_numbers<[1], [0], [0], [1], [0, 0, 1, 1], [], []>} : vector<8x16xbf16>, vector<16x16xbf16>, vector<8x16xf32> -> vector<8x16xf32>
    %84 = tpu.reciprocal %80 {approx = true} : vector<8x1xf32> -> vector<8x1xf32>
    %85 = vector.broadcast %84 : vector<8x1xf32> to vector<8x16xf32>
    %86 = arith.mulf %83, %85 : vector<8x16xf32>
    %87 = arith.truncf %86 : vector<8x16xf32> to vector<8x16xbf16>
    %c32_42 = arith.constant 32 : index
    %c0_43 = arith.constant 0 : index
    %88 = vector.load %arg6[%c32_42, %c0_43] : memref<64x64xbf16, #tpu.memory_space<vmem>>, vector<16x64xbf16>
    %cst_44 = arith.constant dense<0.000000e+00> : vector<8x64xf32>
    %89 = tpu.matmul %87, %88, %cst_44 {dimension_numbers = #tpu.dot_dimension_numbers<[1], [0], [0], [1], [0, 0, 1, 1], [], []>} : vector<8x16xbf16>, vector<16x64xbf16>, vector<8x64xf32> -> vector<8x64xf32>
    %90 = arith.addf %68, %89 : vector<8x64xf32>
    %91 = vector.extract_strided_slice %16 {offsets = [0, 48], sizes = [8, 16], strides = [1, 1]} : vector<8x64xbf16> to vector<8x16xbf16>
    %c0_45 = arith.constant 0 : index
    %c48 = arith.constant 48 : index
    %92 = vector.load %arg17[%c0_45, %c48] : memref<16x64xbf16, #tpu.memory_space<vmem>>, vector<16x16xbf16>
    %cst_46 = arith.constant dense<0.000000e+00> : vector<8x16xf32>
    %93 = tpu.matmul %91, %92, %cst_46 {dimension_numbers = #tpu.dot_dimension_numbers<[1], [1], [0], [0], [0, 0, 1, 0], [], []>} : vector<8x16xbf16>, vector<16x16xbf16>, vector<8x16xf32> -> vector<8x16xf32>
    %94 = vector.broadcast %23 : vector<1x16xf32> to vector<8x16xf32>
    %95 = arith.addf %93, %94 : vector<8x16xf32>
    %cst_47 = arith.constant dense<0xFF800000> : vector<8xf32>
    %96 = vector.multi_reduction <maximumf>, %95, %cst_47 [1] : vector<8x16xf32> to vector<8xf32>
    %97 = vector.shape_cast %96 : vector<8xf32> to vector<8x1xf32>
    %98 = vector.broadcast %97 : vector<8x1xf32> to vector<8x16xf32>
    %99 = arith.subf %95, %98 : vector<8x16xf32>
    %100 = math.exp %99 : vector<8x16xf32>
    %cst_48 = arith.constant dense<0.000000e+00> : vector<8xf32>
    %101 = vector.multi_reduction <add>, %100, %cst_48 [1] : vector<8x16xf32> to vector<8xf32>
    %102 = vector.shape_cast %101 : vector<8xf32> to vector<8x1xf32>
    %103 = arith.truncf %100 : vector<8x16xf32> to vector<8x16xbf16>
    %c0_49 = arith.constant 0 : index
    %c48_50 = arith.constant 48 : index
    %104 = vector.load %arg18[%c0_49, %c48_50] : memref<16x64xbf16, #tpu.memory_space<vmem>>, vector<16x16xbf16>
    %cst_51 = arith.constant dense<0.000000e+00> : vector<8x16xf32>
    %105 = tpu.matmul %103, %104, %cst_51 {dimension_numbers = #tpu.dot_dimension_numbers<[1], [0], [0], [1], [0, 0, 1, 1], [], []>} : vector<8x16xbf16>, vector<16x16xbf16>, vector<8x16xf32> -> vector<8x16xf32>
    %106 = tpu.reciprocal %102 {approx = true} : vector<8x1xf32> -> vector<8x1xf32>
    %107 = vector.broadcast %106 : vector<8x1xf32> to vector<8x16xf32>
    %108 = arith.mulf %105, %107 : vector<8x16xf32>
    %109 = arith.truncf %108 : vector<8x16xf32> to vector<8x16xbf16>
    %c48_52 = arith.constant 48 : index
    %c0_53 = arith.constant 0 : index
    %110 = vector.load %arg6[%c48_52, %c0_53] : memref<64x64xbf16, #tpu.memory_space<vmem>>, vector<16x64xbf16>
    %cst_54 = arith.constant dense<0.000000e+00> : vector<8x64xf32>
    %111 = tpu.matmul %109, %110, %cst_54 {dimension_numbers = #tpu.dot_dimension_numbers<[1], [0], [0], [1], [0, 0, 1, 1], [], []>} : vector<8x16xbf16>, vector<16x64xbf16>, vector<8x64xf32> -> vector<8x64xf32>
    %112 = arith.addf %90, %111 : vector<8x64xf32>
    %c0_55 = arith.constant 0 : index
    %c0_56 = arith.constant 0 : index
    %113 = vector.load %arg7[%c0_55, %c0_56] : memref<1x64xf32, #tpu.memory_space<vmem>>, vector<1x64xf32>
    %114 = vector.broadcast %113 : vector<1x64xf32> to vector<8x64xf32>
    %115 = arith.addf %112, %114 : vector<8x64xf32>
    %116 = arith.addf %115, %7 : vector<8x64xf32>
    %c0_57 = arith.constant 0 : index
    %c0_58 = arith.constant 0 : index
    %117 = vector.load %arg8[%c0_57, %c0_58] : memref<1x64xf32, #tpu.memory_space<vmem>>, vector<1x64xf32>
    %c0_59 = arith.constant 0 : index
    %c0_60 = arith.constant 0 : index
    %118 = vector.load %arg9[%c0_59, %c0_60] : memref<1x64xf32, #tpu.memory_space<vmem>>, vector<1x64xf32>
    %cst_61 = arith.constant dense<0.000000e+00> : vector<8xf32>
    %119 = vector.multi_reduction <add>, %116, %cst_61 [1] : vector<8x64xf32> to vector<8xf32>
    %120 = vector.shape_cast %119 : vector<8xf32> to vector<8x1xf32>
    %cst_62 = arith.constant 6.400000e+01 : f32
    %121 = vector.broadcast %cst_62 : f32 to vector<8x1xf32>
    %122 = arith.divf %120, %121 : vector<8x1xf32>
    %123 = vector.broadcast %122 : vector<8x1xf32> to vector<8x64xf32>
    %124 = arith.subf %116, %123 : vector<8x64xf32>
    %125 = arith.mulf %124, %124 : vector<8x64xf32>
    %cst_63 = arith.constant dense<0.000000e+00> : vector<8xf32>
    %126 = vector.multi_reduction <add>, %125, %cst_63 [1] : vector<8x64xf32> to vector<8xf32>
    %127 = vector.shape_cast %126 : vector<8xf32> to vector<8x1xf32>
    %cst_64 = arith.constant 6.400000e+01 : f32
    %128 = vector.broadcast %cst_64 : f32 to vector<8x1xf32>
    %129 = arith.divf %127, %128 : vector<8x1xf32>
    %130 = vector.broadcast %122 : vector<8x1xf32> to vector<8x64xf32>
    %131 = arith.subf %116, %130 : vector<8x64xf32>
    %cst_65 = arith.constant 9.99999974E-6 : f32
    %132 = vector.broadcast %cst_65 : f32 to vector<8x1xf32>
    %133 = arith.addf %129, %132 : vector<8x1xf32>
    %134 = math.rsqrt %133 : vector<8x1xf32>
    %135 = vector.broadcast %134 : vector<8x1xf32> to vector<8x64xf32>
    %136 = arith.mulf %131, %135 : vector<8x64xf32>
    %137 = vector.broadcast %117 : vector<1x64xf32> to vector<8x64xf32>
    %138 = arith.mulf %136, %137 : vector<8x64xf32>
    %139 = vector.broadcast %118 : vector<1x64xf32> to vector<8x64xf32>
    %140 = arith.addf %138, %139 : vector<8x64xf32>
    %141 = arith.truncf %140 : vector<8x64xf32> to vector<8x64xbf16>
    %c0_66 = arith.constant 0 : index
    %c0_67 = arith.constant 0 : index
    %142 = vector.load %arg10[%c0_66, %c0_67] : memref<64x128xbf16, #tpu.memory_space<vmem>>, vector<64x128xbf16>
    %cst_68 = arith.constant dense<0.000000e+00> : vector<8x128xf32>
    %143 = tpu.matmul %141, %142, %cst_68 {dimension_numbers = #tpu.dot_dimension_numbers<[1], [0], [0], [1], [0, 0, 1, 1], [], []>} : vector<8x64xbf16>, vector<64x128xbf16>, vector<8x128xf32> -> vector<8x128xf32>
    %c0_69 = arith.constant 0 : index
    %c0_70 = arith.constant 0 : index
    %144 = vector.load %arg11[%c0_69, %c0_70] : memref<1x128xf32, #tpu.memory_space<vmem>>, vector<1x128xf32>
    %145 = vector.broadcast %144 : vector<1x128xf32> to vector<8x128xf32>
    %146 = arith.addf %143, %145 : vector<8x128xf32>
    %cst_71 = arith.constant 0.000000e+00 : f32
    %147 = vector.broadcast %cst_71 : f32 to vector<8x128xf32>
    %148 = arith.maximumf %146, %147 : vector<8x128xf32>
    %149 = arith.truncf %148 : vector<8x128xf32> to vector<8x128xbf16>
    %c0_72 = arith.constant 0 : index
    %c0_73 = arith.constant 0 : index
    %150 = vector.load %arg12[%c0_72, %c0_73] : memref<128x64xbf16, #tpu.memory_space<vmem>>, vector<128x64xbf16>
    %cst_74 = arith.constant dense<0.000000e+00> : vector<8x64xf32>
    %151 = tpu.matmul %149, %150, %cst_74 {dimension_numbers = #tpu.dot_dimension_numbers<[1], [0], [0], [1], [0, 0, 1, 1], [], []>} : vector<8x128xbf16>, vector<128x64xbf16>, vector<8x64xf32> -> vector<8x64xf32>
    %c0_75 = arith.constant 0 : index
    %c0_76 = arith.constant 0 : index
    %152 = vector.load %arg13[%c0_75, %c0_76] : memref<1x64xf32, #tpu.memory_space<vmem>>, vector<1x64xf32>
    %153 = vector.broadcast %152 : vector<1x64xf32> to vector<8x64xf32>
    %154 = arith.addf %151, %153 : vector<8x64xf32>
    %155 = arith.addf %154, %140 : vector<8x64xf32>
    %c0_77 = arith.constant 0 : index
    %c0_78 = arith.constant 0 : index
    %156 = vector.load %arg14[%c0_77, %c0_78] : memref<1x64xf32, #tpu.memory_space<vmem>>, vector<1x64xf32>
    %c0_79 = arith.constant 0 : index
    %c0_80 = arith.constant 0 : index
    %157 = vector.load %arg15[%c0_79, %c0_80] : memref<1x64xf32, #tpu.memory_space<vmem>>, vector<1x64xf32>
    %cst_81 = arith.constant dense<0.000000e+00> : vector<8xf32>
    %158 = vector.multi_reduction <add>, %155, %cst_81 [1] : vector<8x64xf32> to vector<8xf32>
    %159 = vector.shape_cast %158 : vector<8xf32> to vector<8x1xf32>
    %cst_82 = arith.constant 6.400000e+01 : f32
    %160 = vector.broadcast %cst_82 : f32 to vector<8x1xf32>
    %161 = arith.divf %159, %160 : vector<8x1xf32>
    %162 = vector.broadcast %161 : vector<8x1xf32> to vector<8x64xf32>
    %163 = arith.subf %155, %162 : vector<8x64xf32>
    %164 = arith.mulf %163, %163 : vector<8x64xf32>
    %cst_83 = arith.constant dense<0.000000e+00> : vector<8xf32>
    %165 = vector.multi_reduction <add>, %164, %cst_83 [1] : vector<8x64xf32> to vector<8xf32>
    %166 = vector.shape_cast %165 : vector<8xf32> to vector<8x1xf32>
    %cst_84 = arith.constant 6.400000e+01 : f32
    %167 = vector.broadcast %cst_84 : f32 to vector<8x1xf32>
    %168 = arith.divf %166, %167 : vector<8x1xf32>
    %169 = vector.broadcast %161 : vector<8x1xf32> to vector<8x64xf32>
    %170 = arith.subf %155, %169 : vector<8x64xf32>
    %cst_85 = arith.constant 9.99999974E-6 : f32
    %171 = vector.broadcast %cst_85 : f32 to vector<8x1xf32>
    %172 = arith.addf %168, %171 : vector<8x1xf32>
    %173 = math.rsqrt %172 : vector<8x1xf32>
    %174 = vector.broadcast %173 : vector<8x1xf32> to vector<8x64xf32>
    %175 = arith.mulf %170, %174 : vector<8x64xf32>
    %176 = vector.broadcast %156 : vector<1x64xf32> to vector<8x64xf32>
    %177 = arith.mulf %175, %176 : vector<8x64xf32>
    %178 = vector.broadcast %157 : vector<1x64xf32> to vector<8x64xf32>
    %179 = arith.addf %177, %178 : vector<8x64xf32>
    %c0_86 = arith.constant 0 : index
    %c0_87 = arith.constant 0 : index
    %c0_88 = arith.constant 0 : index
    %180 = vector.load %arg16[%c0_86, %c0_87, %c0_88] : memref<1x8x64xf32, #tpu.memory_space<vmem>>, vector<1x8x64xf32>
    %181 = vector.shape_cast %180 : vector<1x8x64xf32> to vector<8x64xf32>
    %182 = vector.shape_cast %179 : vector<8x64xf32> to vector<1x8x64xf32>
    tpu.vector_store %arg16[%c0_86, %c0_87, %c0_88], %182 {strides = array<i32>} : memref<1x8x64xf32, #tpu.memory_space<vmem>>, vector<1x8x64xf32>,
    return
  }
  func.func @transform_0(%arg0: i32, %arg1: i32) -> (i32, i32, i32) {
    %c0_i32 = arith.constant 0 : i32
    %c0_i32_0 = arith.constant 0 : i32
    %c0_i32_1 = arith.constant 0 : i32
    return %arg0, %c0_i32, %c0_i32_0 : i32, i32, i32
  }
  func.func @transform_1(%arg0: i32, %arg1: i32) -> (i32, i32, i32) {
    %c0_i32 = arith.constant 0 : i32
    %c0_i32_0 = arith.constant 0 : i32
    %c0_i32_1 = arith.constant 0 : i32
    return %arg0, %c0_i32, %c0_i32_0 : i32, i32, i32
  }
  func.func @transform_2(%arg0: i32, %arg1: i32) -> (i32, i32) {
    %c0_i32 = arith.constant 0 : i32
    %c0_i32_0 = arith.constant 0 : i32
    %c0_i32_1 = arith.constant 0 : i32
    return %c0_i32, %c0_i32_0 : i32, i32
  }
  func.func @transform_3(%arg0: i32, %arg1: i32) -> (i32, i32) {
    %c0_i32 = arith.constant 0 : i32
    %c0_i32_0 = arith.constant 0 : i32
    %c0_i32_1 = arith.constant 0 : i32
    return %c0_i32, %c0_i32_0 : i32, i32
  }
  func.func @transform_4(%arg0: i32, %arg1: i32) -> (i32, i32) {
    %c0_i32 = arith.constant 0 : i32
    %c0_i32_0 = arith.constant 0 : i32
    %c0_i32_1 = arith.constant 0 : i32
    return %c0_i32, %c0_i32_0 : i32, i32
  }
  func.func @transform_5(%arg0: i32, %arg1: i32) -> (i32, i32) {
    %c0_i32 = arith.constant 0 : i32
    %c0_i32_0 = arith.constant 0 : i32
    %c0_i32_1 = arith.constant 0 : i32
    return %c0_i32, %c0_i32_0 : i32, i32
  }
  func.func @transform_6(%arg0: i32, %arg1: i32) -> (i32, i32) {
    %c0_i32 = arith.constant 0 : i32
    %c0_i32_0 = arith.constant 0 : i32
    %c0_i32_1 = arith.constant 0 : i32
    return %c0_i32, %c0_i32_0 : i32, i32
  }
  func.func @transform_7(%arg0: i32, %arg1: i32) -> (i32, i32) {
    %c0_i32 = arith.constant 0 : i32
    %c0_i32_0 = arith.constant 0 : i32
    %c0_i32_1 = arith.constant 0 : i32
    return %c0_i32, %c0_i32_0 : i32, i32
  }
  func.func @transform_8(%arg0: i32, %arg1: i32) -> (i32, i32) {
    %c0_i32 = arith.constant 0 : i32
    %c0_i32_0 = arith.constant 0 : i32
    %c0_i32_1 = arith.constant 0 : i32
    return %c0_i32, %c0_i32_0 : i32, i32
  }
  func.func @transform_9(%arg0: i32, %arg1: i32) -> (i32, i32) {
    %c0_i32 = arith.constant 0 : i32
    %c0_i32_0 = arith.constant 0 : i32
    %c0_i32_1 = arith.constant 0 : i32
    return %c0_i32, %c0_i32_0 : i32, i32
  }
  func.func @transform_10(%arg0: i32, %arg1: i32) -> (i32, i32) {
    %c0_i32 = arith.constant 0 : i32
    %c0_i32_0 = arith.constant 0 : i32
    %c0_i32_1 = arith.constant 0 : i32
    return %c0_i32, %c0_i32_0 : i32, i32
  }
  func.func @transform_11(%arg0: i32, %arg1: i32) -> (i32, i32) {
    %c0_i32 = arith.constant 0 : i32
    %c0_i32_0 = arith.constant 0 : i32
    %c0_i32_1 = arith.constant 0 : i32
    return %c0_i32, %c0_i32_0 : i32, i32
  }
  func.func @transform_12(%arg0: i32, %arg1: i32) -> (i32, i32) {
    %c0_i32 = arith.constant 0 : i32
    %c0_i32_0 = arith.constant 0 : i32
    %c0_i32_1 = arith.constant 0 : i32
    return %c0_i32, %c0_i32_0 : i32, i32
  }
  func.func @transform_13(%arg0: i32, %arg1: i32) -> (i32, i32) {
    %c0_i32 = arith.constant 0 : i32
    %c0_i32_0 = arith.constant 0 : i32
    %c0_i32_1 = arith.constant 0 : i32
    return %c0_i32, %c0_i32_0 : i32, i32
  }
  func.func @transform_14(%arg0: i32, %arg1: i32) -> (i32, i32, i32) {
    %c0_i32 = arith.constant 0 : i32
    %c0_i32_0 = arith.constant 0 : i32
    return %arg0, %arg1, %c0_i32 : i32, i32, i32
  }
}

</mosaic_0001>

<llo_original>
// kernel: encoder_pallas.3
$region0: #{encoder_pallas.3}
  #allocation0 [shape = 'u32[]', space=smem, size = 0x4, offset = 0x4, fixed_abs, tag = 'smem constant byte address 0x4 - core index']
  #allocation1 [shape = 'u32[72,128]{1,0:T(1,128)}', space=vmem, size = 0x9000, scoped, tag = 'internal scratch']
  #allocation2 [shape = 'bf16[16,64]{1,0:T(8,128)(2,1)}', space=vmem, size = 0x1000, scoped, tag = 'scratch operand']
  #allocation3 [shape = 'bf16[16,64]{1,0:T(8,128)(2,1)}', space=vmem, size = 0x1000, scoped, tag = 'scratch operand']
  %s0 = inlined_call_operand.hbm [shape: f32[2,16,64], index: 0, kind: input, shape index: {}, may-alias: {0,14}]
  %s1 = inlined_call_operand.vmem [shape: f32[2,1,16], index: 1, kind: input, shape index: {}]
  %s2 = inlined_call_operand.vmem [shape: bf16[64,192], index: 2, kind: input, shape index: {}]
  %s3 = inlined_call_operand.vmem [shape: f32[1,192], index: 3, kind: input, shape index: {}]
  %s4 = inlined_call_operand.vmem [shape: bf16[64,64], index: 4, kind: input, shape index: {}]
  %s5 = inlined_call_operand.vmem [shape: f32[1,64], index: 5, kind: input, shape index: {}]
  %s6 = inlined_call_operand.vmem [shape: f32[1,64], index: 6, kind: input, shape index: {}]
  %s7 = inlined_call_operand.vmem [shape: f32[1,64], index: 7, kind: input, shape index: {}]
  %s8 = inlined_call_operand.hbm [shape: bf16[64,128], index: 8, kind: input, shape index: {}]
  %s9 = inlined_call_operand.vmem [shape: f32[1,128], index: 9, kind: input, shape index: {}]
  %s10 = inlined_call_operand.vmem [shape: bf16[128,64], index: 10, kind: input, shape index: {}]
  %s11 = inlined_call_operand.vmem [shape: f32[1,64], index: 11, kind: input, shape index: {}]
  %s12 = inlined_call_operand.vmem [shape: f32[1,64], index: 12, kind: input, shape index: {}]
  %s13 = inlined_call_operand.vmem [shape: f32[1,64], index: 13, kind: input, shape index: {}]
  %s14 = inlined_call_operand.hbm [shape: f32[2,16,64], index: 14, kind: output, shape index: {}, may-alias: {0,14}]
  %s15 = sld [smem:[#allocation0]]
  $region101: #{encoder_pallas.3} parent=0
    _
  %s17 = ssub.s32 1, %s15
  %s18 = scalar_select 0, %s17, %s15
  $region1: #{encoder_pallas.3} parent=0
    #allocation4 [shape = 'u8[16384]{0}', space=vmem, size = 0x4000, scoped, tag = 'input window, operand 0']
    #allocation5 [shape = 's32[2]{0}', space=sflag, size = 0x8, scoped, tag = 'scoped memory for encoder_pallas.3']
    #allocation6 [shape = 's32[2]{0}', space=sflag, size = 0x8, scoped, tag = 'scoped memory for encoder_pallas.3']
    #allocation7 [shape = 'u8[16384]{0}', space=vmem, size = 0x4000, scoped, tag = 'input window, operand 8, single buffered']
    #allocation8 [shape = 's32[1]{0}', space=sflag, size = 0x4, scoped, tag = 'scoped memory for encoder_pallas.3']
    #allocation9 [shape = 'u8[8192]{0}', space=vmem, size = 0x2000, scoped, tag = 'output window, operand 0']
    %19 = vsyncpa [#allocation5], 0
    %s20 = scalar_lea.sflag [#allocation5], 1
    %21 = vsyncpa %s20, 0
    %22 = vsyncpa [#allocation8], 0
    %23 = vsyncpa [#allocation6], 0
    %s24 = scalar_lea.sflag [#allocation6], 1
    %25 = vsyncpa %s24, 0
    loop: start=0, step=1, limit=6
    $region2: #{encoder_pallas.3} parent=1 // loop_pre_header
      _
    $region3: #{encoder_pallas.3} parent=1 // loop_header
      %s27 = sphi 0, %s31
      %p28 = scmp.ge.s32.totalorder %s27, 6
      %s34 = sphi 0, %s46
      %s35 = sphi 0, %s42
      %s36 = sphi 0, %s34
      %s37 = sphi 0, %s35
      %s38 = sphi 0, %s36
      %s39 = sphi 0, %s37
      %s49 = sphi 0, %s51
      %s52 = sphi 0, %s49
      %s53 = sphi 0, %s52
      %s69 = sphi 0, %s53
      %s75 = sphi 0, %s77
      %s78 = sphi 0, %s75
      %s79 = sphi 0, %s78
      %s95 = sphi 0, %s79
      %s99 = sphi 0, %s99
      %s101 = sphi 0, %s99
      %s102 = sphi 0, %s101
      %s116 = sphi 0, %s102
      %s120 = sphi 0, %s120
      %s122 = sphi 0, %s120
      %s123 = sphi 0, %s122
      %s137 = sphi 0, %s123
      %s141 = sphi 0, %s141
      %s143 = sphi 0, %s141
      %s144 = sphi 0, %s143
      %s158 = sphi 0, %s144
      %s162 = sphi 0, %s162
      %s164 = sphi 0, %s162
      %s165 = sphi 0, %s164
      %s179 = sphi 0, %s165
      %s183 = sphi 0, %s183
      %s185 = sphi 0, %s183
      %s186 = sphi 0, %s185
      %s200 = sphi 0, %s186
      %s204 = sphi 0, %s204
      %s206 = sphi 0, %s204
      %s207 = sphi 0, %s206
      %s221 = sphi 0, %s207
      %s225 = sphi 0, %s225
      %s227 = sphi 0, %s225
      %s228 = sphi 0, %s227
      %s242 = sphi 0, %s228
      %s246 = sphi 0, %s246
      %s248 = sphi 0, %s246
      %s249 = sphi 0, %s248
      %s263 = sphi 0, %s249
      %s267 = sphi 0, %s267
      %s269 = sphi 0, %s267
      %s270 = sphi 0, %s269
      %s284 = sphi 0, %s270
      %s288 = sphi 0, %s288
      %s290 = sphi 0, %s288
      %s291 = sphi 0, %s290
      %s305 = sphi 0, %s291
      %s309 = sphi 0, %s309
      %s311 = sphi 0, %s309
      %s312 = sphi 0, %s311
      %s326 = sphi 0, %s312
      %s330 = sphi 0, %s330
      %s332 = sphi 0, %s330
      %s333 = sphi 0, %s332
      %s347 = sphi 0, %s333
      %s355 = sphi 0, %s357
      %s358 = sphi 0, %s355
      %s359 = sphi 0, %s358
      %s375 = sphi 0, %s359
    $region4: #{encoder_pallas.3} parent=1 // loop_header_branch
      %30 = sbr.rel (%p28) target = $region8
    $region5: #{encoder_pallas.3} parent=1 // loop_body
      %s32 = ssub.s32 %s27, 1
      %s33 = ssub.s32 %s27, 2
      %s40 = sadd.s32 1, %s35
      %p41 = scmp.ge.s32.totalorder %s40, 2
      %s42 = scalar_select %p41, 0, %s40
      %s43 = sadd.s32 1, %s34
      %s44 = scalar_select %p41, %s43, %s34
      %p45 = scmp.ge.s32.totalorder %s44, 2
      %s46 = scalar_select %p45, 0, %s44
      %s47 = ssub.s32 %s34, %s46
      %p48 = scmp.eq.s32.totalorder %s47, 0
      %s50 = sadd.s32 %s49, 1
      %s51 = scalar_select %p48, %s49, %s50
      %p54 = pneg %p48
      %p55 = scmp.eq.s32.totalorder %s27, 3
      %p56 = por %p54, %p55
      %p57 = scmp.ne.s32.totalorder %s49, %s52
      %p58 = scmp.eq.s32.totalorder %s27, 0
      %p59 = por %p57, %p58
      %p60 = scmp.ne.s32.totalorder %s49, %s52
      %p61 = scmp.eq.s32.totalorder %s32, 3
      %p62 = por %p60, %p61
      %p63 = scmp.ne.s32.totalorder %s52, %s53
      %p64 = scmp.eq.s32.totalorder %s32, 0
      %p65 = por %p63, %p64
      %p66 = scmp.ne.s32.totalorder %s52, %s53
      %p67 = scmp.eq.s32.totalorder %s33, 3
      %p68 = por %p66, %p67
      %p70 = scmp.ne.s32.totalorder %s53, %s69
      %p71 = scmp.eq.s32.totalorder %s33, 0
      %p72 = por %p70, %p71
      %s73 = ssub.s32 %s34, %s46
      %p74 = scmp.eq.s32.totalorder %s73, 0
      %s76 = sadd.s32 %s75, 1
      %s77 = scalar_select %p74, %s75, %s76
      %p80 = pneg %p74
      %p81 = scmp.eq.s32.totalorder %s27, 3
      %p82 = por %p80, %p81
      %p83 = scmp.ne.s32.totalorder %s75, %s78
      %p84 = scmp.eq.s32.totalorder %s27, 0
      %p85 = por %p83, %p84
      %p86 = scmp.ne.s32.totalorder %s75, %s78
      %p87 = scmp.eq.s32.totalorder %s32, 3
      %p88 = por %p86, %p87
      %p89 = scmp.ne.s32.totalorder %s78, %s79
      %p90 = scmp.eq.s32.totalorder %s32, 0
      %p91 = por %p89, %p90
      %p92 = scmp.ne.s32.totalorder %s78, %s79
      %p93 = scmp.eq.s32.totalorder %s33, 3
      %p94 = por %p92, %p93
      %p96 = scmp.ne.s32.totalorder %s79, %s95
      %p97 = scmp.eq.s32.totalorder %s33, 0
      %p98 = por %p96, %p97
      %s100 = sadd.s32 %s99, 1
      %p103 = scmp.eq.s32.totalorder %s27, 3
      %p104 = scmp.ne.s32.totalorder %s99, %s101
      %p105 = scmp.eq.s32.totalorder %s27, 0
      %p106 = por %p104, %p105
      %p107 = scmp.ne.s32.totalorder %s99, %s101
      %p108 = scmp.eq.s32.totalorder %s32, 3
      %p109 = por %p107, %p108
      %p110 = scmp.ne.s32.totalorder %s101, %s102
      %p111 = scmp.eq.s32.totalorder %s32, 0
      %p112 = por %p110, %p111
      %p113 = scmp.ne.s32.totalorder %s101, %s102
      %p114 = scmp.eq.s32.totalorder %s33, 3
      %p115 = por %p113, %p114
      %p117 = scmp.ne.s32.totalorder %s102, %s116
      %p118 = scmp.eq.s32.totalorder %s33, 0
      %p119 = por %p117, %p118
      %s121 = sadd.s32 %s120, 1
      %p124 = scmp.eq.s32.totalorder %s27, 3
      %p125 = scmp.ne.s32.totalorder %s120, %s122
      %p126 = scmp.eq.s32.totalorder %s27, 0
      %p127 = por %p125, %p126
      %p128 = scmp.ne.s32.totalorder %s120, %s122
      %p129 = scmp.eq.s32.totalorder %s32, 3
      %p130 = por %p128, %p129
      %p131 = scmp.ne.s32.totalorder %s122, %s123
      %p132 = scmp.eq.s32.totalorder %s32, 0
      %p133 = por %p131, %p132
      %p134 = scmp.ne.s32.totalorder %s122, %s123
      %p135 = scmp.eq.s32.totalorder %s33, 3
      %p136 = por %p134, %p135
      %p138 = scmp.ne.s32.totalorder %s123, %s137
      %p139 = scmp.eq.s32.totalorder %s33, 0
      %p140 = por %p138, %p139
      %s142 = sadd.s32 %s141, 1
      %p145 = scmp.eq.s32.totalorder %s27, 3
      %p146 = scmp.ne.s32.totalorder %s141, %s143
      %p147 = scmp.eq.s32.totalorder %s27, 0
      %p148 = por %p146, %p147
      %p149 = scmp.ne.s32.totalorder %s141, %s143
      %p150 = scmp.eq.s32.totalorder %s32, 3
      %p151 = por %p149, %p150
      %p152 = scmp.ne.s32.totalorder %s143, %s144
      %p153 = scmp.eq.s32.totalorder %s32, 0
      %p154 = por %p152, %p153
      %p155 = scmp.ne.s32.totalorder %s143, %s144
      %p156 = scmp.eq.s32.totalorder %s33, 3
      %p157 = por %p155, %p156
      %p159 = scmp.ne.s32.totalorder %s144, %s158
      %p160 = scmp.eq.s32.totalorder %s33, 0
      %p161 = por %p159, %p160
      %s163 = sadd.s32 %s162, 1
      %p166 = scmp.eq.s32.totalorder %s27, 3
      %p167 = scmp.ne.s32.totalorder %s162, %s164
      %p168 = scmp.eq.s32.totalorder %s27, 0
      %p169 = por %p167, %p168
      %p170 = scmp.ne.s32.totalorder %s162, %s164
      %p171 = scmp.eq.s32.totalorder %s32, 3
      %p172 = por %p170, %p171
      %p173 = scmp.ne.s32.totalorder %s164, %s165
      %p174 = scmp.eq.s32.totalorder %s32, 0
      %p175 = por %p173, %p174
      %p176 = scmp.ne.s32.totalorder %s164, %s165
      %p177 = scmp.eq.s32.totalorder %s33, 3
      %p178 = por %p176, %p177
      %p180 = scmp.ne.s32.totalorder %s165, %s179
      %p181 = scmp.eq.s32.totalorder %s33, 0
      %p182 = por %p180, %p181
      %s184 = sadd.s32 %s183, 1
      %p187 = scmp.eq.s32.totalorder %s27, 3
      %p188 = scmp.ne.s32.totalorder %s183, %s185
      %p189 = scmp.eq.s32.totalorder %s27, 0
      %p190 = por %p188, %p189
      %p191 = scmp.ne.s32.totalorder %s183, %s185
      %p192 = scmp.eq.s32.totalorder %s32, 3
      %p193 = por %p191, %p192
      %p194 = scmp.ne.s32.totalorder %s185, %s186
      %p195 = scmp.eq.s32.totalorder %s32, 0
      %p196 = por %p194, %p195
      %p197 = scmp.ne.s32.totalorder %s185, %s186
      %p198 = scmp.eq.s32.totalorder %s33, 3
      %p199 = por %p197, %p198
      %p201 = scmp.ne.s32.totalorder %s186, %s200
      %p202 = scmp.eq.s32.totalorder %s33, 0
      %p203 = por %p201, %p202
      %s205 = sadd.s32 %s204, 1
      %p208 = scmp.eq.s32.totalorder %s27, 3
      %p209 = scmp.ne.s32.totalorder %s204, %s206
      %p210 = scmp.eq.s32.totalorder %s27, 0
      %p211 = por %p209, %p210
      %p212 = scmp.ne.s32.totalorder %s204, %s206
      %p213 = scmp.eq.s32.totalorder %s32, 3
      %p214 = por %p212, %p213
      %p215 = scmp.ne.s32.totalorder %s206, %s207
      %p216 = scmp.eq.s32.totalorder %s32, 0
      %p217 = por %p215, %p216
      %p218 = scmp.ne.s32.totalorder %s206, %s207
      %p219 = scmp.eq.s32.totalorder %s33, 3
      %p220 = por %p218, %p219
      %p222 = scmp.ne.s32.totalorder %s207, %s221
      %p223 = scmp.eq.s32.totalorder %s33, 0
      %p224 = por %p222, %p223
      %s226 = sadd.s32 %s225, 1
      %p229 = scmp.eq.s32.totalorder %s27, 3
      %p230 = scmp.ne.s32.totalorder %s225, %s227
      %p231 = scmp.eq.s32.totalorder %s27, 0
      %p232 = por %p230, %p231
      %p233 = scmp.ne.s32.totalorder %s225, %s227
      %p234 = scmp.eq.s32.totalorder %s32, 3
      %p235 = por %p233, %p234
      %p236 = scmp.ne.s32.totalorder %s227, %s228
      %p237 = scmp.eq.s32.totalorder %s32, 0
      %p238 = por %p236, %p237
      %p239 = scmp.ne.s32.totalorder %s227, %s228
      %p240 = scmp.eq.s32.totalorder %s33, 3
      %p241 = por %p239, %p240
      %p243 = scmp.ne.s32.totalorder %s228, %s242
      %p244 = scmp.eq.s32.totalorder %s33, 0
      %p245 = por %p243, %p244
      %s247 = sadd.s32 %s246, 1
      %p250 = scmp.eq.s32.totalorder %s27, 3
      %p251 = scmp.ne.s32.totalorder %s246, %s248
      %p252 = scmp.eq.s32.totalorder %s27, 0
      %p253 = por %p251, %p252
      %p254 = scmp.ne.s32.totalorder %s246, %s248
      %p255 = scmp.eq.s32.totalorder %s32, 3
      %p256 = por %p254, %p255
      %p257 = scmp.ne.s32.totalorder %s248, %s249
      %p258 = scmp.eq.s32.totalorder %s32, 0
      %p259 = por %p257, %p258
      %p260 = scmp.ne.s32.totalorder %s248, %s249
      %p261 = scmp.eq.s32.totalorder %s33, 3
      %p262 = por %p260, %p261
      %p264 = scmp.ne.s32.totalorder %s249, %s263
      %p265 = scmp.eq.s32.totalorder %s33, 0
      %p266 = por %p264, %p265
      %s268 = sadd.s32 %s267, 1
      %p271 = scmp.eq.s32.totalorder %s27, 3
      %p272 = scmp.ne.s32.totalorder %s267, %s269
      %p273 = scmp.eq.s32.totalorder %s27, 0
      %p274 = por %p272, %p273
      %p275 = scmp.ne.s32.totalorder %s267, %s269
      %p276 = scmp.eq.s32.totalorder %s32, 3
      %p277 = por %p275, %p276
      %p278 = scmp.ne.s32.totalorder %s269, %s270
      %p279 = scmp.eq.s32.totalorder %s32, 0
      %p280 = por %p278, %p279
      %p281 = scmp.ne.s32.totalorder %s269, %s270
      %p282 = scmp.eq.s32.totalorder %s33, 3
      %p283 = por %p281, %p282
      %p285 = scmp.ne.s32.totalorder %s270, %s284
      %p286 = scmp.eq.s32.totalorder %s33, 0
      %p287 = por %p285, %p286
      %s289 = sadd.s32 %s288, 1
      %p292 = scmp.eq.s32.totalorder %s27, 3
      %p293 = scmp.ne.s32.totalorder %s288, %s290
      %p294 = scmp.eq.s32.totalorder %s27, 0
      %p295 = por %p293, %p294
      %p296 = scmp.ne.s32.totalorder %s288, %s290
      %p297 = scmp.eq.s32.totalorder %s32, 3
      %p298 = por %p296, %p297
      %p299 = scmp.ne.s32.totalorder %s290, %s291
      %p300 = scmp.eq.s32.totalorder %s32, 0
      %p301 = por %p299, %p300
      %p302 = scmp.ne.s32.totalorder %s290, %s291
      %p303 = scmp.eq.s32.totalorder %s33, 3
      %p304 = por %p302, %p303
      %p306 = scmp.ne.s32.totalorder %s291, %s305
      %p307 = scmp.eq.s32.totalorder %s33, 0
      %p308 = por %p306, %p307
      %s310 = sadd.s32 %s309, 1
      %p313 = scmp.eq.s32.totalorder %s27, 3
      %p314 = scmp.ne.s32.totalorder %s309, %s311
      %p315 = scmp.eq.s32.totalorder %s27, 0
      %p316 = por %p314, %p315
      %p317 = scmp.ne.s32.totalorder %s309, %s311
      %p318 = scmp.eq.s32.totalorder %s32, 3
      %p319 = por %p317, %p318
      %p320 = scmp.ne.s32.totalorder %s311, %s312
      %p321 = scmp.eq.s32.totalorder %s32, 0
      %p322 = por %p320, %p321
      %p323 = scmp.ne.s32.totalorder %s311, %s312
      %p324 = scmp.eq.s32.totalorder %s33, 3
      %p325 = por %p323, %p324
      %p327 = scmp.ne.s32.totalorder %s312, %s326
      %p328 = scmp.eq.s32.totalorder %s33, 0
      %p329 = por %p327, %p328
      %s331 = sadd.s32 %s330, 1
      %p334 = scmp.eq.s32.totalorder %s27, 3
      %p335 = scmp.ne.s32.totalorder %s330, %s332
      %p336 = scmp.eq.s32.totalorder %s27, 0
      %p337 = por %p335, %p336
      %p338 = scmp.ne.s32.totalorder %s330, %s332
      %p339 = scmp.eq.s32.totalorder %s32, 3
      %p340 = por %p338, %p339
      %p341 = scmp.ne.s32.totalorder %s332, %s333
      %p342 = scmp.eq.s32.totalorder %s32, 0
      %p343 = por %p341, %p342
      %p344 = scmp.ne.s32.totalorder %s332, %s333
      %p345 = scmp.eq.s32.totalorder %s33, 3
      %p346 = por %p344, %p345
      %p348 = scmp.ne.s32.totalorder %s333, %s347
      %p349 = scmp.eq.s32.totalorder %s33, 0
      %p350 = por %p348, %p349
      %s351 = ssub.s32 %s34, %s46
      %s352 = ssub.s32 %s35, %s42
      %s353 = sor.u32 %s351, %s352
      %p354 = scmp.eq.s32.totalorder %s353, 0
      %s356 = sadd.s32 %s355, 1
      %s357 = scalar_select %p354, %s355, %s356
      %p360 = pneg %p354
      %p361 = scmp.eq.s32.totalorder %s27, 3
      %p362 = por %p360, %p361
      %p363 = scmp.ne.s32.totalorder %s355, %s358
      %p364 = scmp.eq.s32.totalorder %s27, 0
      %p365 = por %p363, %p364
      %p366 = scmp.ne.s32.totalorder %s355, %s358
      %p367 = scmp.eq.s32.totalorder %s32, 3
      %p368 = por %p366, %p367
      %p369 = scmp.ne.s32.totalorder %s358, %s359
      %p370 = scmp.eq.s32.totalorder %s32, 0
      %p371 = por %p369, %p370
      %p372 = scmp.ne.s32.totalorder %s358, %s359
      %p373 = scmp.eq.s32.totalorder %s33, 3
      %p374 = por %p372, %p373
      %p376 = scmp.ne.s32.totalorder %s359, %s375
      %p377 = scmp.eq.s32.totalorder %s33, 0
      %p378 = por %p376, %p377
      %p379 = scmp.le.s32.totalorder 1, %s27
      %p380 = scmp.lt.s32.totalorder %s27, 5
      %p381 = pnand %p379, %p380
      %p382 = pneg %p381
      // Predicated region
      $region9: #{encoder_pallas.3} parent=5 // pred_check
        _
      $region10: #{encoder_pallas.3} parent=5 // pred_check_branch
        %384 = sbr.rel (%p381) target = $region12
      $region11: #{encoder_pallas.3} parent=5 // pred_region
        %s385 = ssub.s32 %s27, 1
        // Predicated region
        $region13: #{encoder_pallas.3} parent=11 // pred_check
          %p386 = pneg %p112
        $region14: #{encoder_pallas.3} parent=11 // pred_check_branch
          %388 = sbr.rel (%p386) target = $region16
        $region15: #{encoder_pallas.3} parent=11 // pred_region
          _
        $region16: #{encoder_pallas.3} parent=11 // pred_fallthru
          _
        // Predicated region
        $region17: #{encoder_pallas.3} parent=11 // pred_check
          %p389 = pneg %p133
        $region18: #{encoder_pallas.3} parent=11 // pred_check_branch
          %391 = sbr.rel (%p389) target = $region20
        $region19: #{encoder_pallas.3} parent=11 // pred_region
          _
        $region20: #{encoder_pallas.3} parent=11 // pred_fallthru
          _
        // Predicated region
        $region21: #{encoder_pallas.3} parent=11 // pred_check
          %p392 = pneg %p154
        $region22: #{encoder_pallas.3} parent=11 // pred_check_branch
          %394 = sbr.rel (%p392) target = $region24
        $region23: #{encoder_pallas.3} parent=11 // pred_region
          _
        $region24: #{encoder_pallas.3} parent=11 // pred_fallthru
          _
        // Predicated region
        $region25: #{encoder_pallas.3} parent=11 // pred_check
          %p395 = pneg %p175
        $region26: #{encoder_pallas.3} parent=11 // pred_check_branch
          %397 = sbr.rel (%p395) target = $region28
        $region27: #{encoder_pallas.3} parent=11 // pred_region
          _
        $region28: #{encoder_pallas.3} parent=11 // pred_fallthru
          _
        // Predicated region
        $region29: #{encoder_pallas.3} parent=11 // pred_check
          %p398 = pneg %p196
        $region30: #{encoder_pallas.3} parent=11 // pred_check_branch
          %400 = sbr.rel (%p398) target = $region32
        $region31: #{encoder_pallas.3} parent=11 // pred_region
          _
        $region32: #{encoder_pallas.3} parent=11 // pred_fallthru
          _
        // Predicated region
        $region33: #{encoder_pallas.3} parent=11 // pred_check
          %p401 = pneg %p217
        $region34: #{encoder_pallas.3} parent=11 // pred_check_branch
          %403 = sbr.rel (%p401) target = $region36
        $region35: #{encoder_pallas.3} parent=11 // pred_region
          _
        $region36: #{encoder_pallas.3} parent=11 // pred_fallthru
          _
        // Predicated region
        $region37: #{encoder_pallas.3} parent=11 // pred_check
          %p404 = pneg %p238
        $region38: #{encoder_pallas.3} parent=11 // pred_check_branch
          %406 = sbr.rel (%p404) target = $region40
        $region39: #{encoder_pallas.3} parent=11 // pred_region
          %408 = vsyncadd [#allocation8], 0
          %s409 = sshll.u32 %s8, 4
          %s410 = int_to_ptr.hbm [resolvable:$true] %s409
          %s411 = sshll.u32 [#allocation7], 4
          %s412 = int_to_ptr.vmem [resolvable:$true] %s411
          %417 = dma.hbm_to_vmem [thread:$0]  %s410, 512, %s412, [#allocation8], 64, 64, 4
        $region40: #{encoder_pallas.3} parent=11 // pred_fallthru
          _
        // Predicated region
        $region41: #{encoder_pallas.3} parent=11 // pred_check
          %p418 = pneg %p259
        $region42: #{encoder_pallas.3} parent=11 // pred_check_branch
          %420 = sbr.rel (%p418) target = $region44
        $region43: #{encoder_pallas.3} parent=11 // pred_region
          _
        $region44: #{encoder_pallas.3} parent=11 // pred_fallthru
          _
        // Predicated region
        $region45: #{encoder_pallas.3} parent=11 // pred_check
          %p421 = pneg %p280
        $region46: #{encoder_pallas.3} parent=11 // pred_check_branch
          %423 = sbr.rel (%p421) target = $region48
        $region47: #{encoder_pallas.3} parent=11 // pred_region
          _
        $region48: #{encoder_pallas.3} parent=11 // pred_fallthru
          _
        // Predicated region
        $region49: #{encoder_pallas.3} parent=11 // pred_check
          %p424 = pneg %p301
        $region50: #{encoder_pallas.3} parent=11 // pred_check_branch
          %426 = sbr.rel (%p424) target = $region52
        $region51: #{encoder_pallas.3} parent=11 // pred_region
          _
        $region52: #{encoder_pallas.3} parent=11 // pred_fallthru
          _
        // Predicated region
        $region53: #{encoder_pallas.3} parent=11 // pred_check
          %p427 = pneg %p322
        $region54: #{encoder_pallas.3} parent=11 // pred_check_branch
          %429 = sbr.rel (%p427) target = $region56
        $region55: #{encoder_pallas.3} parent=11 // pred_region
          _
        $region56: #{encoder_pallas.3} parent=11 // pred_fallthru
          _
        // Predicated region
        $region57: #{encoder_pallas.3} parent=11 // pred_check
          %p430 = pneg %p343
        $region58: #{encoder_pallas.3} parent=11 // pred_check_branch
          %432 = sbr.rel (%p430) target = $region60
        $region59: #{encoder_pallas.3} parent=11 // pred_region
          _
        $region60: #{encoder_pallas.3} parent=11 // pred_fallthru
          _
      $region12: #{encoder_pallas.3} parent=5 // pred_fallthru
        _
      %p433 = scmp.lt.s32.totalorder %s27, 4
      // Predicated region
      $region61: #{encoder_pallas.3} parent=5 // pred_check
        %p434 = pneg %p433
      $region62: #{encoder_pallas.3} parent=5 // pred_check_branch
        %436 = sbr.rel (%p434) target = $region64
      $region63: #{encoder_pallas.3} parent=5 // pred_region
        // Predicated region
        $region65: #{encoder_pallas.3} parent=63 // pred_check
          %p437 = pneg %p59
        $region66: #{encoder_pallas.3} parent=63 // pred_check_branch
          %439 = sbr.rel (%p437) target = $region68
        $region67: #{encoder_pallas.3} parent=63 // pred_region
          %s440 = sand.u32 %s49, 1
          %s441 = scalar_lea.sflag [#allocation5], %s440
          %s442 = sand.u32 %s49, 1
          %s443 = smul.addr %s442, 16
          %s444 = scalar_lea.vmem [#allocation4], %s443
          %446 = vsyncadd %s441, 0
          %s447 = smul.addr %s34, 2
          %s448 = smul.addr %s447, 8
          %s449 = scalar_lea.hbm %s0, %s448
          %s450 = sshll.u32 %s449, 4
          %s451 = int_to_ptr.hbm [resolvable:$true] %s450
          %s452 = sshll.u32 %s444, 4
          %s453 = int_to_ptr.vmem [resolvable:$true] %s452
          %458 = dma.hbm_to_vmem [thread:$0]  %s451, 256, %s453, %s441, 128, 128, 8
        $region68: #{encoder_pallas.3} parent=63 // pred_fallthru
          _
        // Predicated region
        $region69: #{encoder_pallas.3} parent=63 // pred_check
          %p459 = pneg %p85
        $region70: #{encoder_pallas.3} parent=63 // pred_check_branch
          %461 = sbr.rel (%p459) target = $region72
        $region71: #{encoder_pallas.3} parent=63 // pred_region
          %p462 = scmp.lt.s32.totalorder %s34, 1
          %s463 = scalar_select %p462, %s34, 1
          %s464 = scalar_lea.vmem %s1, %s463
        $region72: #{encoder_pallas.3} parent=63 // pred_fallthru
          _
      $region64: #{encoder_pallas.3} parent=5 // pred_fallthru
        _
      %p465 = scmp.le.s32.totalorder 1, %s27
      %p466 = scmp.lt.s32.totalorder %s27, 5
      %p467 = pnand %p465, %p466
      %p468 = pneg %p467
      // Predicated region
      $region73: #{encoder_pallas.3} parent=5 // pred_check
        _
      $region74: #{encoder_pallas.3} parent=5 // pred_check_branch
        %470 = sbr.rel (%p467) target = $region76
      $region75: #{encoder_pallas.3} parent=5 // pred_region
        %s471 = ssub.s32 %s27, 1
        %s472 = sand.u32 %s52, 1
        %s473 = scalar_lea.sflag [#allocation5], %s472
        %s474 = sand.u32 %s52, 1
        %s475 = smul.addr %s474, 16
        %s476 = scalar_lea.vmem [#allocation4], %s475
        // Predicated region
        $region77: #{encoder_pallas.3} parent=75 // pred_check
          %p477 = pneg %p65
        $region78: #{encoder_pallas.3} parent=75 // pred_check_branch
          %479 = sbr.rel (%p477) target = $region80
        $region79: #{encoder_pallas.3} parent=75 // pred_region
          %481 = dma.done %s473, 256
        $region80: #{encoder_pallas.3} parent=75 // pred_fallthru
          _
        // Predicated region
        $region81: #{encoder_pallas.3} parent=75 // pred_check
          %p482 = pneg %p238
        $region82: #{encoder_pallas.3} parent=75 // pred_check_branch
          %484 = sbr.rel (%p482) target = $region84
        $region83: #{encoder_pallas.3} parent=75 // pred_region
          %486 = dma.done [#allocation8], 512
        $region84: #{encoder_pallas.3} parent=75 // pred_fallthru
          _
        %s487 = sand.u32 %s52, 1
        %s488 = scalar_lea.sflag [#allocation5], %s487
        %s489 = sand.u32 %s52, 1
        %s490 = smul.addr %s489, 16
        %s491 = scalar_lea.vmem [#allocation4], %s490
        %p492 = pneg %p65
        %p493 = pneg %p62
        %p494 = scmp.lt.s32.totalorder %s36, 1
        %s495 = scalar_select %p494, %s36, 1
        %s496 = scalar_lea.vmem %s1, %s495
        %p497 = pneg %p91
        %p498 = pneg %p88
        %p499 = pneg %p112
        %p500 = pneg %p109
        %p501 = pneg %p133
        %p502 = pneg %p130
        %p503 = pneg %p154
        %p504 = pneg %p151
        %p505 = pneg %p175
        %p506 = pneg %p172
        %p507 = pneg %p196
        %p508 = pneg %p193
        %p509 = pneg %p217
        %p510 = pneg %p214
        %p511 = pneg %p238
        %p512 = pneg %p235
        %p513 = pneg %p259
        %p514 = pneg %p256
        %p515 = pneg %p280
        %p516 = pneg %p277
        %p517 = pneg %p301
        %p518 = pneg %p298
        %p519 = pneg %p322
        %p520 = pneg %p319
        %p521 = pneg %p343
        %p522 = pneg %p340
        %p523 = pneg %p371
        %p524 = pneg %p368
        %s525 = sand.u32 %s358, 1
        %s526 = scalar_lea.sflag [#allocation6], %s525
        %s527 = sand.u32 %s358, 1
        %s528 = smul.addr %s527, 8
        %s529 = scalar_lea.vmem [#allocation9], %s528
        %p530 = scmp.lt.s32.totalorder %s36, 1
        %s531 = scalar_select %p530, %s36, 1
        %s532 = scalar_lea.vmem %s1, %s531
        %p534 = scmp.eq.s32.totalorder %s37, 0
        // Predicated region
        $region85: #{encoder_pallas.3} parent=75 // pred_check
          %p535 = pneg %p534
        $region86: #{encoder_pallas.3} parent=75 // pred_check_branch
          %537 = sbr.rel (%p535) target = $region88
        $region87: #{encoder_pallas.3} parent=75 // pred_region
          %v538 = vld [vmem:[%s476] sm:$0xff]
          %v539 = vld [vmem:[%s476 + $0x8] sm:$0xff]
          %v540 = vpack.c.bf16 %v539, %v538
          %v541 = vld [vmem:[%s2] sm:$0xff]
          %v542 = vld [vmem:[%s2 + $0x8] sm:$0xff]
          %v543 = vld [vmem:[%s2 + $0x10] sm:$0xff]
          %v544 = vld [vmem:[%s2 + $0x18] sm:$0xff]
          %v545 = vld [vmem:[%s2 + $0x20] sm:$0xff]
          %v546 = vld [vmem:[%s2 + $0x28] sm:$0xff]
          %v547 = vld [vmem:[%s2 + $0x30] sm:$0xff]
          %v548 = vld [vmem:[%s2 + $0x38] sm:$0xff]
          %v549 = vld [vmem:[%s3] sm:$0x3]
          %v551 = vperm.slane %v549, 0
          %v552 = vperm.slane %v549, 1
          %v561 = vunpack.c.l.b16 %v541
          %v562 = vunpack.c.h.b16 %v541
          %v563 = vunpack.c.l.b16 %v542
          %v564 = vunpack.c.h.b16 %v542
          %v565 = vunpack.c.l.b16 %v543
          %v566 = vunpack.c.h.b16 %v543
          %v567 = vunpack.c.l.b16 %v544
          %v568 = vunpack.c.h.b16 %v544
          %v569 = vunpack.c.l.b16 %v545
          %v570 = vunpack.c.h.b16 %v545
          %v571 = vunpack.c.l.b16 %v546
          %v572 = vunpack.c.h.b16 %v546
          %v573 = vunpack.c.l.b16 %v547
          %v574 = vunpack.c.h.b16 %v547
          %v575 = vunpack.c.l.b16 %v548
          %v576 = vunpack.c.h.b16 %v548
          %v577 = vpack.c.b16 %v563, %v561
          %v578 = vpack.c.b16 %v564, %v562
          %v579 = vpack.c.b16 %v567, %v565
          %v580 = vpack.c.b16 %v568, %v566
          %v581 = vpack.c.b16 %v571, %v569
          %v582 = vpack.c.b16 %v572, %v570
          %v583 = vpack.c.b16 %v575, %v573
          %v584 = vpack.c.b16 %v576, %v574
          %585 = vrot.lane.b32.xlu0 %v577, 64
          %v586 = vpop.permute.xlu0 %585
          %587 = vrot.lane.b32.xlu0 %v578, 64
          %v588 = vpop.permute.xlu0 %587
          %589 = vrot.lane.b32.xlu0 %v579, 64
          %v590 = vpop.permute.xlu0 %589
          %591 = vrot.lane.b32.xlu0 %v580, 64
          %v592 = vpop.permute.xlu0 %591
          %593 = vrot.lane.b32.xlu0 %v581, 64
          %v594 = vpop.permute.xlu0 %593
          %595 = vrot.lane.b32.xlu0 %v582, 64
          %v596 = vpop.permute.xlu0 %595
          %597 = vrot.lane.b32.xlu0 %v583, 64
          %v598 = vpop.permute.xlu0 %597
          %599 = vrot.lane.b32.xlu0 %v584, 64
          %v600 = vpop.permute.xlu0 %599
          %vm601 = vcmask 523264
          %v602 = vsel %vm601, %v586, %v588
          %v603 = vsel %vm601, %v590, %v592
          %v604 = vsel %vm601, %v594, %v596
          %v605 = vsel %vm601, %v598, %v600
          %610 = vrot.lane.b32.xlu0 %v551, 64
          %v611 = vpop.permute.xlu0 %610
          %612 = vrot.lane.b32.xlu0 %v552, 64
          %v613 = vpop.permute.xlu0 %612
          %vm614 = vcmask 523264
          %v615 = vsel %vm614, %v611, %v613
          %v618 = vsel %vm614, %v540, 0
          %620 = vmatpush.bf16.msra.mxu0 0
          %621 = vmatpush.bf16.msra.mxu0 0
          %622 = vmatpush.bf16.msra.mxu0 0
          %623 = vmatpush.bf16.msra.mxu0 0
          %624 = vmatpush.bf16.msra.mxu0 %v605
          %625 = vmatpush.bf16.msra.mxu0 %v604
          %626 = vmatpush.bf16.msra.mxu0 %v603
          %627 = vmatpush.bf16.msra.mxu0 %v602
          %628 = vmatmul.bf16.gmra.mxu0 %v618
          %v629 = vpop.f32.mrf.mxu0
          %v630 = vadd.f32 %v615, %v629
          %v631 = vpop.f32.mrf.mxu0
          %v632 = vadd.f32 %v615, %v631
          %633 = vdwg.mxu0
          %v634 = vpack.c.bf16 %v630, %v630
          %v635 = vpack.c.bf16 %v632, %v632
          %vm636 = vcmask 519168
          %637 = vst.msk [vmem:[#allocation2] sm:$0xf] %vm636, %v634
          %638 = vst.msk [vmem:[#allocation2 + $0x4] sm:$0xf] %vm636, %v635
          %641 = vrot.lane.b32.xlu0 %v634, 64
          %v642 = vpop.permute.xlu0 %641
          %643 = vrot.lane.b32.xlu0 %v635, 64
          %v644 = vpop.permute.xlu0 %643
          %647 = vst.msk [vmem:[#allocation3] sm:$0xf] %vm636, %v642
          %648 = vst.msk [vmem:[#allocation3 + $0x4] sm:$0xf] %vm636, %v644
        $region88: #{encoder_pallas.3} parent=75 // pred_fallthru
          _
        %s649 = smul.u32 %s37, 8
        %s650 = scalar_lea.vmem %s476, %s649 [#allocation4]
        %v651 = vld [vmem:[%s650] sm:$0xff]
        %v652 = vpack.c.bf16 %v651, %v651
        %v653 = vld [vmem:[%s2] sm:$0xf]
        %v654 = vld [vmem:[%s2 + $0x8] sm:$0xf]
        %v655 = vld [vmem:[%s2 + $0x10] sm:$0xf]
        %v656 = vld [vmem:[%s2 + $0x18] sm:$0xf]
        %v657 = vld [vmem:[%s2 + $0x20] sm:$0xf]
        %v658 = vld [vmem:[%s2 + $0x28] sm:$0xf]
        %v659 = vld [vmem:[%s2 + $0x30] sm:$0xf]
        %v660 = vld [vmem:[%s2 + $0x38] sm:$0xf]
        %v661 = vld [vmem:[%s3] sm:$0x1]
        %v663 = vperm.slane %v661, 0
        %v673 = vunpack.c.l.b16 %v653
        %v674 = vunpack.c.l.b16 %v654
        %v675 = vunpack.c.l.b16 %v655
        %v676 = vunpack.c.l.b16 %v656
        %v677 = vunpack.c.l.b16 %v657
        %v678 = vunpack.c.l.b16 %v658
        %v679 = vunpack.c.l.b16 %v659
        %v680 = vunpack.c.l.b16 %v660
        %v681 = vpack.c.b16 %v674, %v673
        %v682 = vpack.c.b16 %v676, %v675
        %v683 = vpack.c.b16 %v678, %v677
        %v684 = vpack.c.b16 %v680, %v679
        %vm689 = vcmask 523264
        %v691 = vsel %vm689, %v652, 0
        %693 = vmatpush.bf16.msra.mxu0 0
        %694 = vmatpush.bf16.msra.mxu0 0
        %695 = vmatpush.bf16.msra.mxu0 0
        %696 = vmatpush.bf16.msra.mxu0 0
        %697 = vmatpush.bf16.msra.mxu0 %v684
        %698 = vmatpush.bf16.msra.mxu0 %v683
        %699 = vmatpush.bf16.msra.mxu0 %v682
        %700 = vmatpush.bf16.msra.mxu0 %v681
        %701 = vmatmul.bf16.gmra.mxu0 %v691
        %v702 = vpop.f32.mrf.mxu0
        %v703 = vadd.f32 %v663, %v702
        %v704 = vpop.f32.mrf.mxu0
        %705 = vdwg.mxu0
        %v706 = vmul.f32 %v703, 0.25
        %v707 = vpack.c.bf16 %v706, %v706
        %v708 = vld [vmem:[%s532] sm:$0x1]
        %vm709 = vcmp.eq.f32.partialorder %v708, 0.0
        %v710 = vsel %vm709, -1e+09, 0.0
        %v711 = vld [vmem:[#allocation2] sm:$0xf]
        %v712 = vld [vmem:[#allocation2 + $0x4] sm:$0xf]
        %v714 = vperm.slane %v710, 0
        %v718 = vunpack.c.l.b16 %v711
        %v719 = vunpack.c.l.b16 %v712
        %v720 = vpack.c.b16 %v719, %v718
        %vm721 = vcmask 130048
        %v723 = vsel %vm721, %v707, 0
        %v726 = vsel %vm721, %v720, 0
        %728 = vmatpush.bf16.xpose.msra.mxu0 0
        %729 = vmatpush.bf16.xpose.msra.mxu0 0
        %730 = vmatpush.bf16.xpose.msra.mxu0 0
        %731 = vmatpush.bf16.xpose.msra.mxu0 0
        %732 = vmatpush.bf16.xpose.msra.mxu0 0
        %733 = vmatpush.bf16.xpose.msra.mxu0 0
        %734 = vmatpush.bf16.xpose.msra.mxu0 0
        %735 = vmatpush.bf16.xpose.msra.mxu0 %v726
        %736 = vmatmul.bf16.gmra.mxu0 %v723
        %v737 = vpop.f32.mrf.mxu0
        %v738 = vadd.f32 %v714, %v737
        %v739 = vpop.f32.mrf.mxu0
        %740 = vdwg.mxu0
        %v741 = vsel %vm721, %v738, -inf
        %742 = vmax.xlane.f32.xlu0 %v741
        %v743 = vpop.xlane.xlu0 %742
        %v744 = vsub.f32 %v738, %v743
        %v745 = vmul.f32 %v744, 1.442695
        %v746 = vpow.pop %v745
        %v747 = vsel %vm721, %v746, 0.0
        %748 = vadd.xlane.f32.xlu0 %v747
        %v749 = vpop.xlane.xlu0 %748
        %v750 = vpack.c.bf16 %v746, %v746
        %v751 = vld [vmem:[#allocation3] sm:$0xf]
        %v752 = vld [vmem:[#allocation3 + $0x4] sm:$0xf]
        %v755 = vunpack.c.l.b16 %v751
        %v756 = vunpack.c.l.b16 %v752
        %v757 = vpack.c.b16 %v756, %v755
        %v760 = vsel %vm721, %v750, 0
        %762 = vmatpush.bf16.msra.mxu0 0
        %763 = vmatpush.bf16.msra.mxu0 0
        %764 = vmatpush.bf16.msra.mxu0 0
        %765 = vmatpush.bf16.msra.mxu0 0
        %766 = vmatpush.bf16.msra.mxu0 0
        %767 = vmatpush.bf16.msra.mxu0 0
        %768 = vmatpush.bf16.msra.mxu0 0
        %769 = vmatpush.bf16.msra.mxu0 %v757
        %770 = vmatmul.bf16.gmra.mxu0 %v760
        %v771 = vpop.f32.mrf.mxu0
        %v772 = vadd.f32 0.0, %v771
        %v773 = vpop.f32.mrf.mxu0
        %774 = vdwg.mxu0
        %v775 = vrcp.pop %v749
        %v776 = vmul.f32 %v772, %v775
        %v777 = vpack.c.bf16 %v776, %v776
        %v778 = vld [vmem:[%s4] sm:$0xf]
        %v779 = vld [vmem:[%s4 + $0x4] sm:$0xf]
        %v781 = vunpack.c.l.b16 %v707
        %v782 = vpack.c.b16 %v781, %v781
        %783 = vrot.lane.b32.xlu0 %v782, 112
        %v784 = vpop.permute.xlu0 %783
        %785 = vrot.lane.b32.xlu0 %v720, 112
        %v786 = vpop.permute.xlu0 %785
        %v788 = vsel %vm721, %v784, 0
        %v791 = vsel %vm721, %v786, 0
        %793 = vmatpush.bf16.xpose.msra.mxu0 0
        %794 = vmatpush.bf16.xpose.msra.mxu0 0
        %795 = vmatpush.bf16.xpose.msra.mxu0 0
        %796 = vmatpush.bf16.xpose.msra.mxu0 0
        %797 = vmatpush.bf16.xpose.msra.mxu0 0
        %798 = vmatpush.bf16.xpose.msra.mxu0 0
        %799 = vmatpush.bf16.xpose.msra.mxu0 0
        %800 = vmatpush.bf16.xpose.msra.mxu0 %v791
        %801 = vmatmul.bf16.gmra.mxu0 %v788
        %v802 = vpop.f32.mrf.mxu0
        %v803 = vadd.f32 %v714, %v802
        %v804 = vpop.f32.mrf.mxu0
        %805 = vdwg.mxu0
        %v806 = vsel %vm721, %v803, -inf
        %807 = vmax.xlane.f32.xlu0 %v806
        %v808 = vpop.xlane.xlu0 %807
        %v809 = vsub.f32 %v803, %v808
        %v810 = vmul.f32 %v809, 1.442695
        %v811 = vpow.pop %v810
        %v812 = vsel %vm721, %v811, 0.0
        %813 = vadd.xlane.f32.xlu0 %v812
        %v814 = vpop.xlane.xlu0 %813
        %v815 = vpack.c.bf16 %v811, %v811
        %816 = vrot.lane.b32.xlu0 %v757, 112
        %v817 = vpop.permute.xlu0 %816
        %v820 = vsel %vm721, %v815, 0
        %822 = vmatpush.bf16.msra.mxu0 0
        %823 = vmatpush.bf16.msra.mxu0 0
        %824 = vmatpush.bf16.msra.mxu0 0
        %825 = vmatpush.bf16.msra.mxu0 0
        %826 = vmatpush.bf16.msra.mxu0 0
        %827 = vmatpush.bf16.msra.mxu0 0
        %828 = vmatpush.bf16.msra.mxu0 0
        %829 = vmatpush.bf16.msra.mxu0 %v817
        %830 = vmatmul.bf16.gmra.mxu0 %v820
        %v831 = vpop.f32.mrf.mxu0
        %v832 = vadd.f32 0.0, %v831
        %v833 = vpop.f32.mrf.mxu0
        %834 = vdwg.mxu0
        %v835 = vrcp.pop %v814
        %v836 = vmul.f32 %v832, %v835
        %v837 = vpack.c.bf16 %v836, %v836
        %v838 = vld [vmem:[%s4 + $0x8] sm:$0xf]
        %v839 = vld [vmem:[%s4 + $0xc] sm:$0xf]
        %v842 = vunpack.c.l.b16 %v838
        %v843 = vunpack.c.l.b16 %v839
        %v844 = vpack.c.b16 %v843, %v842
        %v847 = vsel %vm721, %v837, 0
        %849 = vmatpush.bf16.msra.mxu0 0
        %850 = vmatpush.bf16.msra.mxu0 0
        %851 = vmatpush.bf16.msra.mxu0 0
        %852 = vmatpush.bf16.msra.mxu0 0
        %853 = vmatpush.bf16.msra.mxu0 0
        %854 = vmatpush.bf16.msra.mxu0 0
        %855 = vmatpush.bf16.msra.mxu0 0
        %856 = vmatpush.bf16.msra.mxu0 %v844
        %857 = vmatmul.bf16.gmra.mxu0 %v847
        %v858 = vpop.f32.mrf.mxu0
        %v859 = vadd.f32 0.0, %v858
        %v860 = vpop.f32.mrf.mxu0
        %861 = vdwg.mxu0
        %v864 = vunpack.c.l.b16 %v778
        %v865 = vunpack.c.l.b16 %v779
        %v866 = vpack.c.b16 %v865, %v864
        %v869 = vsel %vm721, %v777, 0
        %871 = vmatpush.bf16.msra.mxu0 0
        %872 = vmatpush.bf16.msra.mxu0 0
        %873 = vmatpush.bf16.msra.mxu0 0
        %874 = vmatpush.bf16.msra.mxu0 0
        %875 = vmatpush.bf16.msra.mxu0 0
        %876 = vmatpush.bf16.msra.mxu0 0
        %877 = vmatpush.bf16.msra.mxu0 0
        %878 = vmatpush.bf16.msra.mxu0 %v866
        %879 = vmatmul.bf16.gmra.mxu0 %v869
        %v880 = vpop.f32.mrf.mxu0
        %v881 = vadd.f32 %v859, %v880
        %v882 = vpop.f32.mrf.mxu0
        %883 = vdwg.mxu0
        %884 = vrot.lane.b32.xlu0 %v782, 96
        %v885 = vpop.permute.xlu0 %884
        %886 = vrot.lane.b32.xlu0 %v720, 96
        %v887 = vpop.permute.xlu0 %886
        %v889 = vsel %vm721, %v885, 0
        %v892 = vsel %vm721, %v887, 0
        %894 = vmatpush.bf16.xpose.msra.mxu0 0
        %895 = vmatpush.bf16.xpose.msra.mxu0 0
        %896 = vmatpush.bf16.xpose.msra.mxu0 0
        %897 = vmatpush.bf16.xpose.msra.mxu0 0
        %898 = vmatpush.bf16.xpose.msra.mxu0 0
        %899 = vmatpush.bf16.xpose.msra.mxu0 0
        %900 = vmatpush.bf16.xpose.msra.mxu0 0
        %901 = vmatpush.bf16.xpose.msra.mxu0 %v892
        %902 = vmatmul.bf16.gmra.mxu0 %v889
        %v903 = vpop.f32.mrf.mxu0
        %v904 = vadd.f32 %v714, %v903
        %v905 = vpop.f32.mrf.mxu0
        %906 = vdwg.mxu0
        %v907 = vsel %vm721, %v904, -inf
        %908 = vmax.xlane.f32.xlu0 %v907
        %v909 = vpop.xlane.xlu0 %908
        %v910 = vsub.f32 %v904, %v909
        %v911 = vmul.f32 %v910, 1.442695
        %v912 = vpow.pop %v911
        %v913 = vsel %vm721, %v912, 0.0
        %914 = vadd.xlane.f32.xlu0 %v913
        %v915 = vpop.xlane.xlu0 %914
        %v916 = vpack.c.bf16 %v912, %v912
        %917 = vrot.lane.b32.xlu0 %v757, 96
        %v918 = vpop.permute.xlu0 %917
        %v921 = vsel %vm721, %v916, 0
        %923 = vmatpush.bf16.msra.mxu0 0
        %924 = vmatpush.bf16.msra.mxu0 0
        %925 = vmatpush.bf16.msra.mxu0 0
        %926 = vmatpush.bf16.msra.mxu0 0
        %927 = vmatpush.bf16.msra.mxu0 0
        %928 = vmatpush.bf16.msra.mxu0 0
        %929 = vmatpush.bf16.msra.mxu0 0
        %930 = vmatpush.bf16.msra.mxu0 %v918
        %931 = vmatmul.bf16.gmra.mxu0 %v921
        %v932 = vpop.f32.mrf.mxu0
        %v933 = vadd.f32 0.0, %v932
        %v934 = vpop.f32.mrf.mxu0
        %935 = vdwg.mxu0
        %v936 = vrcp.pop %v915
        %v937 = vmul.f32 %v933, %v936
        %v938 = vpack.c.bf16 %v937, %v937
        %v939 = vld [vmem:[%s4 + $0x10] sm:$0xf]
        %v940 = vld [vmem:[%s4 + $0x14] sm:$0xf]
        %v943 = vunpack.c.l.b16 %v939
        %v944 = vunpack.c.l.b16 %v940
        %v945 = vpack.c.b16 %v944, %v943
        %v948 = vsel %vm721, %v938, 0
        %950 = vmatpush.bf16.msra.mxu0 0
        %951 = vmatpush.bf16.msra.mxu0 0
        %952 = vmatpush.bf16.msra.mxu0 0
        %953 = vmatpush.bf16.msra.mxu0 0
        %954 = vmatpush.bf16.msra.mxu0 0
        %955 = vmatpush.bf16.msra.mxu0 0
        %956 = vmatpush.bf16.msra.mxu0 0
        %957 = vmatpush.bf16.msra.mxu0 %v945
        %958 = vmatmul.bf16.gmra.mxu0 %v948
        %v959 = vpop.f32.mrf.mxu0
        %v960 = vadd.f32 0.0, %v959
        %v961 = vpop.f32.mrf.mxu0
        %962 = vdwg.mxu0
        %v963 = vadd.f32 %v881, %v960
        %964 = vrot.lane.b32.xlu0 %v782, 80
        %v965 = vpop.permute.xlu0 %964
        %966 = vrot.lane.b32.xlu0 %v720, 80
        %v967 = vpop.permute.xlu0 %966
        %v969 = vsel %vm721, %v965, 0
        %v972 = vsel %vm721, %v967, 0
        %974 = vmatpush.bf16.xpose.msra.mxu0 0
        %975 = vmatpush.bf16.xpose.msra.mxu0 0
        %976 = vmatpush.bf16.xpose.msra.mxu0 0
        %977 = vmatpush.bf16.xpose.msra.mxu0 0
        %978 = vmatpush.bf16.xpose.msra.mxu0 0
        %979 = vmatpush.bf16.xpose.msra.mxu0 0
        %980 = vmatpush.bf16.xpose.msra.mxu0 0
        %981 = vmatpush.bf16.xpose.msra.mxu0 %v972
        %982 = vmatmul.bf16.gmra.mxu0 %v969
        %v983 = vpop.f32.mrf.mxu0
        %v984 = vadd.f32 %v714, %v983
        %v985 = vpop.f32.mrf.mxu0
        %986 = vdwg.mxu0
        %v987 = vsel %vm721, %v984, -inf
        %988 = vmax.xlane.f32.xlu0 %v987
        %v989 = vpop.xlane.xlu0 %988
        %v990 = vsub.f32 %v984, %v989
        %v991 = vmul.f32 %v990, 1.442695
        %v992 = vpow.pop %v991
        %v993 = vsel %vm721, %v992, 0.0
        %994 = vadd.xlane.f32.xlu0 %v993
        %v995 = vpop.xlane.xlu0 %994
        %v996 = vpack.c.bf16 %v992, %v992
        %997 = vrot.lane.b32.xlu0 %v757, 80
        %v998 = vpop.permute.xlu0 %997
        %v1001 = vsel %vm721, %v996, 0
        %1003 = vmatpush.bf16.msra.mxu0 0
        %1004 = vmatpush.bf16.msra.mxu0 0
        %1005 = vmatpush.bf16.msra.mxu0 0
        %1006 = vmatpush.bf16.msra.mxu0 0
        %1007 = vmatpush.bf16.msra.mxu0 0
        %1008 = vmatpush.bf16.msra.mxu0 0
        %1009 = vmatpush.bf16.msra.mxu0 0
        %1010 = vmatpush.bf16.msra.mxu0 %v998
        %1011 = vmatmul.bf16.gmra.mxu0 %v1001
        %v1012 = vpop.f32.mrf.mxu0
        %v1013 = vadd.f32 0.0, %v1012
        %v1014 = vpop.f32.mrf.mxu0
        %1015 = vdwg.mxu0
        %v1016 = vrcp.pop %v995
        %v1017 = vmul.f32 %v1013, %v1016
        %v1018 = vpack.c.bf16 %v1017, %v1017
        %v1019 = vld [vmem:[%s4 + $0x18] sm:$0xf]
        %v1020 = vld [vmem:[%s4 + $0x1c] sm:$0xf]
        %v1023 = vunpack.c.l.b16 %v1019
        %v1024 = vunpack.c.l.b16 %v1020
        %v1025 = vpack.c.b16 %v1024, %v1023
        %v1028 = vsel %vm721, %v1018, 0
        %1030 = vmatpush.bf16.msra.mxu0 0
        %1031 = vmatpush.bf16.msra.mxu0 0
        %1032 = vmatpush.bf16.msra.mxu0 0
        %1033 = vmatpush.bf16.msra.mxu0 0
        %1034 = vmatpush.bf16.msra.mxu0 0
        %1035 = vmatpush.bf16.msra.mxu0 0
        %1036 = vmatpush.bf16.msra.mxu0 0
        %1037 = vmatpush.bf16.msra.mxu0 %v1025
        %1038 = vmatmul.bf16.gmra.mxu0 %v1028
        %v1039 = vpop.f32.mrf.mxu0
        %v1040 = vadd.f32 0.0, %v1039
        %v1041 = vpop.f32.mrf.mxu0
        %1042 = vdwg.mxu0
        %v1043 = vadd.f32 %v963, %v1040
        %v1044 = vld [vmem:[%s5] sm:$0x1]
        %v1046 = vperm.slane %v1044, 0
        %v1048 = vadd.f32 %v1043, %v1046
        %v1049 = vadd.f32 %v1048, %v651
        %v1050 = vld [vmem:[%s6] sm:$0x1]
        %v1051 = vld [vmem:[%s7] sm:$0x1]
        %v1052 = vsel %vm689, %v1049, 0.0
        %1053 = vadd.xlane.f32.xlu0 %v1052
        %v1054 = vpop.xlane.xlu0 %1053
        %v1055 = vrcp.pop 64.0
        %v1056 = vmul.f32 64.0, %v1055
        %v1057 = vsub.f32 1.0, %v1056
        %v1058 = vmul.f32 %v1055, %v1057
        %v1059 = vadd.f32 %v1055, %v1058
        %vm1060 = vweird.f32 %v1055
        %v1061 = vsel %vm1060, %v1055, %v1059
        %v1062 = vmul.f32 %v1054, %v1061
        %v1063 = vsub.f32 %v1049, %v1062
        %v1064 = vmul.f32 %v1063, %v1063
        %v1065 = vsel %vm689, %v1064, 0.0
        %1066 = vadd.xlane.f32.xlu0 %v1065
        %v1067 = vpop.xlane.xlu0 %1066
        %v1068 = vmul.f32 %v1067, %v1061
        %v1069 = vadd.f32 %v1068, 1e-05
        %v1070 = vrsqrt.pop %v1069
        %v1071 = vmul.f32 %v1070, %v1069
        %v1072 = vmul.f32 %v1071, %v1070
        %v1073 = vmul.f32 0.5, %v1072
        %v1074 = vsub.f32 1.5, %v1073
        %v1075 = vmul.f32 %v1070, %v1074
        %vm1076 = vweird.f32 %v1069
        %vm1077 = vweird.f32 %v1070
        %vm1078 = vmor %vm1076, %vm1077
        %v1079 = vsel %vm1078, %v1070, %v1075
        %v1080 = vmul.f32 %v1063, %v1079
        %v1082 = vperm.slane %v1050, 0
        %v1084 = vmul.f32 %v1080, %v1082
        %v1086 = vperm.slane %v1051, 0
        %v1088 = vadd.f32 %v1084, %v1086
        %v1089 = vpack.c.bf16 %v1088, %v1088
        %v1090 = vld [vmem:[#allocation7] sm:$0xf]
        %v1091 = vld [vmem:[#allocation7 + $0x4] sm:$0xf]
        %v1092 = vld [vmem:[#allocation7 + $0x8] sm:$0xf]
        %v1093 = vld [vmem:[#allocation7 + $0xc] sm:$0xf]
        %v1094 = vld [vmem:[#allocation7 + $0x10] sm:$0xf]
        %v1095 = vld [vmem:[#allocation7 + $0x14] sm:$0xf]
        %v1096 = vld [vmem:[#allocation7 + $0x18] sm:$0xf]
        %v1097 = vld [vmem:[#allocation7 + $0x1c] sm:$0xf]
        %v1098 = vld [vmem:[%s9] sm:$0x1]
        %v1100 = vperm.slane %v1098, 0
        %v1110 = vunpack.c.l.b16 %v1090
        %v1111 = vunpack.c.l.b16 %v1091
        %v1112 = vunpack.c.l.b16 %v1092
        %v1113 = vunpack.c.l.b16 %v1093
        %v1114 = vunpack.c.l.b16 %v1094
        %v1115 = vunpack.c.l.b16 %v1095
        %v1116 = vunpack.c.l.b16 %v1096
        %v1117 = vunpack.c.l.b16 %v1097
        %v1118 = vpack.c.b16 %v1111, %v1110
        %v1119 = vpack.c.b16 %v1113, %v1112
        %v1120 = vpack.c.b16 %v1115, %v1114
        %v1121 = vpack.c.b16 %v1117, %v1116
        %v1127 = vsel %vm689, %v1089, 0
        %1129 = vmatpush.bf16.msra.mxu0 0
        %1130 = vmatpush.bf16.msra.mxu0 0
        %1131 = vmatpush.bf16.msra.mxu0 0
        %1132 = vmatpush.bf16.msra.mxu0 0
        %1133 = vmatpush.bf16.msra.mxu0 %v1121
        %1134 = vmatpush.bf16.msra.mxu0 %v1120
        %1135 = vmatpush.bf16.msra.mxu0 %v1119
        %1136 = vmatpush.bf16.msra.mxu0 %v1118
        %1137 = vmatmul.bf16.gmra.mxu0 %v1127
        %v1138 = vpop.f32.mrf.mxu0
        %v1139 = vadd.f32 %v1100, %v1138
        %v1140 = vpop.f32.mrf.mxu0
        %1141 = vdwg.mxu0
        %v1142 = vmax.f32 %v1139, 0.0
        %v1143 = vpack.c.bf16 %v1142, %v1142
        %v1144 = vld [vmem:[%s10] sm:$0xf]
        %v1145 = vld [vmem:[%s10 + $0x4] sm:$0xf]
        %v1146 = vld [vmem:[%s10 + $0x8] sm:$0xf]
        %v1147 = vld [vmem:[%s10 + $0xc] sm:$0xf]
        %v1148 = vld [vmem:[%s10 + $0x10] sm:$0xf]
        %v1149 = vld [vmem:[%s10 + $0x14] sm:$0xf]
        %v1150 = vld [vmem:[%s10 + $0x18] sm:$0xf]
        %v1151 = vld [vmem:[%s10 + $0x1c] sm:$0xf]
        %v1152 = vld [vmem:[%s10 + $0x20] sm:$0xf]
        %v1153 = vld [vmem:[%s10 + $0x24] sm:$0xf]
        %v1154 = vld [vmem:[%s10 + $0x28] sm:$0xf]
        %v1155 = vld [vmem:[%s10 + $0x2c] sm:$0xf]
        %v1156 = vld [vmem:[%s10 + $0x30] sm:$0xf]
        %v1157 = vld [vmem:[%s10 + $0x34] sm:$0xf]
        %v1158 = vld [vmem:[%s10 + $0x38] sm:$0xf]
        %v1159 = vld [vmem:[%s10 + $0x3c] sm:$0xf]
        %v1160 = vld [vmem:[%s11] sm:$0x1]
        %v1162 = vperm.slane %v1160, 0
        %v1180 = vunpack.c.l.b16 %v1144
        %v1181 = vunpack.c.l.b16 %v1145
        %v1182 = vunpack.c.l.b16 %v1146
        %v1183 = vunpack.c.l.b16 %v1147
        %v1184 = vunpack.c.l.b16 %v1148
        %v1185 = vunpack.c.l.b16 %v1149
        %v1186 = vunpack.c.l.b16 %v1150
        %v1187 = vunpack.c.l.b16 %v1151
        %v1188 = vunpack.c.l.b16 %v1152
        %v1189 = vunpack.c.l.b16 %v1153
        %v1190 = vunpack.c.l.b16 %v1154
        %v1191 = vunpack.c.l.b16 %v1155
        %v1192 = vunpack.c.l.b16 %v1156
        %v1193 = vunpack.c.l.b16 %v1157
        %v1194 = vunpack.c.l.b16 %v1158
        %v1195 = vunpack.c.l.b16 %v1159
        %v1196 = vpack.c.b16 %v1181, %v1180
        %v1197 = vpack.c.b16 %v1183, %v1182
        %v1198 = vpack.c.b16 %v1185, %v1184
        %v1199 = vpack.c.b16 %v1187, %v1186
        %v1200 = vpack.c.b16 %v1189, %v1188
        %v1201 = vpack.c.b16 %v1191, %v1190
        %v1202 = vpack.c.b16 %v1193, %v1192
        %v1203 = vpack.c.b16 %v1195, %v1194
        %1212 = vmatpush.bf16.msra.mxu0 %v1203
        %1213 = vmatpush.bf16.msra.mxu0 %v1202
        %1214 = vmatpush.bf16.msra.mxu0 %v1201
        %1215 = vmatpush.bf16.msra.mxu0 %v1200
        %1216 = vmatpush.bf16.msra.mxu0 %v1199
        %1217 = vmatpush.bf16.msra.mxu0 %v1198
        %1218 = vmatpush.bf16.msra.mxu0 %v1197
        %1219 = vmatpush.bf16.msra.mxu0 %v1196
        %1220 = vmatmul.bf16.gmra.mxu0 %v1143
        %v1221 = vpop.f32.mrf.mxu0
        %v1222 = vadd.f32 %v1162, %v1221
        %v1223 = vpop.f32.mrf.mxu0
        %1224 = vdwg.mxu0
        %v1225 = vadd.f32 %v1222, %v1088
        %v1226 = vld [vmem:[%s12] sm:$0x1]
        %v1227 = vld [vmem:[%s13] sm:$0x1]
        %v1228 = vsel %vm689, %v1225, 0.0
        %1229 = vadd.xlane.f32.xlu0 %v1228
        %v1230 = vpop.xlane.xlu0 %1229
        %v1231 = vmul.f32 %v1230, %v1061
        %v1232 = vsub.f32 %v1225, %v1231
        %v1233 = vmul.f32 %v1232, %v1232
        %v1234 = vsel %vm689, %v1233, 0.0
        %1235 = vadd.xlane.f32.xlu0 %v1234
        %v1236 = vpop.xlane.xlu0 %1235
        %v1237 = vmul.f32 %v1236, %v1061
        %v1238 = vadd.f32 %v1237, 1e-05
        %v1239 = vrsqrt.pop %v1238
        %v1240 = vmul.f32 %v1239, %v1238
        %v1241 = vmul.f32 %v1240, %v1239
        %v1242 = vmul.f32 0.5, %v1241
        %v1243 = vsub.f32 1.5, %v1242
        %v1244 = vmul.f32 %v1239, %v1243
        %vm1245 = vweird.f32 %v1238
        %vm1246 = vweird.f32 %v1239
        %vm1247 = vmor %vm1245, %vm1246
        %v1248 = vsel %vm1247, %v1239, %v1244
        %v1249 = vmul.f32 %v1232, %v1248
        %v1251 = vperm.slane %v1226, 0
        %v1253 = vmul.f32 %v1249, %v1251
        %v1255 = vperm.slane %v1227, 0
        %v1257 = vadd.f32 %v1253, %v1255
        %1258 = vst.msk [vmem:[%s529] sm:$0xff] %vm689, %v1257
        %s1259 = sand.u32 %s358, 1
        %s1260 = scalar_lea.sflag [#allocation6], %s1259
        %s1261 = sand.u32 %s358, 1
        %s1262 = smul.addr %s1261, 8
        %s1263 = scalar_lea.vmem [#allocation9], %s1262
        // Predicated region
        $region89: #{encoder_pallas.3} parent=75 // pred_check
          %p1264 = pneg %p368
        $region90: #{encoder_pallas.3} parent=75 // pred_check_branch
          %1266 = sbr.rel (%p1264) target = $region92
        $region91: #{encoder_pallas.3} parent=75 // pred_region
          %1268 = vsyncadd %s1260, 0
          %s1269 = smul.addr %s36, 2
          %s1270 = sadd.s32 %s37, %s1269
          %s1271 = smul.addr %s1270, 8
          %s1272 = scalar_lea.hbm %s14, %s1271
          %s1274 = sshll.u32 %s1263, 4
          %s1275 = int_to_ptr.vmem [resolvable:$true] %s1274
          %s1276 = sshll.u32 %s1272, 4
          %s1277 = int_to_ptr.hbm [resolvable:$true] %s1276
          %1279 = dma.vmem_to_hbm [thread:$0]  %s1275, 128, %s1277, %s1260
        $region92: #{encoder_pallas.3} parent=75 // pred_fallthru
          _
      $region76: #{encoder_pallas.3} parent=5 // pred_fallthru
        _
      %p1280 = scmp.le.s32.totalorder 2, %s27
      // Predicated region
      $region93: #{encoder_pallas.3} parent=5 // pred_check
        %p1281 = pneg %p1280
      $region94: #{encoder_pallas.3} parent=5 // pred_check_branch
        %1283 = sbr.rel (%p1281) target = $region96
      $region95: #{encoder_pallas.3} parent=5 // pred_region
        %s1284 = ssub.s32 %s27, 2
        // Predicated region
        $region97: #{encoder_pallas.3} parent=95 // pred_check
          %p1285 = pneg %p374
        $region98: #{encoder_pallas.3} parent=95 // pred_check_branch
          %1287 = sbr.rel (%p1285) target = $region100
        $region99: #{encoder_pallas.3} parent=95 // pred_region
          %s1288 = sand.u32 %s359, 1
          %s1289 = scalar_lea.sflag [#allocation6], %s1288
          %s1290 = sand.u32 %s359, 1
          %s1291 = smul.addr %s1290, 8
          %s1292 = scalar_lea.vmem [#allocation9], %s1291
          %1294 = dma.done %s1289, 128
        $region100: #{encoder_pallas.3} parent=95 // pred_fallthru
          _
      $region96: #{encoder_pallas.3} parent=5 // pred_fallthru
        _
    $region6: #{encoder_pallas.3} parent=1 // loop_footer
      %s31 = sadd.s32 1, %s27
    $region7: #{encoder_pallas.3} parent=1 // loop_footer_branch
      %26 = sbr.rel target = $region3
    $region8: #{encoder_pallas.3} parent=1 // loop_exit
      _
    %1295 = vsyncpa [#allocation5], 1
    %s1296 = scalar_lea.sflag [#allocation5], 1
    %1297 = vsyncpa %s1296, 1
    %1298 = vsyncpa [#allocation8], 1
    %1299 = vsyncpa [#allocation6], 1
    %s1300 = scalar_lea.sflag [#allocation6], 1
    %1301 = vsyncpa %s1300, 1

// kernel: encoder_pallas.2
$region0: #{encoder_pallas.2}
  #allocation0 [shape = 'u32[]', space=smem, size = 0x4, offset = 0x4, fixed_abs, tag = 'smem constant byte address 0x4 - core index']
  #allocation1 [shape = 'u32[72,128]{1,0:T(1,128)}', space=vmem, size = 0x9000, scoped, tag = 'internal scratch']
  #allocation2 [shape = 'bf16[16,64]{1,0:T(8,128)(2,1)}', space=vmem, size = 0x1000, scoped, tag = 'scratch operand']
  #allocation3 [shape = 'bf16[16,64]{1,0:T(8,128)(2,1)}', space=vmem, size = 0x1000, scoped, tag = 'scratch operand']
  %s0 = inlined_call_operand.vmem [shape: f32[2,16,64], index: 0, kind: input, shape index: {}, may-alias: {0,14}]
  %s1 = inlined_call_operand.vmem [shape: f32[2,1,16], index: 1, kind: input, shape index: {}]
  %s2 = inlined_call_operand.vmem [shape: bf16[64,192], index: 2, kind: input, shape index: {}]
  %s3 = inlined_call_operand.vmem [shape: f32[1,192], index: 3, kind: input, shape index: {}]
  %s4 = inlined_call_operand.hbm [shape: bf16[64,64], index: 4, kind: input, shape index: {}]
  %s5 = inlined_call_operand.hbm [shape: f32[1,64], index: 5, kind: input, shape index: {}]
  %s6 = inlined_call_operand.hbm [shape: f32[1,64], index: 6, kind: input, shape index: {}]
  %s7 = inlined_call_operand.hbm [shape: f32[1,64], index: 7, kind: input, shape index: {}]
  %s8 = inlined_call_operand.hbm [shape: bf16[64,128], index: 8, kind: input, shape index: {}]
  %s9 = inlined_call_operand.hbm [shape: f32[1,128], index: 9, kind: input, shape index: {}]
  %s10 = inlined_call_operand.vmem [shape: bf16[128,64], index: 10, kind: input, shape index: {}]
  %s11 = inlined_call_operand.hbm [shape: f32[1,64], index: 11, kind: input, shape index: {}]
  %s12 = inlined_call_operand.vmem [shape: f32[1,64], index: 12, kind: input, shape index: {}]
  %s13 = inlined_call_operand.hbm [shape: f32[1,64], index: 13, kind: input, shape index: {}]
  %s14 = inlined_call_operand.vmem [shape: f32[2,16,64], index: 14, kind: output, shape index: {}, may-alias: {0,14}]
  %s15 = sld [smem:[#allocation0]]
  $region125: #{encoder_pallas.2} parent=0
    _
  %s17 = ssub.s32 1, %s15
  %s18 = scalar_select 0, %s17, %s15
  $region1: #{encoder_pallas.2} parent=0
    #allocation4 [shape = 'u8[16384]{0}', space=vmem, size = 0x4000, scoped, tag = 'input window, operand 4, single buffered']
    #allocation5 [shape = 's32[2]{0}', space=sflag, size = 0x8, scoped, tag = 'scoped memory for encoder_pallas.2']
    #allocation6 [shape = 'u8[512]{0}', space=vmem, size = 0x400, scoped, tag = 'input window, operand 5, single buffered']
    #allocation7 [shape = 's32[1]{0}', space=sflag, size = 0x4, scoped, tag = 'scoped memory for encoder_pallas.2']
    #allocation8 [shape = 'u8[512]{0}', space=vmem, size = 0x400, scoped, tag = 'input window, operand 6, single buffered']
    #allocation9 [shape = 'u8[512]{0}', space=vmem, size = 0x400, scoped, tag = 'input window, operand 7, single buffered']
    #allocation10 [shape = 's32[1]{0}', space=sflag, size = 0x4, scoped, tag = 'scoped memory for encoder_pallas.2']
    #allocation11 [shape = 'u8[16384]{0}', space=vmem, size = 0x4000, scoped, tag = 'input window, operand 8, single buffered']
    #allocation12 [shape = 'u8[512]{0}', space=vmem, size = 0x400, scoped, tag = 'input window, operand 9, single buffered']
    #allocation13 [shape = 's32[1]{0}', space=sflag, size = 0x4, scoped, tag = 'scoped memory for encoder_pallas.2']
    #allocation14 [shape = 'u8[512]{0}', space=vmem, size = 0x400, scoped, tag = 'input window, operand 11, single buffered']
    #allocation15 [shape = 'u8[512]{0}', space=vmem, size = 0x400, scoped, tag = 'input window, operand 13, single buffered']
    #allocation16 [shape = 's32[1]{0}', space=sflag, size = 0x4, scoped, tag = 'scoped memory for encoder_pallas.2']
    %19 = vsyncpa [#allocation5], 0
    %20 = vsyncpa [#allocation7], 0
    %21 = vsyncpa [#allocation10], 0
    %22 = vsyncpa [#allocation13], 0
    %23 = vsyncpa [#allocation16], 0
    loop: start=0, step=1, limit=6
    $region2: #{encoder_pallas.2} parent=1 // loop_pre_header
      _
    $region3: #{encoder_pallas.2} parent=1 // loop_header
      %s25 = sphi 0, %s29
      %p26 = scmp.ge.s32.totalorder %s25, 6
      %s32 = sphi 0, %s44
      %s33 = sphi 0, %s40
      %s34 = sphi 0, %s32
      %s35 = sphi 0, %s33
      %s36 = sphi 0, %s34
      %s37 = sphi 0, %s35
      %s47 = sphi 0, %s49
      %s50 = sphi 0, %s47
      %s51 = sphi 0, %s50
      %s67 = sphi 0, %s51
      %s73 = sphi 0, %s75
      %s76 = sphi 0, %s73
      %s77 = sphi 0, %s76
      %s93 = sphi 0, %s77
      %s97 = sphi 0, %s97
      %s99 = sphi 0, %s97
      %s100 = sphi 0, %s99
      %s114 = sphi 0, %s100
      %s118 = sphi 0, %s118
      %s120 = sphi 0, %s118
      %s121 = sphi 0, %s120
      %s135 = sphi 0, %s121
      %s139 = sphi 0, %s139
      %s141 = sphi 0, %s139
      %s142 = sphi 0, %s141
      %s156 = sphi 0, %s142
      %s160 = sphi 0, %s160
      %s162 = sphi 0, %s160
      %s163 = sphi 0, %s162
      %s177 = sphi 0, %s163
      %s181 = sphi 0, %s181
      %s183 = sphi 0, %s181
      %s184 = sphi 0, %s183
      %s198 = sphi 0, %s184
      %s202 = sphi 0, %s202
      %s204 = sphi 0, %s202
      %s205 = sphi 0, %s204
      %s219 = sphi 0, %s205
      %s223 = sphi 0, %s223
      %s225 = sphi 0, %s223
      %s226 = sphi 0, %s225
      %s240 = sphi 0, %s226
      %s244 = sphi 0, %s244
      %s246 = sphi 0, %s244
      %s247 = sphi 0, %s246
      %s261 = sphi 0, %s247
      %s265 = sphi 0, %s265
      %s267 = sphi 0, %s265
      %s268 = sphi 0, %s267
      %s282 = sphi 0, %s268
      %s286 = sphi 0, %s286
      %s288 = sphi 0, %s286
      %s289 = sphi 0, %s288
      %s303 = sphi 0, %s289
      %s307 = sphi 0, %s307
      %s309 = sphi 0, %s307
      %s310 = sphi 0, %s309
      %s324 = sphi 0, %s310
      %s328 = sphi 0, %s328
      %s330 = sphi 0, %s328
      %s331 = sphi 0, %s330
      %s345 = sphi 0, %s331
      %s353 = sphi 0, %s355
      %s356 = sphi 0, %s353
      %s357 = sphi 0, %s356
      %s373 = sphi 0, %s357
    $region4: #{encoder_pallas.2} parent=1 // loop_header_branch
      %28 = sbr.rel (%p26) target = $region8
    $region5: #{encoder_pallas.2} parent=1 // loop_body
      %s30 = ssub.s32 %s25, 1
      %s31 = ssub.s32 %s25, 2
      %s38 = sadd.s32 1, %s33
      %p39 = scmp.ge.s32.totalorder %s38, 2
      %s40 = scalar_select %p39, 0, %s38
      %s41 = sadd.s32 1, %s32
      %s42 = scalar_select %p39, %s41, %s32
      %p43 = scmp.ge.s32.totalorder %s42, 2
      %s44 = scalar_select %p43, 0, %s42
      %s45 = ssub.s32 %s32, %s44
      %p46 = scmp.eq.s32.totalorder %s45, 0
      %s48 = sadd.s32 %s47, 1
      %s49 = scalar_select %p46, %s47, %s48
      %p52 = pneg %p46
      %p53 = scmp.eq.s32.totalorder %s25, 3
      %p54 = por %p52, %p53
      %p55 = scmp.ne.s32.totalorder %s47, %s50
      %p56 = scmp.eq.s32.totalorder %s25, 0
      %p57 = por %p55, %p56
      %p58 = scmp.ne.s32.totalorder %s47, %s50
      %p59 = scmp.eq.s32.totalorder %s30, 3
      %p60 = por %p58, %p59
      %p61 = scmp.ne.s32.totalorder %s50, %s51
      %p62 = scmp.eq.s32.totalorder %s30, 0
      %p63 = por %p61, %p62
      %p64 = scmp.ne.s32.totalorder %s50, %s51
      %p65 = scmp.eq.s32.totalorder %s31, 3
      %p66 = por %p64, %p65
      %p68 = scmp.ne.s32.totalorder %s51, %s67
      %p69 = scmp.eq.s32.totalorder %s31, 0
      %p70 = por %p68, %p69
      %s71 = ssub.s32 %s32, %s44
      %p72 = scmp.eq.s32.totalorder %s71, 0
      %s74 = sadd.s32 %s73, 1
      %s75 = scalar_select %p72, %s73, %s74
      %p78 = pneg %p72
      %p79 = scmp.eq.s32.totalorder %s25, 3
      %p80 = por %p78, %p79
      %p81 = scmp.ne.s32.totalorder %s73, %s76
      %p82 = scmp.eq.s32.totalorder %s25, 0
      %p83 = por %p81, %p82
      %p84 = scmp.ne.s32.totalorder %s73, %s76
      %p85 = scmp.eq.s32.totalorder %s30, 3
      %p86 = por %p84, %p85
      %p87 = scmp.ne.s32.totalorder %s76, %s77
      %p88 = scmp.eq.s32.totalorder %s30, 0
      %p89 = por %p87, %p88
      %p90 = scmp.ne.s32.totalorder %s76, %s77
      %p91 = scmp.eq.s32.totalorder %s31, 3
      %p92 = por %p90, %p91
      %p94 = scmp.ne.s32.totalorder %s77, %s93
      %p95 = scmp.eq.s32.totalorder %s31, 0
      %p96 = por %p94, %p95
      %s98 = sadd.s32 %s97, 1
      %p101 = scmp.eq.s32.totalorder %s25, 3
      %p102 = scmp.ne.s32.totalorder %s97, %s99
      %p103 = scmp.eq.s32.totalorder %s25, 0
      %p104 = por %p102, %p103
      %p105 = scmp.ne.s32.totalorder %s97, %s99
      %p106 = scmp.eq.s32.totalorder %s30, 3
      %p107 = por %p105, %p106
      %p108 = scmp.ne.s32.totalorder %s99, %s100
      %p109 = scmp.eq.s32.totalorder %s30, 0
      %p110 = por %p108, %p109
      %p111 = scmp.ne.s32.totalorder %s99, %s100
      %p112 = scmp.eq.s32.totalorder %s31, 3
      %p113 = por %p111, %p112
      %p115 = scmp.ne.s32.totalorder %s100, %s114
      %p116 = scmp.eq.s32.totalorder %s31, 0
      %p117 = por %p115, %p116
      %s119 = sadd.s32 %s118, 1
      %p122 = scmp.eq.s32.totalorder %s25, 3
      %p123 = scmp.ne.s32.totalorder %s118, %s120
      %p124 = scmp.eq.s32.totalorder %s25, 0
      %p125 = por %p123, %p124
      %p126 = scmp.ne.s32.totalorder %s118, %s120
      %p127 = scmp.eq.s32.totalorder %s30, 3
      %p128 = por %p126, %p127
      %p129 = scmp.ne.s32.totalorder %s120, %s121
      %p130 = scmp.eq.s32.totalorder %s30, 0
      %p131 = por %p129, %p130
      %p132 = scmp.ne.s32.totalorder %s120, %s121
      %p133 = scmp.eq.s32.totalorder %s31, 3
      %p134 = por %p132, %p133
      %p136 = scmp.ne.s32.totalorder %s121, %s135
      %p137 = scmp.eq.s32.totalorder %s31, 0
      %p138 = por %p136, %p137
      %s140 = sadd.s32 %s139, 1
      %p143 = scmp.eq.s32.totalorder %s25, 3
      %p144 = scmp.ne.s32.totalorder %s139, %s141
      %p145 = scmp.eq.s32.totalorder %s25, 0
      %p146 = por %p144, %p145
      %p147 = scmp.ne.s32.totalorder %s139, %s141
      %p148 = scmp.eq.s32.totalorder %s30, 3
      %p149 = por %p147, %p148
      %p150 = scmp.ne.s32.totalorder %s141, %s142
      %p151 = scmp.eq.s32.totalorder %s30, 0
      %p152 = por %p150, %p151
      %p153 = scmp.ne.s32.totalorder %s141, %s142
      %p154 = scmp.eq.s32.totalorder %s31, 3
      %p155 = por %p153, %p154
      %p157 = scmp.ne.s32.totalorder %s142, %s156
      %p158 = scmp.eq.s32.totalorder %s31, 0
      %p159 = por %p157, %p158
      %s161 = sadd.s32 %s160, 1
      %p164 = scmp.eq.s32.totalorder %s25, 3
      %p165 = scmp.ne.s32.totalorder %s160, %s162
      %p166 = scmp.eq.s32.totalorder %s25, 0
      %p167 = por %p165, %p166
      %p168 = scmp.ne.s32.totalorder %s160, %s162
      %p169 = scmp.eq.s32.totalorder %s30, 3
      %p170 = por %p168, %p169
      %p171 = scmp.ne.s32.totalorder %s162, %s163
      %p172 = scmp.eq.s32.totalorder %s30, 0
      %p173 = por %p171, %p172
      %p174 = scmp.ne.s32.totalorder %s162, %s163
      %p175 = scmp.eq.s32.totalorder %s31, 3
      %p176 = por %p174, %p175
      %p178 = scmp.ne.s32.totalorder %s163, %s177
      %p179 = scmp.eq.s32.totalorder %s31, 0
      %p180 = por %p178, %p179
      %s182 = sadd.s32 %s181, 1
      %p185 = scmp.eq.s32.totalorder %s25, 3
      %p186 = scmp.ne.s32.totalorder %s181, %s183
      %p187 = scmp.eq.s32.totalorder %s25, 0
      %p188 = por %p186, %p187
      %p189 = scmp.ne.s32.totalorder %s181, %s183
      %p190 = scmp.eq.s32.totalorder %s30, 3
      %p191 = por %p189, %p190
      %p192 = scmp.ne.s32.totalorder %s183, %s184
      %p193 = scmp.eq.s32.totalorder %s30, 0
      %p194 = por %p192, %p193
      %p195 = scmp.ne.s32.totalorder %s183, %s184
      %p196 = scmp.eq.s32.totalorder %s31, 3
      %p197 = por %p195, %p196
      %p199 = scmp.ne.s32.totalorder %s184, %s198
      %p200 = scmp.eq.s32.totalorder %s31, 0
      %p201 = por %p199, %p200
      %s203 = sadd.s32 %s202, 1
      %p206 = scmp.eq.s32.totalorder %s25, 3
      %p207 = scmp.ne.s32.totalorder %s202, %s204
      %p208 = scmp.eq.s32.totalorder %s25, 0
      %p209 = por %p207, %p208
      %p210 = scmp.ne.s32.totalorder %s202, %s204
      %p211 = scmp.eq.s32.totalorder %s30, 3
      %p212 = por %p210, %p211
      %p213 = scmp.ne.s32.totalorder %s204, %s205
      %p214 = scmp.eq.s32.totalorder %s30, 0
      %p215 = por %p213, %p214
      %p216 = scmp.ne.s32.totalorder %s204, %s205
      %p217 = scmp.eq.s32.totalorder %s31, 3
      %p218 = por %p216, %p217
      %p220 = scmp.ne.s32.totalorder %s205, %s219
      %p221 = scmp.eq.s32.totalorder %s31, 0
      %p222 = por %p220, %p221
      %s224 = sadd.s32 %s223, 1
      %p227 = scmp.eq.s32.totalorder %s25, 3
      %p228 = scmp.ne.s32.totalorder %s223, %s225
      %p229 = scmp.eq.s32.totalorder %s25, 0
      %p230 = por %p228, %p229
      %p231 = scmp.ne.s32.totalorder %s223, %s225
      %p232 = scmp.eq.s32.totalorder %s30, 3
      %p233 = por %p231, %p232
      %p234 = scmp.ne.s32.totalorder %s225, %s226
      %p235 = scmp.eq.s32.totalorder %s30, 0
      %p236 = por %p234, %p235
      %p237 = scmp.ne.s32.totalorder %s225, %s226
      %p238 = scmp.eq.s32.totalorder %s31, 3
      %p239 = por %p237, %p238
      %p241 = scmp.ne.s32.totalorder %s226, %s240
      %p242 = scmp.eq.s32.totalorder %s31, 0
      %p243 = por %p241, %p242
      %s245 = sadd.s32 %s244, 1
      %p248 = scmp.eq.s32.totalorder %s25, 3
      %p249 = scmp.ne.s32.totalorder %s244, %s246
      %p250 = scmp.eq.s32.totalorder %s25, 0
      %p251 = por %p249, %p250
      %p252 = scmp.ne.s32.totalorder %s244, %s246
      %p253 = scmp.eq.s32.totalorder %s30, 3
      %p254 = por %p252, %p253
      %p255 = scmp.ne.s32.totalorder %s246, %s247
      %p256 = scmp.eq.s32.totalorder %s30, 0
      %p257 = por %p255, %p256
      %p258 = scmp.ne.s32.totalorder %s246, %s247
      %p259 = scmp.eq.s32.totalorder %s31, 3
      %p260 = por %p258, %p259
      %p262 = scmp.ne.s32.totalorder %s247, %s261
      %p263 = scmp.eq.s32.totalorder %s31, 0
      %p264 = por %p262, %p263
      %s266 = sadd.s32 %s265, 1
      %p269 = scmp.eq.s32.totalorder %s25, 3
      %p270 = scmp.ne.s32.totalorder %s265, %s267
      %p271 = scmp.eq.s32.totalorder %s25, 0
      %p272 = por %p270, %p271
      %p273 = scmp.ne.s32.totalorder %s265, %s267
      %p274 = scmp.eq.s32.totalorder %s30, 3
      %p275 = por %p273, %p274
      %p276 = scmp.ne.s32.totalorder %s267, %s268
      %p277 = scmp.eq.s32.totalorder %s30, 0
      %p278 = por %p276, %p277
      %p279 = scmp.ne.s32.totalorder %s267, %s268
      %p280 = scmp.eq.s32.totalorder %s31, 3
      %p281 = por %p279, %p280
      %p283 = scmp.ne.s32.totalorder %s268, %s282
      %p284 = scmp.eq.s32.totalorder %s31, 0
      %p285 = por %p283, %p284
      %s287 = sadd.s32 %s286, 1
      %p290 = scmp.eq.s32.totalorder %s25, 3
      %p291 = scmp.ne.s32.totalorder %s286, %s288
      %p292 = scmp.eq.s32.totalorder %s25, 0
      %p293 = por %p291, %p292
      %p294 = scmp.ne.s32.totalorder %s286, %s288
      %p295 = scmp.eq.s32.totalorder %s30, 3
      %p296 = por %p294, %p295
      %p297 = scmp.ne.s32.totalorder %s288, %s289
      %p298 = scmp.eq.s32.totalorder %s30, 0
      %p299 = por %p297, %p298
      %p300 = scmp.ne.s32.totalorder %s288, %s289
      %p301 = scmp.eq.s32.totalorder %s31, 3
      %p302 = por %p300, %p301
      %p304 = scmp.ne.s32.totalorder %s289, %s303
      %p305 = scmp.eq.s32.totalorder %s31, 0
      %p306 = por %p304, %p305
      %s308 = sadd.s32 %s307, 1
      %p311 = scmp.eq.s32.totalorder %s25, 3
      %p312 = scmp.ne.s32.totalorder %s307, %s309
      %p313 = scmp.eq.s32.totalorder %s25, 0
      %p314 = por %p312, %p313
      %p315 = scmp.ne.s32.totalorder %s307, %s309
      %p316 = scmp.eq.s32.totalorder %s30, 3
      %p317 = por %p315, %p316
      %p318 = scmp.ne.s32.totalorder %s309, %s310
      %p319 = scmp.eq.s32.totalorder %s30, 0
      %p320 = por %p318, %p319
      %p321 = scmp.ne.s32.totalorder %s309, %s310
      %p322 = scmp.eq.s32.totalorder %s31, 3
      %p323 = por %p321, %p322
      %p325 = scmp.ne.s32.totalorder %s310, %s324
      %p326 = scmp.eq.s32.totalorder %s31, 0
      %p327 = por %p325, %p326
      %s329 = sadd.s32 %s328, 1
      %p332 = scmp.eq.s32.totalorder %s25, 3
      %p333 = scmp.ne.s32.totalorder %s328, %s330
      %p334 = scmp.eq.s32.totalorder %s25, 0
      %p335 = por %p333, %p334
      %p336 = scmp.ne.s32.totalorder %s328, %s330
      %p337 = scmp.eq.s32.totalorder %s30, 3
      %p338 = por %p336, %p337
      %p339 = scmp.ne.s32.totalorder %s330, %s331
      %p340 = scmp.eq.s32.totalorder %s30, 0
      %p341 = por %p339, %p340
      %p342 = scmp.ne.s32.totalorder %s330, %s331
      %p343 = scmp.eq.s32.totalorder %s31, 3
      %p344 = por %p342, %p343
      %p346 = scmp.ne.s32.totalorder %s331, %s345
      %p347 = scmp.eq.s32.totalorder %s31, 0
      %p348 = por %p346, %p347
      %s349 = ssub.s32 %s32, %s44
      %s350 = ssub.s32 %s33, %s40
      %s351 = sor.u32 %s349, %s350
      %p352 = scmp.eq.s32.totalorder %s351, 0
      %s354 = sadd.s32 %s353, 1
      %s355 = scalar_select %p352, %s353, %s354
      %p358 = pneg %p352
      %p359 = scmp.eq.s32.totalorder %s25, 3
      %p360 = por %p358, %p359
      %p361 = scmp.ne.s32.totalorder %s353, %s356
      %p362 = scmp.eq.s32.totalorder %s25, 0
      %p363 = por %p361, %p362
      %p364 = scmp.ne.s32.totalorder %s353, %s356
      %p365 = scmp.eq.s32.totalorder %s30, 3
      %p366 = por %p364, %p365
      %p367 = scmp.ne.s32.totalorder %s356, %s357
      %p368 = scmp.eq.s32.totalorder %s30, 0
      %p369 = por %p367, %p368
      %p370 = scmp.ne.s32.totalorder %s356, %s357
      %p371 = scmp.eq.s32.totalorder %s31, 3
      %p372 = por %p370, %p371
      %p374 = scmp.ne.s32.totalorder %s357, %s373
      %p375 = scmp.eq.s32.totalorder %s31, 0
      %p376 = por %p374, %p375
      %p377 = scmp.le.s32.totalorder 1, %s25
      %p378 = scmp.lt.s32.totalorder %s25, 5
      %p379 = pnand %p377, %p378
      %p380 = pneg %p379
      // Predicated region
      $region9: #{encoder_pallas.2} parent=5 // pred_check
        _
      $region10: #{encoder_pallas.2} parent=5 // pred_check_branch
        %382 = sbr.rel (%p379) target = $region12
      $region11: #{encoder_pallas.2} parent=5 // pred_region
        %s383 = ssub.s32 %s25, 1
        // Predicated region
        $region13: #{encoder_pallas.2} parent=11 // pred_check
          %p384 = pneg %p110
        $region14: #{encoder_pallas.2} parent=11 // pred_check_branch
          %386 = sbr.rel (%p384) target = $region16
        $region15: #{encoder_pallas.2} parent=11 // pred_region
          _
        $region16: #{encoder_pallas.2} parent=11 // pred_fallthru
          _
        // Predicated region
        $region17: #{encoder_pallas.2} parent=11 // pred_check
          %p387 = pneg %p131
        $region18: #{encoder_pallas.2} parent=11 // pred_check_branch
          %389 = sbr.rel (%p387) target = $region20
        $region19: #{encoder_pallas.2} parent=11 // pred_region
          _
        $region20: #{encoder_pallas.2} parent=11 // pred_fallthru
          _
        // Predicated region
        $region21: #{encoder_pallas.2} parent=11 // pred_check
          %p390 = pneg %p152
        $region22: #{encoder_pallas.2} parent=11 // pred_check_branch
          %392 = sbr.rel (%p390) target = $region24
        $region23: #{encoder_pallas.2} parent=11 // pred_region
          %394 = vsyncadd [#allocation5], 0
          %s395 = sshll.u32 %s4, 4
          %s396 = int_to_ptr.hbm [resolvable:$true] %s395
          %s397 = sshll.u32 [#allocation4], 4
          %s398 = int_to_ptr.vmem [resolvable:$true] %s397
          %403 = dma.hbm_to_vmem [thread:$0]  %s396, 512, %s398, [#allocation5], 64, 64, 4
        $region24: #{encoder_pallas.2} parent=11 // pred_fallthru
          _
        // Predicated region
        $region25: #{encoder_pallas.2} parent=11 // pred_check
          %p404 = pneg %p173
        $region26: #{encoder_pallas.2} parent=11 // pred_check_branch
          %406 = sbr.rel (%p404) target = $region28
        $region27: #{encoder_pallas.2} parent=11 // pred_region
          %408 = vsyncadd [#allocation7], 0
          %s410 = sshll.u32 %s5, 4
          %s411 = int_to_ptr.hbm [resolvable:$true] %s410
          %s412 = sshll.u32 [#allocation6], 4
          %s413 = int_to_ptr.vmem [resolvable:$true] %s412
          %415 = dma.hbm_to_vmem [thread:$0]  %s411, 16, %s413, [#allocation7]
        $region28: #{encoder_pallas.2} parent=11 // pred_fallthru
          _
        // Predicated region
        $region29: #{encoder_pallas.2} parent=11 // pred_check
          %p416 = pneg %p194
        $region30: #{encoder_pallas.2} parent=11 // pred_check_branch
          %418 = sbr.rel (%p416) target = $region32
        $region31: #{encoder_pallas.2} parent=11 // pred_region
          %420 = vsyncadd [#allocation7], 0
          %s422 = sshll.u32 %s6, 4
          %s423 = int_to_ptr.hbm [resolvable:$true] %s422
          %s424 = sshll.u32 [#allocation8], 4
          %s425 = int_to_ptr.vmem [resolvable:$true] %s424
          %427 = dma.hbm_to_vmem [thread:$0]  %s423, 16, %s425, [#allocation7]
        $region32: #{encoder_pallas.2} parent=11 // pred_fallthru
          _
        // Predicated region
        $region33: #{encoder_pallas.2} parent=11 // pred_check
          %p428 = pneg %p215
        $region34: #{encoder_pallas.2} parent=11 // pred_check_branch
          %430 = sbr.rel (%p428) target = $region36
        $region35: #{encoder_pallas.2} parent=11 // pred_region
          %432 = vsyncadd [#allocation10], 0
          %s434 = sshll.u32 %s7, 4
          %s435 = int_to_ptr.hbm [resolvable:$true] %s434
          %s436 = sshll.u32 [#allocation9], 4
          %s437 = int_to_ptr.vmem [resolvable:$true] %s436
          %439 = dma.hbm_to_vmem [thread:$0]  %s435, 16, %s437, [#allocation10]
        $region36: #{encoder_pallas.2} parent=11 // pred_fallthru
          _
        // Predicated region
        $region37: #{encoder_pallas.2} parent=11 // pred_check
          %p440 = pneg %p236
        $region38: #{encoder_pallas.2} parent=11 // pred_check_branch
          %442 = sbr.rel (%p440) target = $region40
        $region39: #{encoder_pallas.2} parent=11 // pred_region
          %444 = vsyncadd [#allocation10], 0
          %s445 = sshll.u32 %s8, 4
          %s446 = int_to_ptr.hbm [resolvable:$true] %s445
          %s447 = sshll.u32 [#allocation11], 4
          %s448 = int_to_ptr.vmem [resolvable:$true] %s447
          %453 = dma.hbm_to_vmem [thread:$0]  %s446, 512, %s448, [#allocation10], 64, 64, 4
        $region40: #{encoder_pallas.2} parent=11 // pred_fallthru
          _
        // Predicated region
        $region41: #{encoder_pallas.2} parent=11 // pred_check
          %p454 = pneg %p257
        $region42: #{encoder_pallas.2} parent=11 // pred_check_branch
          %456 = sbr.rel (%p454) target = $region44
        $region43: #{encoder_pallas.2} parent=11 // pred_region
          %458 = vsyncadd [#allocation13], 0
          %s460 = sshll.u32 %s9, 4
          %s461 = int_to_ptr.hbm [resolvable:$true] %s460
          %s462 = sshll.u32 [#allocation12], 4
          %s463 = int_to_ptr.vmem [resolvable:$true] %s462
          %465 = dma.hbm_to_vmem [thread:$0]  %s461, 16, %s463, [#allocation13]
        $region44: #{encoder_pallas.2} parent=11 // pred_fallthru
          _
        // Predicated region
        $region45: #{encoder_pallas.2} parent=11 // pred_check
          %p466 = pneg %p278
        $region46: #{encoder_pallas.2} parent=11 // pred_check_branch
          %468 = sbr.rel (%p466) target = $region48
        $region47: #{encoder_pallas.2} parent=11 // pred_region
          _
        $region48: #{encoder_pallas.2} parent=11 // pred_fallthru
          _
        // Predicated region
        $region49: #{encoder_pallas.2} parent=11 // pred_check
          %p469 = pneg %p299
        $region50: #{encoder_pallas.2} parent=11 // pred_check_branch
          %471 = sbr.rel (%p469) target = $region52
        $region51: #{encoder_pallas.2} parent=11 // pred_region
          %473 = vsyncadd [#allocation13], 0
          %s475 = sshll.u32 %s11, 4
          %s476 = int_to_ptr.hbm [resolvable:$true] %s475
          %s477 = sshll.u32 [#allocation14], 4
          %s478 = int_to_ptr.vmem [resolvable:$true] %s477
          %480 = dma.hbm_to_vmem [thread:$0]  %s476, 16, %s478, [#allocation13]
        $region52: #{encoder_pallas.2} parent=11 // pred_fallthru
          _
        // Predicated region
        $region53: #{encoder_pallas.2} parent=11 // pred_check
          %p481 = pneg %p320
        $region54: #{encoder_pallas.2} parent=11 // pred_check_branch
          %483 = sbr.rel (%p481) target = $region56
        $region55: #{encoder_pallas.2} parent=11 // pred_region
          _
        $region56: #{encoder_pallas.2} parent=11 // pred_fallthru
          _
        // Predicated region
        $region57: #{encoder_pallas.2} parent=11 // pred_check
          %p484 = pneg %p341
        $region58: #{encoder_pallas.2} parent=11 // pred_check_branch
          %486 = sbr.rel (%p484) target = $region60
        $region59: #{encoder_pallas.2} parent=11 // pred_region
          %488 = vsyncadd [#allocation16], 0
          %s490 = sshll.u32 %s13, 4
          %s491 = int_to_ptr.hbm [resolvable:$true] %s490
          %s492 = sshll.u32 [#allocation15], 4
          %s493 = int_to_ptr.vmem [resolvable:$true] %s492
          %495 = dma.hbm_to_vmem [thread:$0]  %s491, 16, %s493, [#allocation16]
        $region60: #{encoder_pallas.2} parent=11 // pred_fallthru
          _
      $region12: #{encoder_pallas.2} parent=5 // pred_fallthru
        _
      %p496 = scmp.lt.s32.totalorder %s25, 4
      // Predicated region
      $region61: #{encoder_pallas.2} parent=5 // pred_check
        %p497 = pneg %p496
      $region62: #{encoder_pallas.2} parent=5 // pred_check_branch
        %499 = sbr.rel (%p497) target = $region64
      $region63: #{encoder_pallas.2} parent=5 // pred_region
        // Predicated region
        $region65: #{encoder_pallas.2} parent=63 // pred_check
          %p500 = pneg %p57
        $region66: #{encoder_pallas.2} parent=63 // pred_check_branch
          %502 = sbr.rel (%p500) target = $region68
        $region67: #{encoder_pallas.2} parent=63 // pred_region
          %p503 = scmp.lt.s32.totalorder %s32, 1
          %s504 = scalar_select %p503, %s32, 1
          %s505 = smul.addr %s504, 2
          %s506 = smul.addr %s505, 8
          %s507 = scalar_lea.vmem %s0, %s506
        $region68: #{encoder_pallas.2} parent=63 // pred_fallthru
          _
        // Predicated region
        $region69: #{encoder_pallas.2} parent=63 // pred_check
          %p508 = pneg %p83
        $region70: #{encoder_pallas.2} parent=63 // pred_check_branch
          %510 = sbr.rel (%p508) target = $region72
        $region71: #{encoder_pallas.2} parent=63 // pred_region
          %p511 = scmp.lt.s32.totalorder %s32, 1
          %s512 = scalar_select %p511, %s32, 1
          %s513 = scalar_lea.vmem %s1, %s512
        $region72: #{encoder_pallas.2} parent=63 // pred_fallthru
          _
      $region64: #{encoder_pallas.2} parent=5 // pred_fallthru
        _
      %p514 = scmp.le.s32.totalorder 1, %s25
      %p515 = scmp.lt.s32.totalorder %s25, 5
      %p516 = pnand %p514, %p515
      %p517 = pneg %p516
      // Predicated region
      $region73: #{encoder_pallas.2} parent=5 // pred_check
        _
      $region74: #{encoder_pallas.2} parent=5 // pred_check_branch
        %519 = sbr.rel (%p516) target = $region76
      $region75: #{encoder_pallas.2} parent=5 // pred_region
        %s520 = ssub.s32 %s25, 1
        // Predicated region
        $region77: #{encoder_pallas.2} parent=75 // pred_check
          %p521 = pneg %p152
        $region78: #{encoder_pallas.2} parent=75 // pred_check_branch
          %523 = sbr.rel (%p521) target = $region80
        $region79: #{encoder_pallas.2} parent=75 // pred_region
          %525 = dma.done [#allocation5], 512
        $region80: #{encoder_pallas.2} parent=75 // pred_fallthru
          _
        // Predicated region
        $region81: #{encoder_pallas.2} parent=75 // pred_check
          %p526 = pneg %p173
        $region82: #{encoder_pallas.2} parent=75 // pred_check_branch
          %528 = sbr.rel (%p526) target = $region84
        $region83: #{encoder_pallas.2} parent=75 // pred_region
          %530 = dma.done [#allocation7], 16
        $region84: #{encoder_pallas.2} parent=75 // pred_fallthru
          _
        // Predicated region
        $region85: #{encoder_pallas.2} parent=75 // pred_check
          %p531 = pneg %p194
        $region86: #{encoder_pallas.2} parent=75 // pred_check_branch
          %533 = sbr.rel (%p531) target = $region88
        $region87: #{encoder_pallas.2} parent=75 // pred_region
          %535 = dma.done [#allocation7], 16
        $region88: #{encoder_pallas.2} parent=75 // pred_fallthru
          _
        // Predicated region
        $region89: #{encoder_pallas.2} parent=75 // pred_check
          %p536 = pneg %p215
        $region90: #{encoder_pallas.2} parent=75 // pred_check_branch
          %538 = sbr.rel (%p536) target = $region92
        $region91: #{encoder_pallas.2} parent=75 // pred_region
          %540 = dma.done [#allocation10], 16
        $region92: #{encoder_pallas.2} parent=75 // pred_fallthru
          _
        // Predicated region
        $region93: #{encoder_pallas.2} parent=75 // pred_check
          %p541 = pneg %p236
        $region94: #{encoder_pallas.2} parent=75 // pred_check_branch
          %543 = sbr.rel (%p541) target = $region96
        $region95: #{encoder_pallas.2} parent=75 // pred_region
          %545 = dma.done [#allocation10], 512
        $region96: #{encoder_pallas.2} parent=75 // pred_fallthru
          _
        // Predicated region
        $region97: #{encoder_pallas.2} parent=75 // pred_check
          %p546 = pneg %p257
        $region98: #{encoder_pallas.2} parent=75 // pred_check_branch
          %548 = sbr.rel (%p546) target = $region100
        $region99: #{encoder_pallas.2} parent=75 // pred_region
          %550 = dma.done [#allocation13], 16
        $region100: #{encoder_pallas.2} parent=75 // pred_fallthru
          _
        // Predicated region
        $region101: #{encoder_pallas.2} parent=75 // pred_check
          %p551 = pneg %p299
        $region102: #{encoder_pallas.2} parent=75 // pred_check_branch
          %553 = sbr.rel (%p551) target = $region104
        $region103: #{encoder_pallas.2} parent=75 // pred_region
          %555 = dma.done [#allocation13], 16
        $region104: #{encoder_pallas.2} parent=75 // pred_fallthru
          _
        // Predicated region
        $region105: #{encoder_pallas.2} parent=75 // pred_check
          %p556 = pneg %p341
        $region106: #{encoder_pallas.2} parent=75 // pred_check_branch
          %558 = sbr.rel (%p556) target = $region108
        $region107: #{encoder_pallas.2} parent=75 // pred_region
          %560 = dma.done [#allocation16], 16
        $region108: #{encoder_pallas.2} parent=75 // pred_fallthru
          _
        %p561 = scmp.lt.s32.totalorder %s34, 1
        %s562 = scalar_select %p561, %s34, 1
        %s563 = smul.addr %s562, 2
        %s564 = smul.addr %s563, 8
        %s565 = scalar_lea.vmem %s0, %s564
        %p566 = pneg %p63
        %p567 = pneg %p60
        %p568 = scmp.lt.s32.totalorder %s34, 1
        %s569 = scalar_select %p568, %s34, 1
        %s570 = scalar_lea.vmem %s1, %s569
        %p571 = pneg %p89
        %p572 = pneg %p86
        %p573 = pneg %p110
        %p574 = pneg %p107
        %p575 = pneg %p131
        %p576 = pneg %p128
        %p577 = pneg %p152
        %p578 = pneg %p149
        %p579 = pneg %p173
        %p580 = pneg %p170
        %p581 = pneg %p194
        %p582 = pneg %p191
        %p583 = pneg %p215
        %p584 = pneg %p212
        %p585 = pneg %p236
        %p586 = pneg %p233
        %p587 = pneg %p257
        %p588 = pneg %p254
        %p589 = pneg %p278
        %p590 = pneg %p275
        %p591 = pneg %p299
        %p592 = pneg %p296
        %p593 = pneg %p320
        %p594 = pneg %p317
        %p595 = pneg %p341
        %p596 = pneg %p338
        %p597 = pneg %p369
        %p598 = pneg %p366
        %p599 = scmp.lt.s32.totalorder %s34, 1
        %s600 = scalar_select %p599, %s34, 1
        %p601 = scmp.lt.s32.totalorder %s35, 1
        %s602 = scalar_select %p601, %s35, 1
        %s603 = smul.addr %s600, 2
        %s604 = sadd.s32 %s602, %s603
        %s605 = smul.addr %s604, 8
        %s606 = scalar_lea.vmem %s14, %s605
        %p607 = scmp.lt.s32.totalorder %s34, 1
        %s608 = scalar_select %p607, %s34, 1
        %s609 = smul.addr %s608, 2
        %s610 = smul.addr %s609, 8
        %s611 = scalar_lea.vmem %s0, %s610
        %p612 = scmp.lt.s32.totalorder %s34, 1
        %s613 = scalar_select %p612, %s34, 1
        %s614 = scalar_lea.vmem %s1, %s613
        %p615 = scmp.lt.s32.totalorder %s34, 1
        %s616 = scalar_select %p615, %s34, 1
        %p617 = scmp.lt.s32.totalorder %s35, 1
        %s618 = scalar_select %p617, %s35, 1
        %s619 = smul.addr %s616, 2
        %s620 = sadd.s32 %s618, %s619
        %s621 = smul.addr %s620, 8
        %s622 = scalar_lea.vmem %s14, %s621
        %p624 = scmp.eq.s32.totalorder %s35, 0
        // Predicated region
        $region109: #{encoder_pallas.2} parent=75 // pred_check
          %p625 = pneg %p624
        $region110: #{encoder_pallas.2} parent=75 // pred_check_branch
          %627 = sbr.rel (%p625) target = $region112
        $region111: #{encoder_pallas.2} parent=75 // pred_region
          %v628 = vld [vmem:[%s611] sm:$0xff]
          %v629 = vld [vmem:[%s611 + $0x8] sm:$0xff]
          %v630 = vpack.c.bf16 %v629, %v628
          %v631 = vld [vmem:[%s2] sm:$0xff]
          %v632 = vld [vmem:[%s2 + $0x8] sm:$0xff]
          %v633 = vld [vmem:[%s2 + $0x10] sm:$0xff]
          %v634 = vld [vmem:[%s2 + $0x18] sm:$0xff]
          %v635 = vld [vmem:[%s2 + $0x20] sm:$0xff]
          %v636 = vld [vmem:[%s2 + $0x28] sm:$0xff]
          %v637 = vld [vmem:[%s2 + $0x30] sm:$0xff]
          %v638 = vld [vmem:[%s2 + $0x38] sm:$0xff]
          %v639 = vld [vmem:[%s3] sm:$0x3]
          %v641 = vperm.slane %v639, 0
          %v642 = vperm.slane %v639, 1
          %v651 = vunpack.c.l.b16 %v631
          %v652 = vunpack.c.h.b16 %v631
          %v653 = vunpack.c.l.b16 %v632
          %v654 = vunpack.c.h.b16 %v632
          %v655 = vunpack.c.l.b16 %v633
          %v656 = vunpack.c.h.b16 %v633
          %v657 = vunpack.c.l.b16 %v634
          %v658 = vunpack.c.h.b16 %v634
          %v659 = vunpack.c.l.b16 %v635
          %v660 = vunpack.c.h.b16 %v635
          %v661 = vunpack.c.l.b16 %v636
          %v662 = vunpack.c.h.b16 %v636
          %v663 = vunpack.c.l.b16 %v637
          %v664 = vunpack.c.h.b16 %v637
          %v665 = vunpack.c.l.b16 %v638
          %v666 = vunpack.c.h.b16 %v638
          %v667 = vpack.c.b16 %v653, %v651
          %v668 = vpack.c.b16 %v654, %v652
          %v669 = vpack.c.b16 %v657, %v655
          %v670 = vpack.c.b16 %v658, %v656
          %v671 = vpack.c.b16 %v661, %v659
          %v672 = vpack.c.b16 %v662, %v660
          %v673 = vpack.c.b16 %v665, %v663
          %v674 = vpack.c.b16 %v666, %v664
          %675 = vrot.lane.b32.xlu0 %v667, 64
          %v676 = vpop.permute.xlu0 %675
          %677 = vrot.lane.b32.xlu0 %v668, 64
          %v678 = vpop.permute.xlu0 %677
          %679 = vrot.lane.b32.xlu0 %v669, 64
          %v680 = vpop.permute.xlu0 %679
          %681 = vrot.lane.b32.xlu0 %v670, 64
          %v682 = vpop.permute.xlu0 %681
          %683 = vrot.lane.b32.xlu0 %v671, 64
          %v684 = vpop.permute.xlu0 %683
          %685 = vrot.lane.b32.xlu0 %v672, 64
          %v686 = vpop.permute.xlu0 %685
          %687 = vrot.lane.b32.xlu0 %v673, 64
          %v688 = vpop.permute.xlu0 %687
          %689 = vrot.lane.b32.xlu0 %v674, 64
          %v690 = vpop.permute.xlu0 %689
          %vm691 = vcmask 523264
          %v692 = vsel %vm691, %v676, %v678
          %v693 = vsel %vm691, %v680, %v682
          %v694 = vsel %vm691, %v684, %v686
          %v695 = vsel %vm691, %v688, %v690
          %700 = vrot.lane.b32.xlu0 %v641, 64
          %v701 = vpop.permute.xlu0 %700
          %702 = vrot.lane.b32.xlu0 %v642, 64
          %v703 = vpop.permute.xlu0 %702
          %vm704 = vcmask 523264
          %v705 = vsel %vm704, %v701, %v703
          %v708 = vsel %vm704, %v630, 0
          %710 = vmatpush.bf16.msra.mxu0 0
          %711 = vmatpush.bf16.msra.mxu0 0
          %712 = vmatpush.bf16.msra.mxu0 0
          %713 = vmatpush.bf16.msra.mxu0 0
          %714 = vmatpush.bf16.msra.mxu0 %v695
          %715 = vmatpush.bf16.msra.mxu0 %v694
          %716 = vmatpush.bf16.msra.mxu0 %v693
          %717 = vmatpush.bf16.msra.mxu0 %v692
          %718 = vmatmul.bf16.gmra.mxu0 %v708
          %v719 = vpop.f32.mrf.mxu0
          %v720 = vadd.f32 %v705, %v719
          %v721 = vpop.f32.mrf.mxu0
          %v722 = vadd.f32 %v705, %v721
          %723 = vdwg.mxu0
          %v724 = vpack.c.bf16 %v720, %v720
          %v725 = vpack.c.bf16 %v722, %v722
          %vm726 = vcmask 519168
          %727 = vst.msk [vmem:[#allocation2] sm:$0xf] %vm726, %v724
          %728 = vst.msk [vmem:[#allocation2 + $0x4] sm:$0xf] %vm726, %v725
          %731 = vrot.lane.b32.xlu0 %v724, 64
          %v732 = vpop.permute.xlu0 %731
          %733 = vrot.lane.b32.xlu0 %v725, 64
          %v734 = vpop.permute.xlu0 %733
          %737 = vst.msk [vmem:[#allocation3] sm:$0xf] %vm726, %v732
          %738 = vst.msk [vmem:[#allocation3 + $0x4] sm:$0xf] %vm726, %v734
        $region112: #{encoder_pallas.2} parent=75 // pred_fallthru
          _
        %s739 = smul.u32 %s35, 8
        %s740 = scalar_lea.vmem %s611, %s739
        %v741 = vld [vmem:[%s740] sm:$0xff]
        %v742 = vpack.c.bf16 %v741, %v741
        %v743 = vld [vmem:[%s2] sm:$0xf]
        %v744 = vld [vmem:[%s2 + $0x8] sm:$0xf]
        %v745 = vld [vmem:[%s2 + $0x10] sm:$0xf]
        %v746 = vld [vmem:[%s2 + $0x18] sm:$0xf]
        %v747 = vld [vmem:[%s2 + $0x20] sm:$0xf]
        %v748 = vld [vmem:[%s2 + $0x28] sm:$0xf]
        %v749 = vld [vmem:[%s2 + $0x30] sm:$0xf]
        %v750 = vld [vmem:[%s2 + $0x38] sm:$0xf]
        %v751 = vld [vmem:[%s3] sm:$0x1]
        %v753 = vperm.slane %v751, 0
        %v763 = vunpack.c.l.b16 %v743
        %v764 = vunpack.c.l.b16 %v744
        %v765 = vunpack.c.l.b16 %v745
        %v766 = vunpack.c.l.b16 %v746
        %v767 = vunpack.c.l.b16 %v747
        %v768 = vunpack.c.l.b16 %v748
        %v769 = vunpack.c.l.b16 %v749
        %v770 = vunpack.c.l.b16 %v750
        %v771 = vpack.c.b16 %v764, %v763
        %v772 = vpack.c.b16 %v766, %v765
        %v773 = vpack.c.b16 %v768, %v767
        %v774 = vpack.c.b16 %v770, %v769
        %vm779 = vcmask 523264
        %v781 = vsel %vm779, %v742, 0
        %783 = vmatpush.bf16.msra.mxu0 0
        %784 = vmatpush.bf16.msra.mxu0 0
        %785 = vmatpush.bf16.msra.mxu0 0
        %786 = vmatpush.bf16.msra.mxu0 0
        %787 = vmatpush.bf16.msra.mxu0 %v774
        %788 = vmatpush.bf16.msra.mxu0 %v773
        %789 = vmatpush.bf16.msra.mxu0 %v772
        %790 = vmatpush.bf16.msra.mxu0 %v771
        %791 = vmatmul.bf16.gmra.mxu0 %v781
        %v792 = vpop.f32.mrf.mxu0
        %v793 = vadd.f32 %v753, %v792
        %v794 = vpop.f32.mrf.mxu0
        %795 = vdwg.mxu0
        %v796 = vmul.f32 %v793, 0.25
        %v797 = vpack.c.bf16 %v796, %v796
        %v798 = vld [vmem:[%s614] sm:$0x1]
        %vm799 = vcmp.eq.f32.partialorder %v798, 0.0
        %v800 = vsel %vm799, -1e+09, 0.0
        %v801 = vld [vmem:[#allocation2] sm:$0xf]
        %v802 = vld [vmem:[#allocation2 + $0x4] sm:$0xf]
        %v804 = vperm.slane %v800, 0
        %v808 = vunpack.c.l.b16 %v801
        %v809 = vunpack.c.l.b16 %v802
        %v810 = vpack.c.b16 %v809, %v808
        %vm811 = vcmask 130048
        %v813 = vsel %vm811, %v797, 0
        %v816 = vsel %vm811, %v810, 0
        %818 = vmatpush.bf16.xpose.msra.mxu0 0
        %819 = vmatpush.bf16.xpose.msra.mxu0 0
        %820 = vmatpush.bf16.xpose.msra.mxu0 0
        %821 = vmatpush.bf16.xpose.msra.mxu0 0
        %822 = vmatpush.bf16.xpose.msra.mxu0 0
        %823 = vmatpush.bf16.xpose.msra.mxu0 0
        %824 = vmatpush.bf16.xpose.msra.mxu0 0
        %825 = vmatpush.bf16.xpose.msra.mxu0 %v816
        %826 = vmatmul.bf16.gmra.mxu0 %v813
        %v827 = vpop.f32.mrf.mxu0
        %v828 = vadd.f32 %v804, %v827
        %v829 = vpop.f32.mrf.mxu0
        %830 = vdwg.mxu0
        %v831 = vsel %vm811, %v828, -inf
        %832 = vmax.xlane.f32.xlu0 %v831
        %v833 = vpop.xlane.xlu0 %832
        %v834 = vsub.f32 %v828, %v833
        %v835 = vmul.f32 %v834, 1.442695
        %v836 = vpow.pop %v835
        %v837 = vsel %vm811, %v836, 0.0
        %838 = vadd.xlane.f32.xlu0 %v837
        %v839 = vpop.xlane.xlu0 %838
        %v840 = vpack.c.bf16 %v836, %v836
        %v841 = vld [vmem:[#allocation3] sm:$0xf]
        %v842 = vld [vmem:[#allocation3 + $0x4] sm:$0xf]
        %v845 = vunpack.c.l.b16 %v841
        %v846 = vunpack.c.l.b16 %v842
        %v847 = vpack.c.b16 %v846, %v845
        %v850 = vsel %vm811, %v840, 0
        %852 = vmatpush.bf16.msra.mxu0 0
        %853 = vmatpush.bf16.msra.mxu0 0
        %854 = vmatpush.bf16.msra.mxu0 0
        %855 = vmatpush.bf16.msra.mxu0 0
        %856 = vmatpush.bf16.msra.mxu0 0
        %857 = vmatpush.bf16.msra.mxu0 0
        %858 = vmatpush.bf16.msra.mxu0 0
        %859 = vmatpush.bf16.msra.mxu0 %v847
        %860 = vmatmul.bf16.gmra.mxu0 %v850
        %v861 = vpop.f32.mrf.mxu0
        %v862 = vadd.f32 0.0, %v861
        %v863 = vpop.f32.mrf.mxu0
        %864 = vdwg.mxu0
        %v865 = vrcp.pop %v839
        %v866 = vmul.f32 %v862, %v865
        %v867 = vpack.c.bf16 %v866, %v866
        %v868 = vld [vmem:[#allocation4] sm:$0xf]
        %v869 = vld [vmem:[#allocation4 + $0x4] sm:$0xf]
        %v871 = vunpack.c.l.b16 %v797
        %v872 = vpack.c.b16 %v871, %v871
        %873 = vrot.lane.b32.xlu0 %v872, 112
        %v874 = vpop.permute.xlu0 %873
        %875 = vrot.lane.b32.xlu0 %v810, 112
        %v876 = vpop.permute.xlu0 %875
        %v878 = vsel %vm811, %v874, 0
        %v881 = vsel %vm811, %v876, 0
        %883 = vmatpush.bf16.xpose.msra.mxu0 0
        %884 = vmatpush.bf16.xpose.msra.mxu0 0
        %885 = vmatpush.bf16.xpose.msra.mxu0 0
        %886 = vmatpush.bf16.xpose.msra.mxu0 0
        %887 = vmatpush.bf16.xpose.msra.mxu0 0
        %888 = vmatpush.bf16.xpose.msra.mxu0 0
        %889 = vmatpush.bf16.xpose.msra.mxu0 0
        %890 = vmatpush.bf16.xpose.msra.mxu0 %v881
        %891 = vmatmul.bf16.gmra.mxu0 %v878
        %v892 = vpop.f32.mrf.mxu0
        %v893 = vadd.f32 %v804, %v892
        %v894 = vpop.f32.mrf.mxu0
        %895 = vdwg.mxu0
        %v896 = vsel %vm811, %v893, -inf
        %897 = vmax.xlane.f32.xlu0 %v896
        %v898 = vpop.xlane.xlu0 %897
        %v899 = vsub.f32 %v893, %v898
        %v900 = vmul.f32 %v899, 1.442695
        %v901 = vpow.pop %v900
        %v902 = vsel %vm811, %v901, 0.0
        %903 = vadd.xlane.f32.xlu0 %v902
        %v904 = vpop.xlane.xlu0 %903
        %v905 = vpack.c.bf16 %v901, %v901
        %906 = vrot.lane.b32.xlu0 %v847, 112
        %v907 = vpop.permute.xlu0 %906
        %v910 = vsel %vm811, %v905, 0
        %912 = vmatpush.bf16.msra.mxu0 0
        %913 = vmatpush.bf16.msra.mxu0 0
        %914 = vmatpush.bf16.msra.mxu0 0
        %915 = vmatpush.bf16.msra.mxu0 0
        %916 = vmatpush.bf16.msra.mxu0 0
        %917 = vmatpush.bf16.msra.mxu0 0
        %918 = vmatpush.bf16.msra.mxu0 0
        %919 = vmatpush.bf16.msra.mxu0 %v907
        %920 = vmatmul.bf16.gmra.mxu0 %v910
        %v921 = vpop.f32.mrf.mxu0
        %v922 = vadd.f32 0.0, %v921
        %v923 = vpop.f32.mrf.mxu0
        %924 = vdwg.mxu0
        %v925 = vrcp.pop %v904
        %v926 = vmul.f32 %v922, %v925
        %v927 = vpack.c.bf16 %v926, %v926
        %v928 = vld [vmem:[#allocation4 + $0x8] sm:$0xf]
        %v929 = vld [vmem:[#allocation4 + $0xc] sm:$0xf]
        %v932 = vunpack.c.l.b16 %v928
        %v933 = vunpack.c.l.b16 %v929
        %v934 = vpack.c.b16 %v933, %v932
        %v937 = vsel %vm811, %v927, 0
        %939 = vmatpush.bf16.msra.mxu0 0
        %940 = vmatpush.bf16.msra.mxu0 0
        %941 = vmatpush.bf16.msra.mxu0 0
        %942 = vmatpush.bf16.msra.mxu0 0
        %943 = vmatpush.bf16.msra.mxu0 0
        %944 = vmatpush.bf16.msra.mxu0 0
        %945 = vmatpush.bf16.msra.mxu0 0
        %946 = vmatpush.bf16.msra.mxu0 %v934
        %947 = vmatmul.bf16.gmra.mxu0 %v937
        %v948 = vpop.f32.mrf.mxu0
        %v949 = vadd.f32 0.0, %v948
        %v950 = vpop.f32.mrf.mxu0
        %951 = vdwg.mxu0
        %v954 = vunpack.c.l.b16 %v868
        %v955 = vunpack.c.l.b16 %v869
        %v956 = vpack.c.b16 %v955, %v954
        %v959 = vsel %vm811, %v867, 0
        %961 = vmatpush.bf16.msra.mxu0 0
        %962 = vmatpush.bf16.msra.mxu0 0
        %963 = vmatpush.bf16.msra.mxu0 0
        %964 = vmatpush.bf16.msra.mxu0 0
        %965 = vmatpush.bf16.msra.mxu0 0
        %966 = vmatpush.bf16.msra.mxu0 0
        %967 = vmatpush.bf16.msra.mxu0 0
        %968 = vmatpush.bf16.msra.mxu0 %v956
        %969 = vmatmul.bf16.gmra.mxu0 %v959
        %v970 = vpop.f32.mrf.mxu0
        %v971 = vadd.f32 %v949, %v970
        %v972 = vpop.f32.mrf.mxu0
        %973 = vdwg.mxu0
        %974 = vrot.lane.b32.xlu0 %v872, 96
        %v975 = vpop.permute.xlu0 %974
        %976 = vrot.lane.b32.xlu0 %v810, 96
        %v977 = vpop.permute.xlu0 %976
        %v979 = vsel %vm811, %v975, 0
        %v982 = vsel %vm811, %v977, 0
        %984 = vmatpush.bf16.xpose.msra.mxu0 0
        %985 = vmatpush.bf16.xpose.msra.mxu0 0
        %986 = vmatpush.bf16.xpose.msra.mxu0 0
        %987 = vmatpush.bf16.xpose.msra.mxu0 0
        %988 = vmatpush.bf16.xpose.msra.mxu0 0
        %989 = vmatpush.bf16.xpose.msra.mxu0 0
        %990 = vmatpush.bf16.xpose.msra.mxu0 0
        %991 = vmatpush.bf16.xpose.msra.mxu0 %v982
        %992 = vmatmul.bf16.gmra.mxu0 %v979
        %v993 = vpop.f32.mrf.mxu0
        %v994 = vadd.f32 %v804, %v993
        %v995 = vpop.f32.mrf.mxu0
        %996 = vdwg.mxu0
        %v997 = vsel %vm811, %v994, -inf
        %998 = vmax.xlane.f32.xlu0 %v997
        %v999 = vpop.xlane.xlu0 %998
        %v1000 = vsub.f32 %v994, %v999
        %v1001 = vmul.f32 %v1000, 1.442695
        %v1002 = vpow.pop %v1001
        %v1003 = vsel %vm811, %v1002, 0.0
        %1004 = vadd.xlane.f32.xlu0 %v1003
        %v1005 = vpop.xlane.xlu0 %1004
        %v1006 = vpack.c.bf16 %v1002, %v1002
        %1007 = vrot.lane.b32.xlu0 %v847, 96
        %v1008 = vpop.permute.xlu0 %1007
        %v1011 = vsel %vm811, %v1006, 0
        %1013 = vmatpush.bf16.msra.mxu0 0
        %1014 = vmatpush.bf16.msra.mxu0 0
        %1015 = vmatpush.bf16.msra.mxu0 0
        %1016 = vmatpush.bf16.msra.mxu0 0
        %1017 = vmatpush.bf16.msra.mxu0 0
        %1018 = vmatpush.bf16.msra.mxu0 0
        %1019 = vmatpush.bf16.msra.mxu0 0
        %1020 = vmatpush.bf16.msra.mxu0 %v1008
        %1021 = vmatmul.bf16.gmra.mxu0 %v1011
        %v1022 = vpop.f32.mrf.mxu0
        %v1023 = vadd.f32 0.0, %v1022
        %v1024 = vpop.f32.mrf.mxu0
        %1025 = vdwg.mxu0
        %v1026 = vrcp.pop %v1005
        %v1027 = vmul.f32 %v1023, %v1026
        %v1028 = vpack.c.bf16 %v1027, %v1027
        %v1029 = vld [vmem:[#allocation4 + $0x10] sm:$0xf]
        %v1030 = vld [vmem:[#allocation4 + $0x14] sm:$0xf]
        %v1033 = vunpack.c.l.b16 %v1029
        %v1034 = vunpack.c.l.b16 %v1030
        %v1035 = vpack.c.b16 %v1034, %v1033
        %v1038 = vsel %vm811, %v1028, 0
        %1040 = vmatpush.bf16.msra.mxu0 0
        %1041 = vmatpush.bf16.msra.mxu0 0
        %1042 = vmatpush.bf16.msra.mxu0 0
        %1043 = vmatpush.bf16.msra.mxu0 0
        %1044 = vmatpush.bf16.msra.mxu0 0
        %1045 = vmatpush.bf16.msra.mxu0 0
        %1046 = vmatpush.bf16.msra.mxu0 0
        %1047 = vmatpush.bf16.msra.mxu0 %v1035
        %1048 = vmatmul.bf16.gmra.mxu0 %v1038
        %v1049 = vpop.f32.mrf.mxu0
        %v1050 = vadd.f32 0.0, %v1049
        %v1051 = vpop.f32.mrf.mxu0
        %1052 = vdwg.mxu0
        %v1053 = vadd.f32 %v971, %v1050
        %1054 = vrot.lane.b32.xlu0 %v872, 80
        %v1055 = vpop.permute.xlu0 %1054
        %1056 = vrot.lane.b32.xlu0 %v810, 80
        %v1057 = vpop.permute.xlu0 %1056
        %v1059 = vsel %vm811, %v1055, 0
        %v1062 = vsel %vm811, %v1057, 0
        %1064 = vmatpush.bf16.xpose.msra.mxu0 0
        %1065 = vmatpush.bf16.xpose.msra.mxu0 0
        %1066 = vmatpush.bf16.xpose.msra.mxu0 0
        %1067 = vmatpush.bf16.xpose.msra.mxu0 0
        %1068 = vmatpush.bf16.xpose.msra.mxu0 0
        %1069 = vmatpush.bf16.xpose.msra.mxu0 0
        %1070 = vmatpush.bf16.xpose.msra.mxu0 0
        %1071 = vmatpush.bf16.xpose.msra.mxu0 %v1062
        %1072 = vmatmul.bf16.gmra.mxu0 %v1059
        %v1073 = vpop.f32.mrf.mxu0
        %v1074 = vadd.f32 %v804, %v1073
        %v1075 = vpop.f32.mrf.mxu0
        %1076 = vdwg.mxu0
        %v1077 = vsel %vm811, %v1074, -inf
        %1078 = vmax.xlane.f32.xlu0 %v1077
        %v1079 = vpop.xlane.xlu0 %1078
        %v1080 = vsub.f32 %v1074, %v1079
        %v1081 = vmul.f32 %v1080, 1.442695
        %v1082 = vpow.pop %v1081
        %v1083 = vsel %vm811, %v1082, 0.0
        %1084 = vadd.xlane.f32.xlu0 %v1083
        %v1085 = vpop.xlane.xlu0 %1084
        %v1086 = vpack.c.bf16 %v1082, %v1082
        %1087 = vrot.lane.b32.xlu0 %v847, 80
        %v1088 = vpop.permute.xlu0 %1087
        %v1091 = vsel %vm811, %v1086, 0
        %1093 = vmatpush.bf16.msra.mxu0 0
        %1094 = vmatpush.bf16.msra.mxu0 0
        %1095 = vmatpush.bf16.msra.mxu0 0
        %1096 = vmatpush.bf16.msra.mxu0 0
        %1097 = vmatpush.bf16.msra.mxu0 0
        %1098 = vmatpush.bf16.msra.mxu0 0
        %1099 = vmatpush.bf16.msra.mxu0 0
        %1100 = vmatpush.bf16.msra.mxu0 %v1088
        %1101 = vmatmul.bf16.gmra.mxu0 %v1091
        %v1102 = vpop.f32.mrf.mxu0
        %v1103 = vadd.f32 0.0, %v1102
        %v1104 = vpop.f32.mrf.mxu0
        %1105 = vdwg.mxu0
        %v1106 = vrcp.pop %v1085
        %v1107 = vmul.f32 %v1103, %v1106
        %v1108 = vpack.c.bf16 %v1107, %v1107
        %v1109 = vld [vmem:[#allocation4 + $0x18] sm:$0xf]
        %v1110 = vld [vmem:[#allocation4 + $0x1c] sm:$0xf]
        %v1113 = vunpack.c.l.b16 %v1109
        %v1114 = vunpack.c.l.b16 %v1110
        %v1115 = vpack.c.b16 %v1114, %v1113
        %v1118 = vsel %vm811, %v1108, 0
        %1120 = vmatpush.bf16.msra.mxu0 0
        %1121 = vmatpush.bf16.msra.mxu0 0
        %1122 = vmatpush.bf16.msra.mxu0 0
        %1123 = vmatpush.bf16.msra.mxu0 0
        %1124 = vmatpush.bf16.msra.mxu0 0
        %1125 = vmatpush.bf16.msra.mxu0 0
        %1126 = vmatpush.bf16.msra.mxu0 0
        %1127 = vmatpush.bf16.msra.mxu0 %v1115
        %1128 = vmatmul.bf16.gmra.mxu0 %v1118
        %v1129 = vpop.f32.mrf.mxu0
        %v1130 = vadd.f32 0.0, %v1129
        %v1131 = vpop.f32.mrf.mxu0
        %1132 = vdwg.mxu0
        %v1133 = vadd.f32 %v1053, %v1130
        %v1134 = vld [vmem:[#allocation6] sm:$0x1]
        %v1136 = vperm.slane %v1134, 0
        %v1138 = vadd.f32 %v1133, %v1136
        %v1139 = vadd.f32 %v1138, %v741
        %v1140 = vld [vmem:[#allocation8] sm:$0x1]
        %v1141 = vld [vmem:[#allocation9] sm:$0x1]
        %v1142 = vsel %vm779, %v1139, 0.0
        %1143 = vadd.xlane.f32.xlu0 %v1142
        %v1144 = vpop.xlane.xlu0 %1143
        %v1145 = vrcp.pop 64.0
        %v1146 = vmul.f32 64.0, %v1145
        %v1147 = vsub.f32 1.0, %v1146
        %v1148 = vmul.f32 %v1145, %v1147
        %v1149 = vadd.f32 %v1145, %v1148
        %vm1150 = vweird.f32 %v1145
        %v1151 = vsel %vm1150, %v1145, %v1149
        %v1152 = vmul.f32 %v1144, %v1151
        %v1153 = vsub.f32 %v1139, %v1152
        %v1154 = vmul.f32 %v1153, %v1153
        %v1155 = vsel %vm779, %v1154, 0.0
        %1156 = vadd.xlane.f32.xlu0 %v1155
        %v1157 = vpop.xlane.xlu0 %1156
        %v1158 = vmul.f32 %v1157, %v1151
        %v1159 = vadd.f32 %v1158, 1e-05
        %v1160 = vrsqrt.pop %v1159
        %v1161 = vmul.f32 %v1160, %v1159
        %v1162 = vmul.f32 %v1161, %v1160
        %v1163 = vmul.f32 0.5, %v1162
        %v1164 = vsub.f32 1.5, %v1163
        %v1165 = vmul.f32 %v1160, %v1164
        %vm1166 = vweird.f32 %v1159
        %vm1167 = vweird.f32 %v1160
        %vm1168 = vmor %vm1166, %vm1167
        %v1169 = vsel %vm1168, %v1160, %v1165
        %v1170 = vmul.f32 %v1153, %v1169
        %v1172 = vperm.slane %v1140, 0
        %v1174 = vmul.f32 %v1170, %v1172
        %v1176 = vperm.slane %v1141, 0
        %v1178 = vadd.f32 %v1174, %v1176
        %v1179 = vpack.c.bf16 %v1178, %v1178
        %v1180 = vld [vmem:[#allocation11] sm:$0xf]
        %v1181 = vld [vmem:[#allocation11 + $0x4] sm:$0xf]
        %v1182 = vld [vmem:[#allocation11 + $0x8] sm:$0xf]
        %v1183 = vld [vmem:[#allocation11 + $0xc] sm:$0xf]
        %v1184 = vld [vmem:[#allocation11 + $0x10] sm:$0xf]
        %v1185 = vld [vmem:[#allocation11 + $0x14] sm:$0xf]
        %v1186 = vld [vmem:[#allocation11 + $0x18] sm:$0xf]
        %v1187 = vld [vmem:[#allocation11 + $0x1c] sm:$0xf]
        %v1188 = vld [vmem:[#allocation12] sm:$0x1]
        %v1190 = vperm.slane %v1188, 0
        %v1200 = vunpack.c.l.b16 %v1180
        %v1201 = vunpack.c.l.b16 %v1181
        %v1202 = vunpack.c.l.b16 %v1182
        %v1203 = vunpack.c.l.b16 %v1183
        %v1204 = vunpack.c.l.b16 %v1184
        %v1205 = vunpack.c.l.b16 %v1185
        %v1206 = vunpack.c.l.b16 %v1186
        %v1207 = vunpack.c.l.b16 %v1187
        %v1208 = vpack.c.b16 %v1201, %v1200
        %v1209 = vpack.c.b16 %v1203, %v1202
        %v1210 = vpack.c.b16 %v1205, %v1204
        %v1211 = vpack.c.b16 %v1207, %v1206
        %v1217 = vsel %vm779, %v1179, 0
        %1219 = vmatpush.bf16.msra.mxu0 0
        %1220 = vmatpush.bf16.msra.mxu0 0
        %1221 = vmatpush.bf16.msra.mxu0 0
        %1222 = vmatpush.bf16.msra.mxu0 0
        %1223 = vmatpush.bf16.msra.mxu0 %v1211
        %1224 = vmatpush.bf16.msra.mxu0 %v1210
        %1225 = vmatpush.bf16.msra.mxu0 %v1209
        %1226 = vmatpush.bf16.msra.mxu0 %v1208
        %1227 = vmatmul.bf16.gmra.mxu0 %v1217
        %v1228 = vpop.f32.mrf.mxu0
        %v1229 = vadd.f32 %v1190, %v1228
        %v1230 = vpop.f32.mrf.mxu0
        %1231 = vdwg.mxu0
        %v1232 = vmax.f32 %v1229, 0.0
        %v1233 = vpack.c.bf16 %v1232, %v1232
        %v1234 = vld [vmem:[%s10] sm:$0xf]
        %v1235 = vld [vmem:[%s10 + $0x4] sm:$0xf]
        %v1236 = vld [vmem:[%s10 + $0x8] sm:$0xf]
        %v1237 = vld [vmem:[%s10 + $0xc] sm:$0xf]
        %v1238 = vld [vmem:[%s10 + $0x10] sm:$0xf]
        %v1239 = vld [vmem:[%s10 + $0x14] sm:$0xf]
        %v1240 = vld [vmem:[%s10 + $0x18] sm:$0xf]
        %v1241 = vld [vmem:[%s10 + $0x1c] sm:$0xf]
        %v1242 = vld [vmem:[%s10 + $0x20] sm:$0xf]
        %v1243 = vld [vmem:[%s10 + $0x24] sm:$0xf]
        %v1244 = vld [vmem:[%s10 + $0x28] sm:$0xf]
        %v1245 = vld [vmem:[%s10 + $0x2c] sm:$0xf]
        %v1246 = vld [vmem:[%s10 + $0x30] sm:$0xf]
        %v1247 = vld [vmem:[%s10 + $0x34] sm:$0xf]
        %v1248 = vld [vmem:[%s10 + $0x38] sm:$0xf]
        %v1249 = vld [vmem:[%s10 + $0x3c] sm:$0xf]
        %v1250 = vld [vmem:[#allocation14] sm:$0x1]
        %v1252 = vperm.slane %v1250, 0
        %v1270 = vunpack.c.l.b16 %v1234
        %v1271 = vunpack.c.l.b16 %v1235
        %v1272 = vunpack.c.l.b16 %v1236
        %v1273 = vunpack.c.l.b16 %v1237
        %v1274 = vunpack.c.l.b16 %v1238
        %v1275 = vunpack.c.l.b16 %v1239
        %v1276 = vunpack.c.l.b16 %v1240
        %v1277 = vunpack.c.l.b16 %v1241
        %v1278 = vunpack.c.l.b16 %v1242
        %v1279 = vunpack.c.l.b16 %v1243
        %v1280 = vunpack.c.l.b16 %v1244
        %v1281 = vunpack.c.l.b16 %v1245
        %v1282 = vunpack.c.l.b16 %v1246
        %v1283 = vunpack.c.l.b16 %v1247
        %v1284 = vunpack.c.l.b16 %v1248
        %v1285 = vunpack.c.l.b16 %v1249
        %v1286 = vpack.c.b16 %v1271, %v1270
        %v1287 = vpack.c.b16 %v1273, %v1272
        %v1288 = vpack.c.b16 %v1275, %v1274
        %v1289 = vpack.c.b16 %v1277, %v1276
        %v1290 = vpack.c.b16 %v1279, %v1278
        %v1291 = vpack.c.b16 %v1281, %v1280
        %v1292 = vpack.c.b16 %v1283, %v1282
        %v1293 = vpack.c.b16 %v1285, %v1284
        %1302 = vmatpush.bf16.msra.mxu0 %v1293
        %1303 = vmatpush.bf16.msra.mxu0 %v1292
        %1304 = vmatpush.bf16.msra.mxu0 %v1291
        %1305 = vmatpush.bf16.msra.mxu0 %v1290
        %1306 = vmatpush.bf16.msra.mxu0 %v1289
        %1307 = vmatpush.bf16.msra.mxu0 %v1288
        %1308 = vmatpush.bf16.msra.mxu0 %v1287
        %1309 = vmatpush.bf16.msra.mxu0 %v1286
        %1310 = vmatmul.bf16.gmra.mxu0 %v1233
        %v1311 = vpop.f32.mrf.mxu0
        %v1312 = vadd.f32 %v1252, %v1311
        %v1313 = vpop.f32.mrf.mxu0
        %1314 = vdwg.mxu0
        %v1315 = vadd.f32 %v1312, %v1178
        %v1316 = vld [vmem:[%s12] sm:$0x1]
        %v1317 = vld [vmem:[#allocation15] sm:$0x1]
        %v1318 = vsel %vm779, %v1315, 0.0
        %1319 = vadd.xlane.f32.xlu0 %v1318
        %v1320 = vpop.xlane.xlu0 %1319
        %v1321 = vmul.f32 %v1320, %v1151
        %v1322 = vsub.f32 %v1315, %v1321
        %v1323 = vmul.f32 %v1322, %v1322
        %v1324 = vsel %vm779, %v1323, 0.0
        %1325 = vadd.xlane.f32.xlu0 %v1324
        %v1326 = vpop.xlane.xlu0 %1325
        %v1327 = vmul.f32 %v1326, %v1151
        %v1328 = vadd.f32 %v1327, 1e-05
        %v1329 = vrsqrt.pop %v1328
        %v1330 = vmul.f32 %v1329, %v1328
        %v1331 = vmul.f32 %v1330, %v1329
        %v1332 = vmul.f32 0.5, %v1331
        %v1333 = vsub.f32 1.5, %v1332
        %v1334 = vmul.f32 %v1329, %v1333
        %vm1335 = vweird.f32 %v1328
        %vm1336 = vweird.f32 %v1329
        %vm1337 = vmor %vm1335, %vm1336
        %v1338 = vsel %vm1337, %v1329, %v1334
        %v1339 = vmul.f32 %v1322, %v1338
        %v1341 = vperm.slane %v1316, 0
        %v1343 = vmul.f32 %v1339, %v1341
        %v1345 = vperm.slane %v1317, 0
        %v1347 = vadd.f32 %v1343, %v1345
        %1348 = vst.msk [vmem:[%s622] sm:$0xff] %vm779, %v1347
        %p1349 = scmp.lt.s32.totalorder %s34, 1
        %s1350 = scalar_select %p1349, %s34, 1
        %p1351 = scmp.lt.s32.totalorder %s35, 1
        %s1352 = scalar_select %p1351, %s35, 1
        %s1353 = smul.addr %s1350, 2
        %s1354 = sadd.s32 %s1352, %s1353
        %s1355 = smul.addr %s1354, 8
        %s1356 = scalar_lea.vmem %s14, %s1355
        // Predicated region
        $region113: #{encoder_pallas.2} parent=75 // pred_check
          %p1357 = pneg %p366
        $region114: #{encoder_pallas.2} parent=75 // pred_check_branch
          %1359 = sbr.rel (%p1357) target = $region116
        $region115: #{encoder_pallas.2} parent=75 // pred_region
          _
        $region116: #{encoder_pallas.2} parent=75 // pred_fallthru
          _
      $region76: #{encoder_pallas.2} parent=5 // pred_fallthru
        _
      %p1360 = scmp.le.s32.totalorder 2, %s25
      // Predicated region
      $region117: #{encoder_pallas.2} parent=5 // pred_check
        %p1361 = pneg %p1360
      $region118: #{encoder_pallas.2} parent=5 // pred_check_branch
        %1363 = sbr.rel (%p1361) target = $region120
      $region119: #{encoder_pallas.2} parent=5 // pred_region
        %s1364 = ssub.s32 %s25, 2
        // Predicated region
        $region121: #{encoder_pallas.2} parent=119 // pred_check
          %p1365 = pneg %p372
        $region122: #{encoder_pallas.2} parent=119 // pred_check_branch
          %1367 = sbr.rel (%p1365) target = $region124
        $region123: #{encoder_pallas.2} parent=119 // pred_region
          %p1368 = scmp.lt.s32.totalorder %s36, 1
          %s1369 = scalar_select %p1368, %s36, 1
          %p1370 = scmp.lt.s32.totalorder %s37, 1
          %s1371 = scalar_select %p1370, %s37, 1
          %s1372 = smul.addr %s1369, 2
          %s1373 = sadd.s32 %s1371, %s1372
          %s1374 = smul.addr %s1373, 8
          %s1375 = scalar_lea.vmem %s14, %s1374
        $region124: #{encoder_pallas.2} parent=119 // pred_fallthru
          _
      $region120: #{encoder_pallas.2} parent=5 // pred_fallthru
        _
    $region6: #{encoder_pallas.2} parent=1 // loop_footer
      %s29 = sadd.s32 1, %s25
    $region7: #{encoder_pallas.2} parent=1 // loop_footer_branch
      %24 = sbr.rel target = $region3
    $region8: #{encoder_pallas.2} parent=1 // loop_exit
      _
    %1376 = vsyncpa [#allocation5], 1
    %s1377 = scalar_lea.sflag [#allocation5], 1
    %1378 = vsyncpa %s1377, 1
    %1379 = vsyncpa [#allocation7], 1
    %1380 = vsyncpa [#allocation10], 1
    %1381 = vsyncpa [#allocation13], 1
    %1382 = vsyncpa [#allocation16], 1

</llo_original>
